<compile_context>
chip_gen: v5e
topology: v5e:2x2
jax: 0.10.0
libtpu: 0.0.40
codegen_flags: <defaults>
</compile_context>

<pallas_src>
import math
import functools

import jax
import jax.numpy as jnp
from jax.experimental import pallas as pl
from jax.experimental.pallas import tpu as pltpu


# ----------------------------------------------------------------------------
# helpers
# ----------------------------------------------------------------------------
def _rup(v, m):
    return ((v + m - 1) // m) * m


# ----------------------------------------------------------------------------
# generic matmul kernels
# ----------------------------------------------------------------------------
def _matmul_bias_kernel(a_ref, b_ref, bias_ref, o_ref):
    o_ref[...] = (jnp.dot(a_ref[...], b_ref[...], preferred_element_type=jnp.float32)
                  + bias_ref[...])


def _tiled_matmul_kernel(a_ref, b_ref, o_ref, acc_ref):
    @pl.when(pl.program_id(2) == 0)
    def _():
        acc_ref[...] = jnp.zeros_like(acc_ref)
    acc_ref[...] += jnp.dot(a_ref[...], b_ref[...], preferred_element_type=jnp.float32)

    @pl.when(pl.program_id(2) == pl.num_programs(2) - 1)
    def _():
        o_ref[...] = acc_ref[...].astype(o_ref.dtype)


def pl_matmul(a, b, bias=None):
    """(M,K)@(K,N)+bias.  Small shapes: single full-block kernel, no host-side
    padding/copies.  Large shapes: tiled, pipelined bf16 matmul with f32 acc."""
    M, K = a.shape
    K2, N = b.shape
    assert K == K2
    if M < 256 or (K < 256 and N < 256):
        bias2 = (bias.reshape(1, N).astype(jnp.float32) if bias is not None
                 else jnp.zeros((1, N), jnp.float32))
        return pl.pallas_call(
            _matmul_bias_kernel,
            out_shape=jax.ShapeDtypeStruct((M, N), jnp.float32),
        )(a.astype(jnp.float32), b.astype(jnp.float32), bias2)

    tm = min(512, _rup(M, 8))
    tn = min(256, _rup(N, 128))
    tk = min(256, _rup(K, 128))
    Mp, Kp, Np = _rup(M, tm), _rup(K, tk), _rup(N, tn)
    a_p = a if (Mp, Kp) == (M, K) else jnp.pad(a, ((0, Mp - M), (0, Kp - K)))
    b_p = b if (Kp, Np) == (K, N) else jnp.pad(b, ((0, Kp - K), (0, Np - N)))
    out = pl.pallas_call(
        _tiled_matmul_kernel,
        out_shape=jax.ShapeDtypeStruct((Mp, Np), jnp.float32),
        grid=(Mp // tm, Np // tn, Kp // tk),
        in_specs=[pl.BlockSpec((tm, tk), lambda i, j, k: (i, k)),
                  pl.BlockSpec((tk, tn), lambda i, j, k: (k, j))],
        out_specs=pl.BlockSpec((tm, tn), lambda i, j, k: (i, j)),
        scratch_shapes=[pltpu.VMEM((tm, tn), jnp.float32)],
        compiler_params=pltpu.CompilerParams(
            dimension_semantics=("parallel", "parallel", "arbitrary"),
            vmem_limit_bytes=64 * 1024 * 1024),
    )(a_p.astype(jnp.bfloat16), b_p.astype(jnp.bfloat16))
    out = out[:M, :N]
    if bias is not None:
        out = out + bias.reshape(1, N)
    return out


# ----------------------------------------------------------------------------
# fused Conv1d + bias (+per-sample embedding bias) + GroupNorm + SiLU
# ----------------------------------------------------------------------------
def _conv_gn_silu_kernel(x_ref, w_ref, b_ref, eb_ref, gamma_ref, beta_ref,
                         gmap_ref, gmapt_ref, o_ref, *,
                         stride, ks, lout, cin, cg, apply_gn):
    cout = w_ref.shape[-1]
    acc = jnp.zeros((lout, cout), jnp.float32)
    # in-kernel im2col: accumulate ks shifted matmuls on the VMEM-resident tile.
    for k in range(ks):
        off = k // stride
        ph = k % stride
        xk = x_ref[off:off + lout, ph * cin:(ph + 1) * cin]
        wk = w_ref[k]
        if cin == 1:
            acc = acc + xk.astype(jnp.float32) * wk.astype(jnp.float32)
        else:
            acc = acc + jnp.dot(xk, wk, preferred_element_type=jnp.float32)
    acc = acc + b_ref[...] + eb_ref[...]
    if apply_gn:
        cnt = jnp.float32(lout * cg)
        s1 = jnp.sum(acc, axis=0, keepdims=True)                           # (1, cout)
        mean_c = jnp.dot(jnp.dot(s1, gmap_ref[...]) * (1.0 / cnt), gmapt_ref[...],
                         preferred_element_type=jnp.float32)
        xc = acc - mean_c
        s2 = jnp.sum(xc * xc, axis=0, keepdims=True)
        var_c = jnp.dot(jnp.dot(s2, gmap_ref[...]) * (1.0 / cnt), gmapt_ref[...],
                        preferred_element_type=jnp.float32)
        y = xc * jax.lax.rsqrt(var_c + 1e-5) * gamma_ref[...] + beta_ref[...]
        y = y * jax.nn.sigmoid(y)
    else:
        y = acc
    o_ref[...] = y.astype(o_ref.dtype)


def conv_gn_silu(x, w, b, gamma, beta, *, stride, pad, groups=8,
                 extra_bias=None, apply_gn=True):
    """x: (N, L, Cin) channels-last.  w: (Cout, Cin, ks) (PyTorch layout)."""
    N, L, cin = x.shape
    cout, _, ks = w.shape
    lout = (L + 2 * pad - ks) // stride + 1
    lr = -(-((lout - 1) * stride + ks) // stride)
    total = lr * stride
    right = max(total - pad - L, 0)
    x_p = jnp.pad(x, ((0, 0), (pad, right), (0, 0)))[:, :total, :]
    xr = x_p.reshape(N, lr, stride * cin).astype(jnp.bfloat16)         # phase-folded
    wk = jnp.transpose(w, (2, 1, 0)).astype(jnp.bfloat16)              # (ks, cin, cout)

    if extra_bias is None:
        eb = jnp.zeros((N, 1, cout), jnp.float32)
    else:
        eb = extra_bias.reshape(N, 1, cout).astype(jnp.float32)
    if gamma is None:
        gamma = jnp.ones((cout,), jnp.float32)
    if beta is None:
        beta = jnp.zeros((cout,), jnp.float32)
    cg = cout // groups
    gidx = jnp.arange(cout) // cg
    gmap = (gidx[:, None] == jnp.arange(groups)[None, :]).astype(jnp.float32)
    gmapt = gmap.T

    kern = functools.partial(_conv_gn_silu_kernel, stride=stride, ks=ks,
                             lout=lout, cin=cin, cg=cg, apply_gn=apply_gn)
    const2 = lambda n: (0, 0)
    const3 = lambda n: (0, 0, 0)
    return pl.pallas_call(
        kern,
        out_shape=jax.ShapeDtypeStruct((N, lout, cout), jnp.float32),
        grid=(N,),
        in_specs=[
            pl.BlockSpec((None, lr, stride * cin), lambda n: (n, 0, 0)),
            pl.BlockSpec((ks, cin, cout), const3),
            pl.BlockSpec((1, cout), const2),
            pl.BlockSpec((None, 1, cout), lambda n: (n, 0, 0)),
            pl.BlockSpec((1, cout), const2),
            pl.BlockSpec((1, cout), const2),
            pl.BlockSpec((cout, groups), const2),
            pl.BlockSpec((groups, cout), const2),
        ],
        out_specs=pl.BlockSpec((None, lout, cout), lambda n: (n, 0, 0)),
        compiler_params=pltpu.CompilerParams(dimension_semantics=("parallel",)),
    )(xr, wk, b.reshape(1, cout).astype(jnp.float32), eb,
      gamma.reshape(1, cout).astype(jnp.float32),
      beta.reshape(1, cout).astype(jnp.float32), gmap, gmapt)


# ----------------------------------------------------------------------------
# AttentionPool (per-sample kernel, dc kept on lanes; only token-0 query)
# ----------------------------------------------------------------------------
def _attn_pool_kernel(x_ref, pos_ref, qkvw_ref, qkvb_ref, pw_ref, pb_ref, o_ref, *, heads):
    S, C = x_ref.shape
    ch = C // heads
    x = x_ref[...].astype(jnp.float32)
    mean = jnp.sum(x, axis=0, keepdims=True) * (1.0 / S)                       # (1, C)
    tok0 = mean + pos_ref[0:1, :]
    rest = x + pos_ref[1:, :]
    qkv0 = jnp.dot(tok0, qkvw_ref[...], preferred_element_type=jnp.float32) + qkvb_ref[...]
    qkvr = jnp.dot(rest, qkvw_ref[...], preferred_element_type=jnp.float32) + qkvb_ref[...]
    scale = 1.0 / math.sqrt(math.sqrt(ch))
    outs = []
    for h in range(heads):
        q0 = qkv0[:, h * ch:(h + 1) * ch] * scale
        k0 = qkv0[:, C + h * ch:C + (h + 1) * ch] * scale
        kr = qkvr[:, C + h * ch:C + (h + 1) * ch] * scale
        v0 = qkv0[:, 2 * C + h * ch:2 * C + (h + 1) * ch]
        vr = qkvr[:, 2 * C + h * ch:2 * C + (h + 1) * ch]
        s0 = jnp.sum(q0 * k0, axis=-1, keepdims=True)                          # (1, 1)
        sr = jax.lax.dot_general(q0, kr, (((1,), (1,)), ((), ())),
                                 preferred_element_type=jnp.float32)            # (1, S)
        sc = jnp.concatenate([s0, sr], axis=-1)                                 # (1, S+1)
        mx = jnp.max(sc, axis=-1, keepdims=True)
        p = jnp.exp(sc - mx)
        wgt = p * pl.reciprocal(jnp.sum(p, axis=-1, keepdims=True), approx=True)
        oh = wgt[:, 0:1] * v0 + jnp.dot(wgt[:, 1:], vr, preferred_element_type=jnp.float32)
        outs.append(oh)
    attn = jnp.concatenate(outs, axis=-1)                                       # (1, C)
    o_ref[0] = jnp.dot(attn, pw_ref[...], preferred_element_type=jnp.float32) + pb_ref[...]


def attention_pool(p, x):
    # x: (N, S, C) channels-last -> (N, C)
    N, S, C = x.shape
    kern = functools.partial(_attn_pool_kernel, heads=p['heads'])
    const2 = lambda n: (0, 0)
    out = pl.pallas_call(
        kern,
        out_shape=jax.ShapeDtypeStruct((N, 1, C), jnp.float32),
        grid=(N,),
        in_specs=[
            pl.BlockSpec((None, S, C), lambda n: (n, 0, 0)),
            pl.BlockSpec((S + 1, C), const2),
            pl.BlockSpec((C, 3 * C), const2),
            pl.BlockSpec((1, 3 * C), const2),
            pl.BlockSpec((C, C), const2),
            pl.BlockSpec((1, C), const2),
        ],
        out_specs=pl.BlockSpec((1, 1, C), lambda n: (n, 0, 0)),
        compiler_params=pltpu.CompilerParams(dimension_semantics=("parallel",)),
    )(x, p['pos'], p['qkv_w'], p['qkv_b'].reshape(1, -1),
      p['proj_w'], p['proj_b'].reshape(1, -1))
    return out[:, 0, :]


# ----------------------------------------------------------------------------
# fused per-step decoder recurrence (attention LSTM + attention + decoder LSTM
# + projection/gate), grid=(s,), state in VMEM scratch, weights VMEM-resident
# ----------------------------------------------------------------------------
def _decoder_step_kernel(pre_g_ref, wctx_ref, whha_ref, wihd_ref, whhd_ref, bd_ref,
                         qw_ref, v_ref, mloc_ref, pm_ref, mem_ref, mask_ref,
                         pgw_ref, pgb_ref,
                         out_ref, align_ref,
                         att_h, att_c, dec_h, dec_c, att_ctx, att_w, att_wcum):
    step = pl.program_id(0)
    dc = att_h.shape[-1]
    T = att_w.shape[-1]

    @pl.when(step == 0)
    def _():
        att_h[...] = jnp.zeros_like(att_h)
        att_c[...] = jnp.zeros_like(att_c)
        dec_h[...] = jnp.zeros_like(dec_h)
        dec_c[...] = jnp.zeros_like(dec_c)
        att_ctx[...] = jnp.zeros_like(att_ctx)
        att_w[...] = jnp.zeros_like(att_w)
        att_wcum[...] = jnp.zeros_like(att_wcum)

    # ---- attention LSTM cell (input half hoisted into pre_gates) ----
    gates = (pre_g_ref[0]
             + jnp.dot(att_ctx[...], wctx_ref[...], preferred_element_type=jnp.float32)
             + jnp.dot(att_h[...], whha_ref[...], preferred_element_type=jnp.float32))
    i_g = jax.nn.sigmoid(gates[:, 0:dc])
    f_g = jax.nn.sigmoid(gates[:, dc:2 * dc])
    g_g = jnp.tanh(gates[:, 2 * dc:3 * dc])
    o_g = jax.nn.sigmoid(gates[:, 3 * dc:4 * dc])
    c_new = f_g * att_c[...] + i_g * g_g
    h_new = o_g * jnp.tanh(c_new)
    att_c[...] = c_new
    att_h[...] = h_new
    # F.dropout(..., training=False) -> identity

    # ---- location-sensitive attention (location conv+linear folded in mloc) ----
    pq = jnp.dot(h_new, qw_ref[...], preferred_element_type=jnp.float32)        # (b, dc)
    awc = jnp.concatenate([att_w[...], att_wcum[...]], axis=-1)                  # (b, 2T)
    b_sz = awc.shape[0]
    ploc = jnp.zeros((b_sz, T, dc), jnp.float32)
    for x in range(2 * T):
        ploc = ploc + awc[:, x:x + 1][:, :, None] * mloc_ref[x][None, :, :]
    e = jnp.tanh(pq[:, None, :] + pm_ref[...] + ploc)                            # (b, T, dc)
    energies = jnp.sum(e * v_ref[...][None, :, :], axis=-1)                      # (b, T)
    energies = jnp.where(mask_ref[...] > 0.5, jnp.float32(-1e30), energies)
    mx = jnp.max(energies, axis=-1, keepdims=True)
    pexp = jnp.exp(energies - mx)
    w = pexp * pl.reciprocal(jnp.sum(pexp, axis=-1, keepdims=True), approx=True)
    ctx = jnp.sum(w[:, :, None] * mem_ref[...], axis=1)                          # (b, dc)
    att_ctx[...] = ctx
    att_w[...] = w
    att_wcum[...] = att_wcum[...] + w
    align_ref[0] = w

    # ---- decoder LSTM cell ----
    dec_in = jnp.concatenate([h_new, ctx], axis=-1)
    gates2 = (jnp.dot(dec_in, wihd_ref[...], preferred_element_type=jnp.float32)
              + jnp.dot(dec_h[...], whhd_ref[...], preferred_element_type=jnp.float32)
              + bd_ref[...])
    i2 = jax.nn.sigmoid(gates2[:, 0:dc])
    f2 = jax.nn.sigmoid(gates2[:, dc:2 * dc])
    g2 = jnp.tanh(gates2[:, 2 * dc:3 * dc])
    o2 = jax.nn.sigmoid(gates2[:, 3 * dc:4 * dc])
    c2 = f2 * dec_c[...] + i2 * g2
    h2 = o2 * jnp.tanh(c2)
    dec_c[...] = c2
    dec_h[...] = h2

    # ---- fused projection + gate ----
    dhac = jnp.concatenate([h2, ctx], axis=-1)
    out_ref[0] = (jnp.dot(dhac, pgw_ref[...], preferred_element_type=jnp.float32)
                  + pgb_ref[...])


def decoder_recurrence(pre_gates, wctx_att, whh_att, wih_dec, whh_dec, b_dec,
                       query_w, v, mloc, processed_memory, memory, mask, pg_w, pg_b):
    s, b, four_dc = pre_gates.shape
    dc = four_dc // 4
    T = memory.shape[1]
    const2 = lambda i: (0, 0)
    const3 = lambda i: (0, 0, 0)
    out_shape = (jax.ShapeDtypeStruct((s, b, dc + 1), jnp.float32),
                 jax.ShapeDtypeStruct((s, b, T), jnp.float32))
    return pl.pallas_call(
        _decoder_step_kernel,
        out_shape=out_shape,
        grid=(s,),
        in_specs=[
            pl.BlockSpec((1, b, 4 * dc), lambda i: (i, 0, 0)),
            pl.BlockSpec((dc, 4 * dc), const2),
            pl.BlockSpec((dc, 4 * dc), const2),
            pl.BlockSpec((2 * dc, 4 * dc), const2),
            pl.BlockSpec((dc, 4 * dc), const2),
            pl.BlockSpec((1, 4 * dc), const2),
            pl.BlockSpec((dc, dc), const2),
            pl.BlockSpec((1, dc), const2),
            pl.BlockSpec((2 * T, T, dc), const3),
            pl.BlockSpec((b, T, dc), const3),
            pl.BlockSpec((b, T, dc), const3),
            pl.BlockSpec((b, T), const2),
            pl.BlockSpec((2 * dc, dc + 1), const2),
            pl.BlockSpec((1, dc + 1), const2),
        ],
        out_specs=(
            pl.BlockSpec((1, b, dc + 1), lambda i: (i, 0, 0)),
            pl.BlockSpec((1, b, T), lambda i: (i, 0, 0)),
        ),
        scratch_shapes=[pltpu.VMEM((b, dc), jnp.float32),
                        pltpu.VMEM((b, dc), jnp.float32),
                        pltpu.VMEM((b, dc), jnp.float32),
                        pltpu.VMEM((b, dc), jnp.float32),
                        pltpu.VMEM((b, dc), jnp.float32),
                        pltpu.VMEM((b, T), jnp.float32),
                        pltpu.VMEM((b, T), jnp.float32)],
        compiler_params=pltpu.CompilerParams(dimension_semantics=("arbitrary",)),
    )(pre_gates, wctx_att, whh_att, wih_dec, whh_dec, b_dec,
      query_w, v, mloc, processed_memory, memory, mask, pg_w, pg_b)


def build_location_operator(w_loc, loc_lin, T):
    """Fold location conv (2->F, ks, pad=ks//2, no bias) + location linear (F->A)
    into one constant (2T, T, A) tensor:  ploc[b,t,:] = sum_x awc[b,x] * M[x,t,:]."""
    F, _, ks = w_loc.shape
    half = ks // 2
    tp = jnp.arange(T)[:, None]
    tt = jnp.arange(T)[None, :]
    kk = tp - tt + half
    valid = ((kk >= 0) & (kk < ks)).astype(jnp.float32)
    kkc = jnp.clip(kk, 0, ks - 1)
    wg = w_loc[:, :, kkc] * valid[None, None]                 # (F, 2, T, T)
    M = jnp.einsum('fcpt,fa->cpta', wg, loc_lin)              # (2, T, T, A)
    return M.reshape(2 * T, T, loc_lin.shape[-1]).astype(jnp.float32)


# ----------------------------------------------------------------------------
# clarifier (simplified)
# ----------------------------------------------------------------------------
def _clar_emb_kernel(temb_ref, y_ref, t1w_ref, t1b_ref, t2w_ref, t2b_ref,
                     ew_ref, eb_ref, o_ref):
    t = jnp.dot(temb_ref[...], t1w_ref[...], preferred_element_type=jnp.float32) + t1b_ref[...]
    t = t * jax.nn.sigmoid(t)
    t = jnp.dot(t, t2w_ref[...], preferred_element_type=jnp.float32) + t2b_ref[...]
    e = t + y_ref[...]                                 # use_raw_y_as_embedding=True
    e = e * jax.nn.sigmoid(e)
    o_ref[...] = jnp.dot(e, ew_ref[...], preferred_element_type=jnp.float32) + eb_ref[...]


def timestep_embedding(t, dim, max_period=10000.0):
    half = dim // 2
    freqs = jnp.exp(-math.log(max_period) * jnp.arange(half, dtype=jnp.float32) / half)
    args = t.astype(jnp.float32)[:, None] * freqs[None, :]
    return jnp.concatenate([jnp.cos(args), jnp.sin(args)], axis=-1)


def clarifier_forward(p, x_nlc, timesteps, y):
    # TODO(synk): the real clarifier is a guided-diffusion UNetModel (channel_mult=(1,2,4,8),
    # ResBlocks, attention at resolution 8, up/down-sampling); this is a simplified
    # timestep/embedding-conditioned conv stack with the same I/O contract.
    mc = p['mc']
    temb = timestep_embedding(timesteps, mc)
    eo = pl.pallas_call(
        _clar_emb_kernel,
        out_shape=jax.ShapeDtypeStruct((y.shape[0], mc), jnp.float32),
    )(temb, y, p['t1_w'], p['t1_b'].reshape(1, -1), p['t2_w'], p['t2_b'].reshape(1, -1),
      p['emb_w'], p['emb_b'].reshape(1, -1))
    h = conv_gn_silu(x_nlc, p['in_w'], p['in_b'], p['g1'], p['b1'],
                     stride=1, pad=1, groups=8, extra_bias=eo)
    h = conv_gn_silu(h, p['mid_w'], p['mid_b'], p['g2'], p['b2'],
                     stride=1, pad=1, groups=8)
    return conv_gn_silu(h, p['out_w'], p['out_b'], None, None,
                        stride=1, pad=1, groups=1, apply_gn=False)     # (N, K, 2)


# ----------------------------------------------------------------------------
# WavDecoder forward
# ----------------------------------------------------------------------------
def chunk_wav(wav, K):
    b, n = wav.shape
    s = -(-n // K)
    pad = s * K - n
    wav_p = jnp.pad(wav, ((0, 0), (0, pad)))
    return wav_p.reshape(b, s, K), pad


def prepare_decoder_inputs(inp):
    b, s, K = inp.shape
    first = jnp.zeros((b, 1, K), inp.dtype)
    return jnp.concatenate([first, inp[:, :-1]], axis=1)


def wav_decoder_forward(params, wav_noised, wav_real, timesteps, text_enc, memory_lengths):
    K = params['K']
    dc = params['dc']

    wav_noised_c, padding_added = chunk_wav(wav_noised, K)
    wav_real_c, _ = chunk_wav(wav_real, K)
    dec_in = prepare_decoder_inputs(wav_real_c)
    b, s, _ = dec_in.shape

    # ---- pre_rnn: fused conv+GN+SiLU stack (channels-last) + attention pool ----
    x = dec_in.reshape(b * s, K, 1)
    for layer in params['pre_rnn']['convs']:
        x = conv_gn_silu(x, layer['w'], layer['b'], layer['gamma'], layer['beta'],
                         stride=layer['stride'], pad=layer['pad'], groups=8)
    wav_emb = attention_pool(params['pre_rnn']['pool'], x)          # (b*s, dc)

    # ---- attention pre-computation ----
    memory = text_enc
    T = memory.shape[1]
    valid = jnp.arange(T)[None, :] < memory_lengths[:, None]
    mask = (~valid).astype(jnp.float32)                              # 1.0 = padded
    processed_memory = pl_matmul(memory.reshape(b * T, dc),
                                 params['attn']['memory_w']).reshape(b, T, dc)
    mloc = build_location_operator(params['attn']['loc_conv_w'],
                                   params['attn']['loc_lin_w'], T)

    # hoisted input-to-hidden half of the attention LSTM (one big matmul)
    wih_att = params['att_rnn']['wih']
    pre_gates = pl_matmul(wav_emb, wih_att[:dc], bias=params['att_rnn']['b'])
    pre_gates = pre_gates.reshape(b, s, 4 * dc).transpose(1, 0, 2)   # (s, b, 4dc)

    # fused projection + gate weights
    pg_w = jnp.concatenate([params['proj']['w'], params['gate']['w']], axis=1)
    pg_b = jnp.concatenate([params['proj']['b'], params['gate']['b']])[None, :]

    out_pg, aligns = decoder_recurrence(
        pre_gates, wih_att[dc:], params['att_rnn']['whh'],
        params['dec_rnn']['wih'], params['dec_rnn']['whh'], params['dec_rnn']['b'],
        params['attn']['query_w'], params['attn']['v'],
        mloc, processed_memory, memory, mask, pg_w, pg_b)

    dec_ctx = jnp.transpose(out_pg[:, :, :dc], (1, 0, 2))            # (b, s, dc)
    gate_outputs = jnp.transpose(out_pg[:, :, dc], (1, 0))           # (b, s)
    alignments = jnp.transpose(aligns, (1, 0, 2))                    # (b, s, T)

    # ---- clarifier ----
    diffusion_emb = dec_ctx.reshape(b * s, dc)
    wav_noised_r = wav_noised_c.reshape(b * s, K, 1)
    t_rep = jnp.tile(timesteps, s)                                   # torch .repeat(s)
    eps_nlc = clarifier_forward(params['clarifier'], wav_noised_r, t_rep, diffusion_emb)
    diffusion_eps = eps_nlc.reshape(b, s, K, 2)

    # ---- recombine (matches torch recombine: .repeat == tile) ----
    total = s * K - padding_added
    align = jnp.tile(alignments, (1, K, 1))[:, :total]
    gates = jnp.tile(gate_outputs, (1, K))[:, :total]
    eps = jnp.transpose(diffusion_eps, (0, 3, 1, 2)).reshape(b, 2, s * K)[:, :, :total]
    return eps, gates, align


# ----------------------------------------------------------------------------
# deterministic parameter init
# ----------------------------------------------------------------------------
def init_params(key, dec_channels=128, K=320):
    dc = dec_channels
    mc = dc // 4
    keys = iter(jax.random.split(key, 64))

    def nrm(shape, scale=0.05):
        return (scale * jax.random.normal(next(keys), shape)).astype(jnp.float32)

    params = {'K': K, 'dc': dc}

    conv_defs = [(1, 32, 5, 1), (32, 64, 5, 4), (64, 128, 5, 4), (128, 256, 5, 4), (256, dc, 1, 1)]
    convs = []
    for cin, cout, ks, stride in conv_defs:
        convs.append({'w': nrm((cout, cin, ks)), 'b': nrm((cout,)),
                      'gamma': jnp.ones((cout,), jnp.float32),
                      'beta': jnp.zeros((cout,), jnp.float32),
                      'stride': stride, 'pad': ks // 2})
    S = K // 64
    pool = {'pos': nrm((S + 1, dc)),
            'qkv_w': nrm((dc, 3 * dc)), 'qkv_b': jnp.zeros((3 * dc,), jnp.float32),
            'proj_w': nrm((dc, dc)), 'proj_b': jnp.zeros((dc,), jnp.float32),
            'heads': dc // (dc // 4)}
    params['pre_rnn'] = {'convs': convs, 'pool': pool}

    params['att_rnn'] = {'wih': nrm((2 * dc, 4 * dc)), 'whh': nrm((dc, 4 * dc)),
                         'b': nrm((1, 4 * dc))}
    params['dec_rnn'] = {'wih': nrm((2 * dc, 4 * dc)), 'whh': nrm((dc, 4 * dc)),
                         'b': nrm((1, 4 * dc))}
    params['attn'] = {'query_w': nrm((dc, dc)), 'memory_w': nrm((dc, dc)),
                      'v': nrm((1, dc)),
                      'loc_conv_w': nrm((32, 2, 31)),
                      'loc_lin_w': nrm((32, dc))}
    params['proj'] = {'w': nrm((2 * dc, dc)), 'b': jnp.zeros((dc,), jnp.float32)}
    params['gate'] = {'w': nrm((2 * dc, 1)), 'b': jnp.zeros((1,), jnp.float32)}
    params['clarifier'] = {
        'mc': mc,
        't1_w': nrm((mc, dc)), 't1_b': jnp.zeros((dc,), jnp.float32),
        't2_w': nrm((dc, dc)), 't2_b': jnp.zeros((dc,), jnp.float32),
        'emb_w': nrm((dc, mc)), 'emb_b': jnp.zeros((mc,), jnp.float32),
        'in_w': nrm((mc, 1, 3)), 'in_b': jnp.zeros((mc,), jnp.float32),
        'mid_w': nrm((mc, mc, 3)), 'mid_b': jnp.zeros((mc,), jnp.float32),
        'out_w': nrm((2, mc, 3)), 'out_b': jnp.zeros((2,), jnp.float32),
        'g1': jnp.ones((mc,), jnp.float32), 'b1': jnp.zeros((mc,), jnp.float32),
        'g2': jnp.ones((mc,), jnp.float32), 'b2': jnp.zeros((mc,), jnp.float32),
    }
    return params


# ----------------------------------------------------------------------------
if __name__ == "__main__":
    key = jax.random.PRNGKey(0)
    k1, k2, k3, kp = jax.random.split(key, 4)

    dec_channels = 128          # must be divisible by 4
    K = 320                     # sample_rate=8000, K_ms=40 -> K=320 (K % 64 == 0)
    params = init_params(kp, dec_channels=dec_channels, K=K)

    b, n, T = 2, 740, 8         # n not a multiple of K -> padding_added = 220, s = 3
    wav_noised = jax.random.uniform(k1, (b, n), jnp.float32, -1.0, 1.0)
    wav_real = jax.random.uniform(k2, (b, n), jnp.float32, -1.0, 1.0)
    timesteps = jnp.array([3, 17], dtype=jnp.int32)
    text_enc = jax.random.normal(k3, (b, T, dec_channels), jnp.float32)
    memory_lengths = jnp.array([8, 5], dtype=jnp.int32)

    eps, gates, aligns = wav_decoder_forward(params, wav_noised, wav_real,
                                             timesteps, text_enc, memory_lengths)
    jax.block_until_ready((eps, gates, aligns))

    assert eps.shape == (b, 2, n), eps.shape
    assert gates.shape == (b, n), gates.shape
    assert aligns.shape == (b, n, T), aligns.shape
    assert jnp.all(jnp.isfinite(eps)) and jnp.all(jnp.isfinite(gates)) and jnp.all(jnp.isfinite(aligns))
    print("KERNEL_OK")
</pallas_src>

<mosaic_0001>
module attributes {stable_mosaic.version = 11 : i64} {
  func.func @_conv_gn_silu_kernel(%arg0: i32, %arg1: memref<1x324x1xbf16, #tpu.memory_space<vmem>>, %arg2: memref<5x1x32xbf16, #tpu.memory_space<vmem>>, %arg3: memref<1x32xf32, #tpu.memory_space<vmem>>, %arg4: memref<1x1x32xf32, #tpu.memory_space<vmem>>, %arg5: memref<1x32xf32, #tpu.memory_space<vmem>>, %arg6: memref<1x32xf32, #tpu.memory_space<vmem>>, %arg7: memref<32x8xf32, #tpu.memory_space<vmem>>, %arg8: memref<8x32xf32, #tpu.memory_space<vmem>>, %arg9: memref<1x320x32xf32, #tpu.memory_space<vmem>>) attributes {dimension_semantics = [#tpu.dimension_semantics<parallel>], iteration_bounds = array<i64: 6>, scalar_prefetch = 0 : i64, scratch_operands = 0 : i64, tpu.core_type = #tpu.core_type<tc>, window_params = [{transform_indices = @transform_0, window_bounds = array<i64: 1, 324, 1>}, {pipeline_mode = #tpu.pipeline_mode<synchronous>, transform_indices = @transform_1, window_bounds = array<i64: 5, 1, 32>}, {pipeline_mode = #tpu.pipeline_mode<synchronous>, transform_indices = @transform_2, window_bounds = array<i64: 1, 32>}, {transform_indices = @transform_3, window_bounds = array<i64: 1, 1, 32>}, {pipeline_mode = #tpu.pipeline_mode<synchronous>, transform_indices = @transform_4, window_bounds = array<i64: 1, 32>}, {pipeline_mode = #tpu.pipeline_mode<synchronous>, transform_indices = @transform_5, window_bounds = array<i64: 1, 32>}, {pipeline_mode = #tpu.pipeline_mode<synchronous>, transform_indices = @transform_6, window_bounds = array<i64: 32, 8>}, {pipeline_mode = #tpu.pipeline_mode<synchronous>, transform_indices = @transform_7, window_bounds = array<i64: 8, 32>}, {transform_indices = @transform_8, window_bounds = array<i64: 1, 320, 32>}]} {
    %cst = arith.constant 0.000000e+00 : f32
    %0 = vector.broadcast %cst : f32 to vector<320x32xf32>
    %c0 = arith.constant 0 : index
    %c0_0 = arith.constant 0 : index
    %c0_1 = arith.constant 0 : index
    %1 = vector.load %arg1[%c0, %c0_0, %c0_1] : memref<1x324x1xbf16, #tpu.memory_space<vmem>>, vector<1x320x1xbf16>
    %2 = vector.shape_cast %1 : vector<1x320x1xbf16> to vector<320x1xbf16>
    %c0_2 = arith.constant 0 : index
    %c0_3 = arith.constant 0 : index
    %c0_4 = arith.constant 0 : index
    %3 = vector.load %arg2[%c0_2, %c0_3, %c0_4] : memref<5x1x32xbf16, #tpu.memory_space<vmem>>, vector<1x1x32xbf16>
    %4 = vector.shape_cast %3 : vector<1x1x32xbf16> to vector<1x32xbf16>
    %5 = arith.extf %2 : vector<320x1xbf16> to vector<320x1xf32>
    %6 = arith.extf %4 : vector<1x32xbf16> to vector<1x32xf32>
    %7 = vector.broadcast %5 : vector<320x1xf32> to vector<320x32xf32>
    %8 = vector.broadcast %6 : vector<1x32xf32> to vector<320x32xf32>
    %9 = arith.mulf %7, %8 : vector<320x32xf32>
    %10 = arith.addf %0, %9 : vector<320x32xf32>
    %c0_5 = arith.constant 0 : index
    %c1 = arith.constant 1 : index
    %c0_6 = arith.constant 0 : index
    %11 = vector.load %arg1[%c0_5, %c1, %c0_6] : memref<1x324x1xbf16, #tpu.memory_space<vmem>>, vector<1x320x1xbf16>
    %12 = vector.shape_cast %11 : vector<1x320x1xbf16> to vector<320x1xbf16>
    %c1_7 = arith.constant 1 : index
    %c0_8 = arith.constant 0 : index
    %c0_9 = arith.constant 0 : index
    %13 = vector.load %arg2[%c1_7, %c0_8, %c0_9] : memref<5x1x32xbf16, #tpu.memory_space<vmem>>, vector<1x1x32xbf16>
    %14 = vector.shape_cast %13 : vector<1x1x32xbf16> to vector<1x32xbf16>
    %15 = arith.extf %12 : vector<320x1xbf16> to vector<320x1xf32>
    %16 = arith.extf %14 : vector<1x32xbf16> to vector<1x32xf32>
    %17 = vector.broadcast %15 : vector<320x1xf32> to vector<320x32xf32>
    %18 = vector.broadcast %16 : vector<1x32xf32> to vector<320x32xf32>
    %19 = arith.mulf %17, %18 : vector<320x32xf32>
    %20 = arith.addf %10, %19 : vector<320x32xf32>
    %c0_10 = arith.constant 0 : index
    %c2 = arith.constant 2 : index
    %c0_11 = arith.constant 0 : index
    %21 = vector.load %arg1[%c0_10, %c2, %c0_11] : memref<1x324x1xbf16, #tpu.memory_space<vmem>>, vector<1x320x1xbf16>
    %22 = vector.shape_cast %21 : vector<1x320x1xbf16> to vector<320x1xbf16>
    %c2_12 = arith.constant 2 : index
    %c0_13 = arith.constant 0 : index
    %c0_14 = arith.constant 0 : index
    %23 = vector.load %arg2[%c2_12, %c0_13, %c0_14] : memref<5x1x32xbf16, #tpu.memory_space<vmem>>, vector<1x1x32xbf16>
    %24 = vector.shape_cast %23 : vector<1x1x32xbf16> to vector<1x32xbf16>
    %25 = arith.extf %22 : vector<320x1xbf16> to vector<320x1xf32>
    %26 = arith.extf %24 : vector<1x32xbf16> to vector<1x32xf32>
    %27 = vector.broadcast %25 : vector<320x1xf32> to vector<320x32xf32>
    %28 = vector.broadcast %26 : vector<1x32xf32> to vector<320x32xf32>
    %29 = arith.mulf %27, %28 : vector<320x32xf32>
    %30 = arith.addf %20, %29 : vector<320x32xf32>
    %c0_15 = arith.constant 0 : index
    %c3 = arith.constant 3 : index
    %c0_16 = arith.constant 0 : index
    %31 = vector.load %arg1[%c0_15, %c3, %c0_16] : memref<1x324x1xbf16, #tpu.memory_space<vmem>>, vector<1x320x1xbf16>
    %32 = vector.shape_cast %31 : vector<1x320x1xbf16> to vector<320x1xbf16>
    %c3_17 = arith.constant 3 : index
    %c0_18 = arith.constant 0 : index
    %c0_19 = arith.constant 0 : index
    %33 = vector.load %arg2[%c3_17, %c0_18, %c0_19] : memref<5x1x32xbf16, #tpu.memory_space<vmem>>, vector<1x1x32xbf16>
    %34 = vector.shape_cast %33 : vector<1x1x32xbf16> to vector<1x32xbf16>
    %35 = arith.extf %32 : vector<320x1xbf16> to vector<320x1xf32>
    %36 = arith.extf %34 : vector<1x32xbf16> to vector<1x32xf32>
    %37 = vector.broadcast %35 : vector<320x1xf32> to vector<320x32xf32>
    %38 = vector.broadcast %36 : vector<1x32xf32> to vector<320x32xf32>
    %39 = arith.mulf %37, %38 : vector<320x32xf32>
    %40 = arith.addf %30, %39 : vector<320x32xf32>
    %c0_20 = arith.constant 0 : index
    %c4 = arith.constant 4 : index
    %c0_21 = arith.constant 0 : index
    %41 = vector.load %arg1[%c0_20, %c4, %c0_21] : memref<1x324x1xbf16, #tpu.memory_space<vmem>>, vector<1x320x1xbf16>
    %42 = vector.shape_cast %41 : vector<1x320x1xbf16> to vector<320x1xbf16>
    %c4_22 = arith.constant 4 : index
    %c0_23 = arith.constant 0 : index
    %c0_24 = arith.constant 0 : index
    %43 = vector.load %arg2[%c4_22, %c0_23, %c0_24] : memref<5x1x32xbf16, #tpu.memory_space<vmem>>, vector<1x1x32xbf16>
    %44 = vector.shape_cast %43 : vector<1x1x32xbf16> to vector<1x32xbf16>
    %45 = arith.extf %42 : vector<320x1xbf16> to vector<320x1xf32>
    %46 = arith.extf %44 : vector<1x32xbf16> to vector<1x32xf32>
    %47 = vector.broadcast %45 : vector<320x1xf32> to vector<320x32xf32>
    %48 = vector.broadcast %46 : vector<1x32xf32> to vector<320x32xf32>
    %49 = arith.mulf %47, %48 : vector<320x32xf32>
    %50 = arith.addf %40, %49 : vector<320x32xf32>
    %c0_25 = arith.constant 0 : index
    %c0_26 = arith.constant 0 : index
    %51 = vector.load %arg3[%c0_25, %c0_26] : memref<1x32xf32, #tpu.memory_space<vmem>>, vector<1x32xf32>
    %52 = vector.broadcast %51 : vector<1x32xf32> to vector<320x32xf32>
    %53 = arith.addf %50, %52 : vector<320x32xf32>
    %c0_27 = arith.constant 0 : index
    %c0_28 = arith.constant 0 : index
    %c0_29 = arith.constant 0 : index
    %54 = vector.load %arg4[%c0_27, %c0_28, %c0_29] : memref<1x1x32xf32, #tpu.memory_space<vmem>>, vector<1x1x32xf32>
    %55 = vector.shape_cast %54 : vector<1x1x32xf32> to vector<1x32xf32>
    %56 = vector.broadcast %55 : vector<1x32xf32> to vector<320x32xf32>
    %57 = arith.addf %53, %56 : vector<320x32xf32>
    %cst_30 = arith.constant dense<0.000000e+00> : vector<32xf32>
    %58 = vector.multi_reduction <add>, %57, %cst_30 [0] : vector<320x32xf32> to vector<32xf32>
    %59 = vector.shape_cast %58 : vector<32xf32> to vector<1x32xf32>
    %c0_31 = arith.constant 0 : index
    %c0_32 = arith.constant 0 : index
    %60 = vector.load %arg7[%c0_31, %c0_32] : memref<32x8xf32, #tpu.memory_space<vmem>>, vector<32x8xf32>
    %cst_33 = arith.constant dense<0.000000e+00> : vector<1x8xf32>
    %61 = tpu.matmul %59, %60, %cst_33 {dimension_numbers = #tpu.dot_dimension_numbers<[1], [0], [0], [1], [0, 0, 1, 1], [], []>} : vector<1x32xf32>, vector<32x8xf32>, vector<1x8xf32> -> vector<1x8xf32>
    %cst_34 = arith.constant 1.000000e+00 : f32
    %cst_35 = arith.constant 1.280000e+03 : f32
    %62 = arith.divf %cst_34, %cst_35 : f32
    %63 = vector.broadcast %62 : f32 to vector<1x8xf32>
    %64 = arith.mulf %61, %63 : vector<1x8xf32>
    %c0_36 = arith.constant 0 : index
    %c0_37 = arith.constant 0 : index
    %65 = vector.load %arg8[%c0_36, %c0_37] : memref<8x32xf32, #tpu.memory_space<vmem>>, vector<8x32xf32>
    %cst_38 = arith.constant dense<0.000000e+00> : vector<1x32xf32>
    %66 = tpu.matmul %64, %65, %cst_38 {dimension_numbers = #tpu.dot_dimension_numbers<[1], [0], [0], [1], [0, 0, 1, 1], [], []>} : vector<1x8xf32>, vector<8x32xf32>, vector<1x32xf32> -> vector<1x32xf32>
    %67 = vector.broadcast %66 : vector<1x32xf32> to vector<320x32xf32>
    %68 = arith.subf %57, %67 : vector<320x32xf32>
    %69 = arith.mulf %68, %68 : vector<320x32xf32>
    %cst_39 = arith.constant dense<0.000000e+00> : vector<32xf32>
    %70 = vector.multi_reduction <add>, %69, %cst_39 [0] : vector<320x32xf32> to vector<32xf32>
    %71 = vector.shape_cast %70 : vector<32xf32> to vector<1x32xf32>
    %c0_40 = arith.constant 0 : index
    %c0_41 = arith.constant 0 : index
    %72 = vector.load %arg7[%c0_40, %c0_41] : memref<32x8xf32, #tpu.memory_space<vmem>>, vector<32x8xf32>
    %cst_42 = arith.constant dense<0.000000e+00> : vector<1x8xf32>
    %73 = tpu.matmul %71, %72, %cst_42 {dimension_numbers = #tpu.dot_dimension_numbers<[1], [0], [0], [1], [0, 0, 1, 1], [], []>} : vector<1x32xf32>, vector<32x8xf32>, vector<1x8xf32> -> vector<1x8xf32>
    %cst_43 = arith.constant 1.000000e+00 : f32
    %cst_44 = arith.constant 1.280000e+03 : f32
    %74 = arith.divf %cst_43, %cst_44 : f32
    %75 = vector.broadcast %74 : f32 to vector<1x8xf32>
    %76 = arith.mulf %73, %75 : vector<1x8xf32>
    %c0_45 = arith.constant 0 : index
    %c0_46 = arith.constant 0 : index
    %77 = vector.load %arg8[%c0_45, %c0_46] : memref<8x32xf32, #tpu.memory_space<vmem>>, vector<8x32xf32>
    %cst_47 = arith.constant dense<0.000000e+00> : vector<1x32xf32>
    %78 = tpu.matmul %76, %77, %cst_47 {dimension_numbers = #tpu.dot_dimension_numbers<[1], [0], [0], [1], [0, 0, 1, 1], [], []>} : vector<1x8xf32>, vector<8x32xf32>, vector<1x32xf32> -> vector<1x32xf32>
    %cst_48 = arith.constant 9.99999974E-6 : f32
    %79 = vector.broadcast %cst_48 : f32 to vector<1x32xf32>
    %80 = arith.addf %78, %79 : vector<1x32xf32>
    %81 = math.rsqrt %80 : vector<1x32xf32>
    %82 = vector.broadcast %81 : vector<1x32xf32> to vector<320x32xf32>
    %83 = arith.mulf %68, %82 : vector<320x32xf32>
    %c0_49 = arith.constant 0 : index
    %c0_50 = arith.constant 0 : index
    %84 = vector.load %arg5[%c0_49, %c0_50] : memref<1x32xf32, #tpu.memory_space<vmem>>, vector<1x32xf32>
    %85 = vector.broadcast %84 : vector<1x32xf32> to vector<320x32xf32>
    %86 = arith.mulf %83, %85 : vector<320x32xf32>
    %c0_51 = arith.constant 0 : index
    %c0_52 = arith.constant 0 : index
    %87 = vector.load %arg6[%c0_51, %c0_52] : memref<1x32xf32, #tpu.memory_space<vmem>>, vector<1x32xf32>
    %88 = vector.broadcast %87 : vector<1x32xf32> to vector<320x32xf32>
    %89 = arith.addf %86, %88 : vector<320x32xf32>
    %90 = arith.negf %89 : vector<320x32xf32>
    %91 = math.exp %90 : vector<320x32xf32>
    %cst_53 = arith.constant 1.000000e+00 : f32
    %92 = vector.broadcast %cst_53 : f32 to vector<320x32xf32>
    %93 = arith.addf %92, %91 : vector<320x32xf32>
    %94 = arith.divf %92, %93 : vector<320x32xf32>
    %95 = arith.mulf %89, %94 : vector<320x32xf32>
    %c0_54 = arith.constant 0 : index
    %c0_55 = arith.constant 0 : index
    %c0_56 = arith.constant 0 : index
    %96 = vector.load %arg9[%c0_54, %c0_55, %c0_56] : memref<1x320x32xf32, #tpu.memory_space<vmem>>, vector<1x320x32xf32>
    %97 = vector.shape_cast %96 : vector<1x320x32xf32> to vector<320x32xf32>
    %98 = vector.shape_cast %95 : vector<320x32xf32> to vector<1x320x32xf32>
    tpu.vector_store %arg9[%c0_54, %c0_55, %c0_56], %98 {strides = array<i32>} : memref<1x320x32xf32, #tpu.memory_space<vmem>>, vector<1x320x32xf32>,
    return
  }
  func.func @transform_0(%arg0: i32) -> (i32, i32, i32) {
    %c0_i32 = arith.constant 0 : i32
    %c0_i32_0 = arith.constant 0 : i32
    %c0_i32_1 = arith.constant 0 : i32
    return %arg0, %c0_i32, %c0_i32_0 : i32, i32, i32
  }
  func.func @transform_1(%arg0: i32) -> (i32, i32, i32) {
    %c0_i32 = arith.constant 0 : i32
    %c0_i32_0 = arith.constant 0 : i32
    %c0_i32_1 = arith.constant 0 : i32
    %c0_i32_2 = arith.constant 0 : i32
    return %c0_i32, %c0_i32_0, %c0_i32_1 : i32, i32, i32
  }
  func.func @transform_2(%arg0: i32) -> (i32, i32) {
    %c0_i32 = arith.constant 0 : i32
    %c0_i32_0 = arith.constant 0 : i32
    %c0_i32_1 = arith.constant 0 : i32
    return %c0_i32, %c0_i32_0 : i32, i32
  }
  func.func @transform_3(%arg0: i32) -> (i32, i32, i32) {
    %c0_i32 = arith.constant 0 : i32
    %c0_i32_0 = arith.constant 0 : i32
    %c0_i32_1 = arith.constant 0 : i32
    return %arg0, %c0_i32, %c0_i32_0 : i32, i32, i32
  }
  func.func @transform_4(%arg0: i32) -> (i32, i32) {
    %c0_i32 = arith.constant 0 : i32
    %c0_i32_0 = arith.constant 0 : i32
    %c0_i32_1 = arith.constant 0 : i32
    return %c0_i32, %c0_i32_0 : i32, i32
  }
  func.func @transform_5(%arg0: i32) -> (i32, i32) {
    %c0_i32 = arith.constant 0 : i32
    %c0_i32_0 = arith.constant 0 : i32
    %c0_i32_1 = arith.constant 0 : i32
    return %c0_i32, %c0_i32_0 : i32, i32
  }
  func.func @transform_6(%arg0: i32) -> (i32, i32) {
    %c0_i32 = arith.constant 0 : i32
    %c0_i32_0 = arith.constant 0 : i32
    %c0_i32_1 = arith.constant 0 : i32
    return %c0_i32, %c0_i32_0 : i32, i32
  }
  func.func @transform_7(%arg0: i32) -> (i32, i32) {
    %c0_i32 = arith.constant 0 : i32
    %c0_i32_0 = arith.constant 0 : i32
    %c0_i32_1 = arith.constant 0 : i32
    return %c0_i32, %c0_i32_0 : i32, i32
  }
  func.func @transform_8(%arg0: i32) -> (i32, i32, i32) {
    %c0_i32 = arith.constant 0 : i32
    %c0_i32_0 = arith.constant 0 : i32
    %c0_i32_1 = arith.constant 0 : i32
    return %arg0, %c0_i32, %c0_i32_0 : i32, i32, i32
  }
}

</mosaic_0001>

<llo_original>
// kernel: tpu_custom_call.1
$region0: #{tpu_custom_call.1}
  #allocation0 [shape = 'u32[]', space=smem, size = 0x4, offset = 0x4, fixed_abs, tag = 'smem constant byte address 0x4 - core index']
  #allocation1 [shape = 'u32[72,128]{1,0:T(1,128)}', space=vmem, size = 0x9000, scoped, tag = 'internal scratch']
  %s0 = inlined_call_operand.vmem [shape: bf16[6,324,1], index: 0, kind: input, shape index: {}]
  %s1 = inlined_call_operand.vmem [shape: bf16[5,1,32], index: 1, kind: input, shape index: {}]
  %s2 = inlined_call_operand.vmem [shape: f32[1,32], index: 2, kind: input, shape index: {}]
  %s3 = inlined_call_operand.vmem [shape: f32[6,1,32], index: 3, kind: input, shape index: {}]
  %s4 = inlined_call_operand.vmem [shape: f32[1,32], index: 4, kind: input, shape index: {}]
  %s5 = inlined_call_operand.vmem [shape: f32[1,32], index: 5, kind: input, shape index: {}]
  %s6 = inlined_call_operand.vmem [shape: f32[32,8], index: 6, kind: input, shape index: {}]
  %s7 = inlined_call_operand.vmem [shape: f32[8,32], index: 7, kind: input, shape index: {}]
  %s8 = inlined_call_operand.vmem [shape: f32[6,320,32], index: 8, kind: output, shape index: {}]
  %s9 = sld [smem:[#allocation0]]
  $region65: #{tpu_custom_call.1} parent=0
    _
  %s11 = ssub.s32 1, %s9
  %s12 = scalar_select 0, %s11, %s9
  loop: start=0, step=1, limit=8
  $region2: #{tpu_custom_call.1} parent=0 // loop_pre_header
    _
  $region3: #{tpu_custom_call.1} parent=0 // loop_header
    %s14 = sphi 0, %s18
    %p15 = scmp.ge.s32.totalorder %s14, 8
    %s24 = sphi 0, %s26
    %s27 = sphi 0, %s24
    %s28 = sphi 0, %s27
    %s44 = sphi 0, %s28
    %s48 = sphi 0, %s48
    %s50 = sphi 0, %s48
    %s51 = sphi 0, %s50
    %s65 = sphi 0, %s51
    %s69 = sphi 0, %s69
    %s71 = sphi 0, %s69
    %s72 = sphi 0, %s71
    %s86 = sphi 0, %s72
    %s92 = sphi 0, %s94
    %s95 = sphi 0, %s92
    %s96 = sphi 0, %s95
    %s112 = sphi 0, %s96
    %s116 = sphi 0, %s116
    %s118 = sphi 0, %s116
    %s119 = sphi 0, %s118
    %s133 = sphi 0, %s119
    %s137 = sphi 0, %s137
    %s139 = sphi 0, %s137
    %s140 = sphi 0, %s139
    %s154 = sphi 0, %s140
    %s158 = sphi 0, %s158
    %s160 = sphi 0, %s158
    %s161 = sphi 0, %s160
    %s175 = sphi 0, %s161
    %s179 = sphi 0, %s179
    %s181 = sphi 0, %s179
    %s182 = sphi 0, %s181
    %s196 = sphi 0, %s182
    %s202 = sphi 0, %s204
    %s205 = sphi 0, %s202
    %s206 = sphi 0, %s205
    %s222 = sphi 0, %s206
  $region4: #{tpu_custom_call.1} parent=0 // loop_header_branch
    %17 = sbr.rel (%p15) target = $region8
  $region5: #{tpu_custom_call.1} parent=0 // loop_body
    %s19 = ssub.s32 %s14, 1
    %s20 = ssub.s32 %s14, 2
    %s21 = sadd.s32 %s14, 1
    %s22 = ssub.s32 %s14, %s21
    %p23 = scmp.eq.s32.totalorder %s22, 0
    %s25 = sadd.s32 %s24, 1
    %s26 = scalar_select %p23, %s24, %s25
    %p29 = pneg %p23
    %p30 = scmp.eq.s32.totalorder %s14, 5
    %p31 = por %p29, %p30
    %p32 = scmp.ne.s32.totalorder %s24, %s27
    %p33 = scmp.eq.s32.totalorder %s14, 0
    %p34 = por %p32, %p33
    %p35 = scmp.ne.s32.totalorder %s24, %s27
    %p36 = scmp.eq.s32.totalorder %s19, 5
    %p37 = por %p35, %p36
    %p38 = scmp.ne.s32.totalorder %s27, %s28
    %p39 = scmp.eq.s32.totalorder %s19, 0
    %p40 = por %p38, %p39
    %p41 = scmp.ne.s32.totalorder %s27, %s28
    %p42 = scmp.eq.s32.totalorder %s20, 5
    %p43 = por %p41, %p42
    %p45 = scmp.ne.s32.totalorder %s28, %s44
    %p46 = scmp.eq.s32.totalorder %s20, 0
    %p47 = por %p45, %p46
    %s49 = sadd.s32 %s48, 1
    %p52 = scmp.eq.s32.totalorder %s14, 5
    %p53 = scmp.ne.s32.totalorder %s48, %s50
    %p54 = scmp.eq.s32.totalorder %s14, 0
    %p55 = por %p53, %p54
    %p56 = scmp.ne.s32.totalorder %s48, %s50
    %p57 = scmp.eq.s32.totalorder %s19, 5
    %p58 = por %p56, %p57
    %p59 = scmp.ne.s32.totalorder %s50, %s51
    %p60 = scmp.eq.s32.totalorder %s19, 0
    %p61 = por %p59, %p60
    %p62 = scmp.ne.s32.totalorder %s50, %s51
    %p63 = scmp.eq.s32.totalorder %s20, 5
    %p64 = por %p62, %p63
    %p66 = scmp.ne.s32.totalorder %s51, %s65
    %p67 = scmp.eq.s32.totalorder %s20, 0
    %p68 = por %p66, %p67
    %s70 = sadd.s32 %s69, 1
    %p73 = scmp.eq.s32.totalorder %s14, 5
    %p74 = scmp.ne.s32.totalorder %s69, %s71
    %p75 = scmp.eq.s32.totalorder %s14, 0
    %p76 = por %p74, %p75
    %p77 = scmp.ne.s32.totalorder %s69, %s71
    %p78 = scmp.eq.s32.totalorder %s19, 5
    %p79 = por %p77, %p78
    %p80 = scmp.ne.s32.totalorder %s71, %s72
    %p81 = scmp.eq.s32.totalorder %s19, 0
    %p82 = por %p80, %p81
    %p83 = scmp.ne.s32.totalorder %s71, %s72
    %p84 = scmp.eq.s32.totalorder %s20, 5
    %p85 = por %p83, %p84
    %p87 = scmp.ne.s32.totalorder %s72, %s86
    %p88 = scmp.eq.s32.totalorder %s20, 0
    %p89 = por %p87, %p88
    %s90 = ssub.s32 %s14, %s21
    %p91 = scmp.eq.s32.totalorder %s90, 0
    %s93 = sadd.s32 %s92, 1
    %s94 = scalar_select %p91, %s92, %s93
    %p97 = pneg %p91
    %p98 = scmp.eq.s32.totalorder %s14, 5
    %p99 = por %p97, %p98
    %p100 = scmp.ne.s32.totalorder %s92, %s95
    %p101 = scmp.eq.s32.totalorder %s14, 0
    %p102 = por %p100, %p101
    %p103 = scmp.ne.s32.totalorder %s92, %s95
    %p104 = scmp.eq.s32.totalorder %s19, 5
    %p105 = por %p103, %p104
    %p106 = scmp.ne.s32.totalorder %s95, %s96
    %p107 = scmp.eq.s32.totalorder %s19, 0
    %p108 = por %p106, %p107
    %p109 = scmp.ne.s32.totalorder %s95, %s96
    %p110 = scmp.eq.s32.totalorder %s20, 5
    %p111 = por %p109, %p110
    %p113 = scmp.ne.s32.totalorder %s96, %s112
    %p114 = scmp.eq.s32.totalorder %s20, 0
    %p115 = por %p113, %p114
    %s117 = sadd.s32 %s116, 1
    %p120 = scmp.eq.s32.totalorder %s14, 5
    %p121 = scmp.ne.s32.totalorder %s116, %s118
    %p122 = scmp.eq.s32.totalorder %s14, 0
    %p123 = por %p121, %p122
    %p124 = scmp.ne.s32.totalorder %s116, %s118
    %p125 = scmp.eq.s32.totalorder %s19, 5
    %p126 = por %p124, %p125
    %p127 = scmp.ne.s32.totalorder %s118, %s119
    %p128 = scmp.eq.s32.totalorder %s19, 0
    %p129 = por %p127, %p128
    %p130 = scmp.ne.s32.totalorder %s118, %s119
    %p131 = scmp.eq.s32.totalorder %s20, 5
    %p132 = por %p130, %p131
    %p134 = scmp.ne.s32.totalorder %s119, %s133
    %p135 = scmp.eq.s32.totalorder %s20, 0
    %p136 = por %p134, %p135
    %s138 = sadd.s32 %s137, 1
    %p141 = scmp.eq.s32.totalorder %s14, 5
    %p142 = scmp.ne.s32.totalorder %s137, %s139
    %p143 = scmp.eq.s32.totalorder %s14, 0
    %p144 = por %p142, %p143
    %p145 = scmp.ne.s32.totalorder %s137, %s139
    %p146 = scmp.eq.s32.totalorder %s19, 5
    %p147 = por %p145, %p146
    %p148 = scmp.ne.s32.totalorder %s139, %s140
    %p149 = scmp.eq.s32.totalorder %s19, 0
    %p150 = por %p148, %p149
    %p151 = scmp.ne.s32.totalorder %s139, %s140
    %p152 = scmp.eq.s32.totalorder %s20, 5
    %p153 = por %p151, %p152
    %p155 = scmp.ne.s32.totalorder %s140, %s154
    %p156 = scmp.eq.s32.totalorder %s20, 0
    %p157 = por %p155, %p156
    %s159 = sadd.s32 %s158, 1
    %p162 = scmp.eq.s32.totalorder %s14, 5
    %p163 = scmp.ne.s32.totalorder %s158, %s160
    %p164 = scmp.eq.s32.totalorder %s14, 0
    %p165 = por %p163, %p164
    %p166 = scmp.ne.s32.totalorder %s158, %s160
    %p167 = scmp.eq.s32.totalorder %s19, 5
    %p168 = por %p166, %p167
    %p169 = scmp.ne.s32.totalorder %s160, %s161
    %p170 = scmp.eq.s32.totalorder %s19, 0
    %p171 = por %p169, %p170
    %p172 = scmp.ne.s32.totalorder %s160, %s161
    %p173 = scmp.eq.s32.totalorder %s20, 5
    %p174 = por %p172, %p173
    %p176 = scmp.ne.s32.totalorder %s161, %s175
    %p177 = scmp.eq.s32.totalorder %s20, 0
    %p178 = por %p176, %p177
    %s180 = sadd.s32 %s179, 1
    %p183 = scmp.eq.s32.totalorder %s14, 5
    %p184 = scmp.ne.s32.totalorder %s179, %s181
    %p185 = scmp.eq.s32.totalorder %s14, 0
    %p186 = por %p184, %p185
    %p187 = scmp.ne.s32.totalorder %s179, %s181
    %p188 = scmp.eq.s32.totalorder %s19, 5
    %p189 = por %p187, %p188
    %p190 = scmp.ne.s32.totalorder %s181, %s182
    %p191 = scmp.eq.s32.totalorder %s19, 0
    %p192 = por %p190, %p191
    %p193 = scmp.ne.s32.totalorder %s181, %s182
    %p194 = scmp.eq.s32.totalorder %s20, 5
    %p195 = por %p193, %p194
    %p197 = scmp.ne.s32.totalorder %s182, %s196
    %p198 = scmp.eq.s32.totalorder %s20, 0
    %p199 = por %p197, %p198
    %s200 = ssub.s32 %s14, %s21
    %p201 = scmp.eq.s32.totalorder %s200, 0
    %s203 = sadd.s32 %s202, 1
    %s204 = scalar_select %p201, %s202, %s203
    %p207 = pneg %p201
    %p208 = scmp.eq.s32.totalorder %s14, 5
    %p209 = por %p207, %p208
    %p210 = scmp.ne.s32.totalorder %s202, %s205
    %p211 = scmp.eq.s32.totalorder %s14, 0
    %p212 = por %p210, %p211
    %p213 = scmp.ne.s32.totalorder %s202, %s205
    %p214 = scmp.eq.s32.totalorder %s19, 5
    %p215 = por %p213, %p214
    %p216 = scmp.ne.s32.totalorder %s205, %s206
    %p217 = scmp.eq.s32.totalorder %s19, 0
    %p218 = por %p216, %p217
    %p219 = scmp.ne.s32.totalorder %s205, %s206
    %p220 = scmp.eq.s32.totalorder %s20, 5
    %p221 = por %p219, %p220
    %p223 = scmp.ne.s32.totalorder %s206, %s222
    %p224 = scmp.eq.s32.totalorder %s20, 0
    %p225 = por %p223, %p224
    %p226 = scmp.le.s32.totalorder 1, %s14
    %p227 = scmp.lt.s32.totalorder %s14, 7
    %p228 = pnand %p226, %p227
    %p229 = pneg %p228
    // Predicated region
    $region9: #{tpu_custom_call.1} parent=5 // pred_check
      _
    $region10: #{tpu_custom_call.1} parent=5 // pred_check_branch
      %231 = sbr.rel (%p228) target = $region12
    $region11: #{tpu_custom_call.1} parent=5 // pred_region
      %s232 = ssub.s32 %s14, 1
      // Predicated region
      $region13: #{tpu_custom_call.1} parent=11 // pred_check
        %p233 = pneg %p61
      $region14: #{tpu_custom_call.1} parent=11 // pred_check_branch
        %235 = sbr.rel (%p233) target = $region16
      $region15: #{tpu_custom_call.1} parent=11 // pred_region
        _
      $region16: #{tpu_custom_call.1} parent=11 // pred_fallthru
        _
      // Predicated region
      $region17: #{tpu_custom_call.1} parent=11 // pred_check
        %p236 = pneg %p82
      $region18: #{tpu_custom_call.1} parent=11 // pred_check_branch
        %238 = sbr.rel (%p236) target = $region20
      $region19: #{tpu_custom_call.1} parent=11 // pred_region
        _
      $region20: #{tpu_custom_call.1} parent=11 // pred_fallthru
        _
      // Predicated region
      $region21: #{tpu_custom_call.1} parent=11 // pred_check
        %p239 = pneg %p129
      $region22: #{tpu_custom_call.1} parent=11 // pred_check_branch
        %241 = sbr.rel (%p239) target = $region24
      $region23: #{tpu_custom_call.1} parent=11 // pred_region
        _
      $region24: #{tpu_custom_call.1} parent=11 // pred_fallthru
        _
      // Predicated region
      $region25: #{tpu_custom_call.1} parent=11 // pred_check
        %p242 = pneg %p150
      $region26: #{tpu_custom_call.1} parent=11 // pred_check_branch
        %244 = sbr.rel (%p242) target = $region28
      $region27: #{tpu_custom_call.1} parent=11 // pred_region
        _
      $region28: #{tpu_custom_call.1} parent=11 // pred_fallthru
        _
      // Predicated region
      $region29: #{tpu_custom_call.1} parent=11 // pred_check
        %p245 = pneg %p171
      $region30: #{tpu_custom_call.1} parent=11 // pred_check_branch
        %247 = sbr.rel (%p245) target = $region32
      $region31: #{tpu_custom_call.1} parent=11 // pred_region
        _
      $region32: #{tpu_custom_call.1} parent=11 // pred_fallthru
        _
      // Predicated region
      $region33: #{tpu_custom_call.1} parent=11 // pred_check
        %p248 = pneg %p192
      $region34: #{tpu_custom_call.1} parent=11 // pred_check_branch
        %250 = sbr.rel (%p248) target = $region36
      $region35: #{tpu_custom_call.1} parent=11 // pred_region
        _
      $region36: #{tpu_custom_call.1} parent=11 // pred_fallthru
        _
    $region12: #{tpu_custom_call.1} parent=5 // pred_fallthru
      _
    %p251 = scmp.lt.s32.totalorder %s14, 6
    // Predicated region
    $region37: #{tpu_custom_call.1} parent=5 // pred_check
      %p252 = pneg %p251
    $region38: #{tpu_custom_call.1} parent=5 // pred_check_branch
      %254 = sbr.rel (%p252) target = $region40
    $region39: #{tpu_custom_call.1} parent=5 // pred_region
      // Predicated region
      $region41: #{tpu_custom_call.1} parent=39 // pred_check
        %p255 = pneg %p34
      $region42: #{tpu_custom_call.1} parent=39 // pred_check_branch
        %257 = sbr.rel (%p255) target = $region44
      $region43: #{tpu_custom_call.1} parent=39 // pred_region
        %p258 = scmp.lt.s32.totalorder %s14, 5
        %s259 = scalar_select %p258, %s14, 5
        %s260 = smul.addr %s259, 41
        %s261 = smul.addr %s260, 4
        %s262 = scalar_lea.vmem %s0, %s261
      $region44: #{tpu_custom_call.1} parent=39 // pred_fallthru
        _
      // Predicated region
      $region45: #{tpu_custom_call.1} parent=39 // pred_check
        %p263 = pneg %p102
      $region46: #{tpu_custom_call.1} parent=39 // pred_check_branch
        %265 = sbr.rel (%p263) target = $region48
      $region47: #{tpu_custom_call.1} parent=39 // pred_region
        %p266 = scmp.lt.s32.totalorder %s14, 5
        %s267 = scalar_select %p266, %s14, 5
        %s268 = scalar_lea.vmem %s3, %s267
      $region48: #{tpu_custom_call.1} parent=39 // pred_fallthru
        _
    $region40: #{tpu_custom_call.1} parent=5 // pred_fallthru
      _
    %p269 = scmp.le.s32.totalorder 1, %s14
    %p270 = scmp.lt.s32.totalorder %s14, 7
    %p271 = pnand %p269, %p270
    %p272 = pneg %p271
    // Predicated region
    $region49: #{tpu_custom_call.1} parent=5 // pred_check
      _
    $region50: #{tpu_custom_call.1} parent=5 // pred_check_branch
      %274 = sbr.rel (%p271) target = $region52
    $region51: #{tpu_custom_call.1} parent=5 // pred_region
      %s275 = ssub.s32 %s14, 1
      %p276 = scmp.lt.s32.totalorder %s19, 5
      %s277 = scalar_select %p276, %s19, 5
      %s278 = smul.addr %s277, 41
      %s279 = smul.addr %s278, 4
      %s280 = scalar_lea.vmem %s0, %s279
      %p281 = pneg %p40
      %p282 = pneg %p37
      %p283 = pneg %p61
      %p284 = pneg %p58
      %p285 = pneg %p82
      %p286 = pneg %p79
      %p287 = scmp.lt.s32.totalorder %s19, 5
      %s288 = scalar_select %p287, %s19, 5
      %s289 = scalar_lea.vmem %s3, %s288
      %p290 = pneg %p108
      %p291 = pneg %p105
      %p292 = pneg %p129
      %p293 = pneg %p126
      %p294 = pneg %p150
      %p295 = pneg %p147
      %p296 = pneg %p171
      %p297 = pneg %p168
      %p298 = pneg %p192
      %p299 = pneg %p189
      %p300 = pneg %p218
      %p301 = pneg %p215
      %p302 = scmp.lt.s32.totalorder %s19, 5
      %s303 = scalar_select %p302, %s19, 5
      %s304 = smul.addr %s303, 40
      %s305 = smul.addr %s304, 8
      %s306 = scalar_lea.vmem %s8, %s305
      %p307 = scmp.lt.s32.totalorder %s19, 5
      %s308 = scalar_select %p307, %s19, 5
      %s309 = smul.addr %s308, 41
      %s310 = smul.addr %s309, 4
      %s311 = scalar_lea.vmem %s0, %s310
      %p312 = scmp.lt.s32.totalorder %s19, 5
      %s313 = scalar_select %p312, %s19, 5
      %s314 = scalar_lea.vmem %s3, %s313
      %p315 = scmp.lt.s32.totalorder %s19, 5
      %s316 = scalar_select %p315, %s19, 5
      %s317 = smul.addr %s316, 40
      %s318 = smul.addr %s317, 8
      %s319 = scalar_lea.vmem %s8, %s318
      %v320 = vld [vmem:[%s311] sm:$0xf]
      %v321 = vld [vmem:[%s311 + $0x4] sm:$0xf]
      %v322 = vld [vmem:[%s311 + $0x8] sm:$0xf]
      %v323 = vld [vmem:[%s311 + $0xc] sm:$0xf]
      %v324 = vld [vmem:[%s311 + $0x10] sm:$0xf]
      %v325 = vld [vmem:[%s311 + $0x14] sm:$0xf]
      %v326 = vld [vmem:[%s311 + $0x18] sm:$0xf]
      %v327 = vld [vmem:[%s311 + $0x1c] sm:$0xf]
      %v328 = vld [vmem:[%s311 + $0x20] sm:$0xf]
      %v329 = vld [vmem:[%s311 + $0x24] sm:$0xf]
      %v330 = vld [vmem:[%s311 + $0x28] sm:$0xf]
      %v331 = vld [vmem:[%s311 + $0x2c] sm:$0xf]
      %v332 = vld [vmem:[%s311 + $0x30] sm:$0xf]
      %v333 = vld [vmem:[%s311 + $0x34] sm:$0xf]
      %v334 = vld [vmem:[%s311 + $0x38] sm:$0xf]
      %v335 = vld [vmem:[%s311 + $0x3c] sm:$0xf]
      %v336 = vld [vmem:[%s311 + $0x40] sm:$0xf]
      %v337 = vld [vmem:[%s311 + $0x44] sm:$0xf]
      %v338 = vld [vmem:[%s311 + $0x48] sm:$0xf]
      %v339 = vld [vmem:[%s311 + $0x4c] sm:$0xf]
      %v340 = vld [vmem:[%s311 + $0x50] sm:$0xf]
      %v341 = vld [vmem:[%s311 + $0x54] sm:$0xf]
      %v342 = vld [vmem:[%s311 + $0x58] sm:$0xf]
      %v343 = vld [vmem:[%s311 + $0x5c] sm:$0xf]
      %v344 = vld [vmem:[%s311 + $0x60] sm:$0xf]
      %v345 = vld [vmem:[%s311 + $0x64] sm:$0xf]
      %v346 = vld [vmem:[%s311 + $0x68] sm:$0xf]
      %v347 = vld [vmem:[%s311 + $0x6c] sm:$0xf]
      %v348 = vld [vmem:[%s311 + $0x70] sm:$0xf]
      %v349 = vld [vmem:[%s311 + $0x74] sm:$0xf]
      %v350 = vld [vmem:[%s311 + $0x78] sm:$0xf]
      %v351 = vld [vmem:[%s311 + $0x7c] sm:$0xf]
      %v352 = vld [vmem:[%s311 + $0x80] sm:$0xf]
      %v353 = vld [vmem:[%s311 + $0x84] sm:$0xf]
      %v354 = vld [vmem:[%s311 + $0x88] sm:$0xf]
      %v355 = vld [vmem:[%s311 + $0x8c] sm:$0xf]
      %v356 = vld [vmem:[%s311 + $0x90] sm:$0xf]
      %v357 = vld [vmem:[%s311 + $0x94] sm:$0xf]
      %v358 = vld [vmem:[%s311 + $0x98] sm:$0xf]
      %v359 = vld [vmem:[%s311 + $0x9c] sm:$0xf]
      %v360 = vld [vmem:[%s1] sm:$0x1]
      %v361 = vunpack.c.l.bf16 %v320
      %v362 = vunpack.c.l.bf16 %v321
      %v363 = vunpack.c.l.bf16 %v322
      %v364 = vunpack.c.l.bf16 %v323
      %v365 = vunpack.c.l.bf16 %v324
      %v366 = vunpack.c.l.bf16 %v325
      %v367 = vunpack.c.l.bf16 %v326
      %v368 = vunpack.c.l.bf16 %v327
      %v369 = vunpack.c.l.bf16 %v328
      %v370 = vunpack.c.l.bf16 %v329
      %v371 = vunpack.c.l.bf16 %v330
      %v372 = vunpack.c.l.bf16 %v331
      %v373 = vunpack.c.l.bf16 %v332
      %v374 = vunpack.c.l.bf16 %v333
      %v375 = vunpack.c.l.bf16 %v334
      %v376 = vunpack.c.l.bf16 %v335
      %v377 = vunpack.c.l.bf16 %v336
      %v378 = vunpack.c.l.bf16 %v337
      %v379 = vunpack.c.l.bf16 %v338
      %v380 = vunpack.c.l.bf16 %v339
      %v381 = vunpack.c.l.bf16 %v340
      %v382 = vunpack.c.l.bf16 %v341
      %v383 = vunpack.c.l.bf16 %v342
      %v384 = vunpack.c.l.bf16 %v343
      %v385 = vunpack.c.l.bf16 %v344
      %v386 = vunpack.c.l.bf16 %v345
      %v387 = vunpack.c.l.bf16 %v346
      %v388 = vunpack.c.l.bf16 %v347
      %v389 = vunpack.c.l.bf16 %v348
      %v390 = vunpack.c.l.bf16 %v349
      %v391 = vunpack.c.l.bf16 %v350
      %v392 = vunpack.c.l.bf16 %v351
      %v393 = vunpack.c.l.bf16 %v352
      %v394 = vunpack.c.l.bf16 %v353
      %v395 = vunpack.c.l.bf16 %v354
      %v396 = vunpack.c.l.bf16 %v355
      %v397 = vunpack.c.l.bf16 %v356
      %v398 = vunpack.c.l.bf16 %v357
      %v399 = vunpack.c.l.bf16 %v358
      %v400 = vunpack.c.l.bf16 %v359
      %v401 = vunpack.c.l.bf16 %v360
      %403 = vset.pattern.permute.xlu0 0
      %404 = vperm.xlu0 %403, %v361
      %v405 = vpop.permute.xlu0 %404
      %408 = vset.pattern.permute.xlu0 0
      %409 = vperm.xlu0 %408, %v362
      %v410 = vpop.permute.xlu0 %409
      %413 = vset.pattern.permute.xlu0 0
      %414 = vperm.xlu0 %413, %v363
      %v415 = vpop.permute.xlu0 %414
      %418 = vset.pattern.permute.xlu0 0
      %419 = vperm.xlu0 %418, %v364
      %v420 = vpop.permute.xlu0 %419
      %423 = vset.pattern.permute.xlu0 0
      %424 = vperm.xlu0 %423, %v365
      %v425 = vpop.permute.xlu0 %424
      %428 = vset.pattern.permute.xlu0 0
      %429 = vperm.xlu0 %428, %v366
      %v430 = vpop.permute.xlu0 %429
      %433 = vset.pattern.permute.xlu0 0
      %434 = vperm.xlu0 %433, %v367
      %v435 = vpop.permute.xlu0 %434
      %438 = vset.pattern.permute.xlu0 0
      %439 = vperm.xlu0 %438, %v368
      %v440 = vpop.permute.xlu0 %439
      %443 = vset.pattern.permute.xlu0 0
      %444 = vperm.xlu0 %443, %v369
      %v445 = vpop.permute.xlu0 %444
      %448 = vset.pattern.permute.xlu0 0
      %449 = vperm.xlu0 %448, %v370
      %v450 = vpop.permute.xlu0 %449
      %453 = vset.pattern.permute.xlu0 0
      %454 = vperm.xlu0 %453, %v371
      %v455 = vpop.permute.xlu0 %454
      %458 = vset.pattern.permute.xlu0 0
      %459 = vperm.xlu0 %458, %v372
      %v460 = vpop.permute.xlu0 %459
      %463 = vset.pattern.permute.xlu0 0
      %464 = vperm.xlu0 %463, %v373
      %v465 = vpop.permute.xlu0 %464
      %468 = vset.pattern.permute.xlu0 0
      %469 = vperm.xlu0 %468, %v374
      %v470 = vpop.permute.xlu0 %469
      %473 = vset.pattern.permute.xlu0 0
      %474 = vperm.xlu0 %473, %v375
      %v475 = vpop.permute.xlu0 %474
      %478 = vset.pattern.permute.xlu0 0
      %479 = vperm.xlu0 %478, %v376
      %v480 = vpop.permute.xlu0 %479
      %483 = vset.pattern.permute.xlu0 0
      %484 = vperm.xlu0 %483, %v377
      %v485 = vpop.permute.xlu0 %484
      %488 = vset.pattern.permute.xlu0 0
      %489 = vperm.xlu0 %488, %v378
      %v490 = vpop.permute.xlu0 %489
      %493 = vset.pattern.permute.xlu0 0
      %494 = vperm.xlu0 %493, %v379
      %v495 = vpop.permute.xlu0 %494
      %498 = vset.pattern.permute.xlu0 0
      %499 = vperm.xlu0 %498, %v380
      %v500 = vpop.permute.xlu0 %499
      %503 = vset.pattern.permute.xlu0 0
      %504 = vperm.xlu0 %503, %v381
      %v505 = vpop.permute.xlu0 %504
      %508 = vset.pattern.permute.xlu0 0
      %509 = vperm.xlu0 %508, %v382
      %v510 = vpop.permute.xlu0 %509
      %513 = vset.pattern.permute.xlu0 0
      %514 = vperm.xlu0 %513, %v383
      %v515 = vpop.permute.xlu0 %514
      %518 = vset.pattern.permute.xlu0 0
      %519 = vperm.xlu0 %518, %v384
      %v520 = vpop.permute.xlu0 %519
      %523 = vset.pattern.permute.xlu0 0
      %524 = vperm.xlu0 %523, %v385
      %v525 = vpop.permute.xlu0 %524
      %528 = vset.pattern.permute.xlu0 0
      %529 = vperm.xlu0 %528, %v386
      %v530 = vpop.permute.xlu0 %529
      %533 = vset.pattern.permute.xlu0 0
      %534 = vperm.xlu0 %533, %v387
      %v535 = vpop.permute.xlu0 %534
      %538 = vset.pattern.permute.xlu0 0
      %539 = vperm.xlu0 %538, %v388
      %v540 = vpop.permute.xlu0 %539
      %543 = vset.pattern.permute.xlu0 0
      %544 = vperm.xlu0 %543, %v389
      %v545 = vpop.permute.xlu0 %544
      %548 = vset.pattern.permute.xlu0 0
      %549 = vperm.xlu0 %548, %v390
      %v550 = vpop.permute.xlu0 %549
      %553 = vset.pattern.permute.xlu0 0
      %554 = vperm.xlu0 %553, %v391
      %v555 = vpop.permute.xlu0 %554
      %558 = vset.pattern.permute.xlu0 0
      %559 = vperm.xlu0 %558, %v392
      %v560 = vpop.permute.xlu0 %559
      %563 = vset.pattern.permute.xlu0 0
      %564 = vperm.xlu0 %563, %v393
      %v565 = vpop.permute.xlu0 %564
      %568 = vset.pattern.permute.xlu0 0
      %569 = vperm.xlu0 %568, %v394
      %v570 = vpop.permute.xlu0 %569
      %573 = vset.pattern.permute.xlu0 0
      %574 = vperm.xlu0 %573, %v395
      %v575 = vpop.permute.xlu0 %574
      %578 = vset.pattern.permute.xlu0 0
      %579 = vperm.xlu0 %578, %v396
      %v580 = vpop.permute.xlu0 %579
      %583 = vset.pattern.permute.xlu0 0
      %584 = vperm.xlu0 %583, %v397
      %v585 = vpop.permute.xlu0 %584
      %588 = vset.pattern.permute.xlu0 0
      %589 = vperm.xlu0 %588, %v398
      %v590 = vpop.permute.xlu0 %589
      %593 = vset.pattern.permute.xlu0 0
      %594 = vperm.xlu0 %593, %v399
      %v595 = vpop.permute.xlu0 %594
      %598 = vset.pattern.permute.xlu0 0
      %599 = vperm.xlu0 %598, %v400
      %v600 = vpop.permute.xlu0 %599
      %v602 = vperm.slane %v401, 0
      %v603 = vmul.f32 %v405, %v602
      %v604 = vmul.f32 %v410, %v602
      %v605 = vmul.f32 %v415, %v602
      %v606 = vmul.f32 %v420, %v602
      %v607 = vmul.f32 %v425, %v602
      %v608 = vmul.f32 %v430, %v602
      %v609 = vmul.f32 %v435, %v602
      %v610 = vmul.f32 %v440, %v602
      %v611 = vmul.f32 %v445, %v602
      %v612 = vmul.f32 %v450, %v602
      %v613 = vmul.f32 %v455, %v602
      %v614 = vmul.f32 %v460, %v602
      %v615 = vmul.f32 %v465, %v602
      %v616 = vmul.f32 %v470, %v602
      %v617 = vmul.f32 %v475, %v602
      %v618 = vmul.f32 %v480, %v602
      %v619 = vmul.f32 %v485, %v602
      %v620 = vmul.f32 %v490, %v602
      %v621 = vmul.f32 %v495, %v602
      %v622 = vmul.f32 %v500, %v602
      %v623 = vmul.f32 %v505, %v602
      %v624 = vmul.f32 %v510, %v602
      %v625 = vmul.f32 %v515, %v602
      %v626 = vmul.f32 %v520, %v602
      %v627 = vmul.f32 %v525, %v602
      %v628 = vmul.f32 %v530, %v602
      %v629 = vmul.f32 %v535, %v602
      %v630 = vmul.f32 %v540, %v602
      %v631 = vmul.f32 %v545, %v602
      %v632 = vmul.f32 %v550, %v602
      %v633 = vmul.f32 %v555, %v602
      %v634 = vmul.f32 %v560, %v602
      %v635 = vmul.f32 %v565, %v602
      %v636 = vmul.f32 %v570, %v602
      %v637 = vmul.f32 %v575, %v602
      %v638 = vmul.f32 %v580, %v602
      %v639 = vmul.f32 %v585, %v602
      %v640 = vmul.f32 %v590, %v602
      %v641 = vmul.f32 %v595, %v602
      %v642 = vmul.f32 %v600, %v602
      %v643 = vadd.f32 %v603, 0.0
      %v644 = vadd.f32 %v604, 0.0
      %v645 = vadd.f32 %v605, 0.0
      %v646 = vadd.f32 %v606, 0.0
      %v647 = vadd.f32 %v607, 0.0
      %v648 = vadd.f32 %v608, 0.0
      %v649 = vadd.f32 %v609, 0.0
      %v650 = vadd.f32 %v610, 0.0
      %v651 = vadd.f32 %v611, 0.0
      %v652 = vadd.f32 %v612, 0.0
      %v653 = vadd.f32 %v613, 0.0
      %v654 = vadd.f32 %v614, 0.0
      %v655 = vadd.f32 %v615, 0.0
      %v656 = vadd.f32 %v616, 0.0
      %v657 = vadd.f32 %v617, 0.0
      %v658 = vadd.f32 %v618, 0.0
      %v659 = vadd.f32 %v619, 0.0
      %v660 = vadd.f32 %v620, 0.0
      %v661 = vadd.f32 %v621, 0.0
      %v662 = vadd.f32 %v622, 0.0
      %v663 = vadd.f32 %v623, 0.0
      %v664 = vadd.f32 %v624, 0.0
      %v665 = vadd.f32 %v625, 0.0
      %v666 = vadd.f32 %v626, 0.0
      %v667 = vadd.f32 %v627, 0.0
      %v668 = vadd.f32 %v628, 0.0
      %v669 = vadd.f32 %v629, 0.0
      %v670 = vadd.f32 %v630, 0.0
      %v671 = vadd.f32 %v631, 0.0
      %v672 = vadd.f32 %v632, 0.0
      %v673 = vadd.f32 %v633, 0.0
      %v674 = vadd.f32 %v634, 0.0
      %v675 = vadd.f32 %v635, 0.0
      %v676 = vadd.f32 %v636, 0.0
      %v677 = vadd.f32 %v637, 0.0
      %v678 = vadd.f32 %v638, 0.0
      %v679 = vadd.f32 %v639, 0.0
      %v680 = vadd.f32 %v640, 0.0
      %v681 = vadd.f32 %v641, 0.0
      %v682 = vadd.f32 %v642, 0.0
      %v683 = vld [vmem:[%s311] sm:$0xf]
      %v684 = vld [vmem:[%s311 + $0x4] sm:$0xf]
      %v685 = vld [vmem:[%s311 + $0x8] sm:$0xf]
      %v686 = vld [vmem:[%s311 + $0xc] sm:$0xf]
      %v687 = vld [vmem:[%s311 + $0x10] sm:$0xf]
      %v688 = vld [vmem:[%s311 + $0x14] sm:$0xf]
      %v689 = vld [vmem:[%s311 + $0x18] sm:$0xf]
      %v690 = vld [vmem:[%s311 + $0x1c] sm:$0xf]
      %v691 = vld [vmem:[%s311 + $0x20] sm:$0xf]
      %v692 = vld [vmem:[%s311 + $0x24] sm:$0xf]
      %v693 = vld [vmem:[%s311 + $0x28] sm:$0xf]
      %v694 = vld [vmem:[%s311 + $0x2c] sm:$0xf]
      %v695 = vld [vmem:[%s311 + $0x30] sm:$0xf]
      %v696 = vld [vmem:[%s311 + $0x34] sm:$0xf]
      %v697 = vld [vmem:[%s311 + $0x38] sm:$0xf]
      %v698 = vld [vmem:[%s311 + $0x3c] sm:$0xf]
      %v699 = vld [vmem:[%s311 + $0x40] sm:$0xf]
      %v700 = vld [vmem:[%s311 + $0x44] sm:$0xf]
      %v701 = vld [vmem:[%s311 + $0x48] sm:$0xf]
      %v702 = vld [vmem:[%s311 + $0x4c] sm:$0xf]
      %v703 = vld [vmem:[%s311 + $0x50] sm:$0xf]
      %v704 = vld [vmem:[%s311 + $0x54] sm:$0xf]
      %v705 = vld [vmem:[%s311 + $0x58] sm:$0xf]
      %v706 = vld [vmem:[%s311 + $0x5c] sm:$0xf]
      %v707 = vld [vmem:[%s311 + $0x60] sm:$0xf]
      %v708 = vld [vmem:[%s311 + $0x64] sm:$0xf]
      %v709 = vld [vmem:[%s311 + $0x68] sm:$0xf]
      %v710 = vld [vmem:[%s311 + $0x6c] sm:$0xf]
      %v711 = vld [vmem:[%s311 + $0x70] sm:$0xf]
      %v712 = vld [vmem:[%s311 + $0x74] sm:$0xf]
      %v713 = vld [vmem:[%s311 + $0x78] sm:$0xf]
      %v714 = vld [vmem:[%s311 + $0x7c] sm:$0xf]
      %v715 = vld [vmem:[%s311 + $0x80] sm:$0xf]
      %v716 = vld [vmem:[%s311 + $0x84] sm:$0xf]
      %v717 = vld [vmem:[%s311 + $0x88] sm:$0xf]
      %v718 = vld [vmem:[%s311 + $0x8c] sm:$0xf]
      %v719 = vld [vmem:[%s311 + $0x90] sm:$0xf]
      %v720 = vld [vmem:[%s311 + $0x94] sm:$0xf]
      %v721 = vld [vmem:[%s311 + $0x98] sm:$0xf]
      %v722 = vld [vmem:[%s311 + $0x9c] sm:$0xf]
      %v723 = vld [vmem:[%s311 + $0xa0] sm:$0x1]
      %s724 = scalar_lea.vmem %s1, 1
      %v725 = vld [vmem:[%s724] sm:$0x1]
      %v726 = vunpack.c.l.bf16 %v683
      %v727 = vunpack.c.l.bf16 %v684
      %v728 = vunpack.c.l.bf16 %v685
      %v729 = vunpack.c.l.bf16 %v686
      %v730 = vunpack.c.l.bf16 %v687
      %v731 = vunpack.c.l.bf16 %v688
      %v732 = vunpack.c.l.bf16 %v689
      %v733 = vunpack.c.l.bf16 %v690
      %v734 = vunpack.c.l.bf16 %v691
      %v735 = vunpack.c.l.bf16 %v692
      %v736 = vunpack.c.l.bf16 %v693
      %v737 = vunpack.c.l.bf16 %v694
      %v738 = vunpack.c.l.bf16 %v695
      %v739 = vunpack.c.l.bf16 %v696
      %v740 = vunpack.c.l.bf16 %v697
      %v741 = vunpack.c.l.bf16 %v698
      %v742 = vunpack.c.l.bf16 %v699
      %v743 = vunpack.c.l.bf16 %v700
      %v744 = vunpack.c.l.bf16 %v701
      %v745 = vunpack.c.l.bf16 %v702
      %v746 = vunpack.c.l.bf16 %v703
      %v747 = vunpack.c.l.bf16 %v704
      %v748 = vunpack.c.l.bf16 %v705
      %v749 = vunpack.c.l.bf16 %v706
      %v750 = vunpack.c.l.bf16 %v707
      %v751 = vunpack.c.l.bf16 %v708
      %v752 = vunpack.c.l.bf16 %v709
      %v753 = vunpack.c.l.bf16 %v710
      %v754 = vunpack.c.l.bf16 %v711
      %v755 = vunpack.c.l.bf16 %v712
      %v756 = vunpack.c.l.bf16 %v713
      %v757 = vunpack.c.l.bf16 %v714
      %v758 = vunpack.c.l.bf16 %v715
      %v759 = vunpack.c.l.bf16 %v716
      %v760 = vunpack.c.l.bf16 %v717
      %v761 = vunpack.c.l.bf16 %v718
      %v762 = vunpack.c.l.bf16 %v719
      %v763 = vunpack.c.l.bf16 %v720
      %v764 = vunpack.c.l.bf16 %v721
      %v765 = vunpack.c.l.bf16 %v722
      %v766 = vunpack.c.l.bf16 %v723
      %v767 = vunpack.c.l.bf16 %v725
      %769 = vset.pattern.permute.xlu0 0
      %770 = vperm.xlu0 %769, %v726
      %v771 = vpop.permute.xlu0 %770
      %774 = vset.pattern.permute.xlu0 0
      %775 = vperm.xlu0 %774, %v727
      %v776 = vpop.permute.xlu0 %775
      %779 = vset.pattern.permute.xlu0 0
      %780 = vperm.xlu0 %779, %v728
      %v781 = vpop.permute.xlu0 %780
      %784 = vset.pattern.permute.xlu0 0
      %785 = vperm.xlu0 %784, %v729
      %v786 = vpop.permute.xlu0 %785
      %789 = vset.pattern.permute.xlu0 0
      %790 = vperm.xlu0 %789, %v730
      %v791 = vpop.permute.xlu0 %790
      %794 = vset.pattern.permute.xlu0 0
      %795 = vperm.xlu0 %794, %v731
      %v796 = vpop.permute.xlu0 %795
      %799 = vset.pattern.permute.xlu0 0
      %800 = vperm.xlu0 %799, %v732
      %v801 = vpop.permute.xlu0 %800
      %804 = vset.pattern.permute.xlu0 0
      %805 = vperm.xlu0 %804, %v733
      %v806 = vpop.permute.xlu0 %805
      %809 = vset.pattern.permute.xlu0 0
      %810 = vperm.xlu0 %809, %v734
      %v811 = vpop.permute.xlu0 %810
      %814 = vset.pattern.permute.xlu0 0
      %815 = vperm.xlu0 %814, %v735
      %v816 = vpop.permute.xlu0 %815
      %819 = vset.pattern.permute.xlu0 0
      %820 = vperm.xlu0 %819, %v736
      %v821 = vpop.permute.xlu0 %820
      %824 = vset.pattern.permute.xlu0 0
      %825 = vperm.xlu0 %824, %v737
      %v826 = vpop.permute.xlu0 %825
      %829 = vset.pattern.permute.xlu0 0
      %830 = vperm.xlu0 %829, %v738
      %v831 = vpop.permute.xlu0 %830
      %834 = vset.pattern.permute.xlu0 0
      %835 = vperm.xlu0 %834, %v739
      %v836 = vpop.permute.xlu0 %835
      %839 = vset.pattern.permute.xlu0 0
      %840 = vperm.xlu0 %839, %v740
      %v841 = vpop.permute.xlu0 %840
      %844 = vset.pattern.permute.xlu0 0
      %845 = vperm.xlu0 %844, %v741
      %v846 = vpop.permute.xlu0 %845
      %849 = vset.pattern.permute.xlu0 0
      %850 = vperm.xlu0 %849, %v742
      %v851 = vpop.permute.xlu0 %850
      %854 = vset.pattern.permute.xlu0 0
      %855 = vperm.xlu0 %854, %v743
      %v856 = vpop.permute.xlu0 %855
      %859 = vset.pattern.permute.xlu0 0
      %860 = vperm.xlu0 %859, %v744
      %v861 = vpop.permute.xlu0 %860
      %864 = vset.pattern.permute.xlu0 0
      %865 = vperm.xlu0 %864, %v745
      %v866 = vpop.permute.xlu0 %865
      %869 = vset.pattern.permute.xlu0 0
      %870 = vperm.xlu0 %869, %v746
      %v871 = vpop.permute.xlu0 %870
      %874 = vset.pattern.permute.xlu0 0
      %875 = vperm.xlu0 %874, %v747
      %v876 = vpop.permute.xlu0 %875
      %879 = vset.pattern.permute.xlu0 0
      %880 = vperm.xlu0 %879, %v748
      %v881 = vpop.permute.xlu0 %880
      %884 = vset.pattern.permute.xlu0 0
      %885 = vperm.xlu0 %884, %v749
      %v886 = vpop.permute.xlu0 %885
      %889 = vset.pattern.permute.xlu0 0
      %890 = vperm.xlu0 %889, %v750
      %v891 = vpop.permute.xlu0 %890
      %894 = vset.pattern.permute.xlu0 0
      %895 = vperm.xlu0 %894, %v751
      %v896 = vpop.permute.xlu0 %895
      %899 = vset.pattern.permute.xlu0 0
      %900 = vperm.xlu0 %899, %v752
      %v901 = vpop.permute.xlu0 %900
      %904 = vset.pattern.permute.xlu0 0
      %905 = vperm.xlu0 %904, %v753
      %v906 = vpop.permute.xlu0 %905
      %909 = vset.pattern.permute.xlu0 0
      %910 = vperm.xlu0 %909, %v754
      %v911 = vpop.permute.xlu0 %910
      %914 = vset.pattern.permute.xlu0 0
      %915 = vperm.xlu0 %914, %v755
      %v916 = vpop.permute.xlu0 %915
      %919 = vset.pattern.permute.xlu0 0
      %920 = vperm.xlu0 %919, %v756
      %v921 = vpop.permute.xlu0 %920
      %924 = vset.pattern.permute.xlu0 0
      %925 = vperm.xlu0 %924, %v757
      %v926 = vpop.permute.xlu0 %925
      %929 = vset.pattern.permute.xlu0 0
      %930 = vperm.xlu0 %929, %v758
      %v931 = vpop.permute.xlu0 %930
      %934 = vset.pattern.permute.xlu0 0
      %935 = vperm.xlu0 %934, %v759
      %v936 = vpop.permute.xlu0 %935
      %939 = vset.pattern.permute.xlu0 0
      %940 = vperm.xlu0 %939, %v760
      %v941 = vpop.permute.xlu0 %940
      %944 = vset.pattern.permute.xlu0 0
      %945 = vperm.xlu0 %944, %v761
      %v946 = vpop.permute.xlu0 %945
      %949 = vset.pattern.permute.xlu0 0
      %950 = vperm.xlu0 %949, %v762
      %v951 = vpop.permute.xlu0 %950
      %954 = vset.pattern.permute.xlu0 0
      %955 = vperm.xlu0 %954, %v763
      %v956 = vpop.permute.xlu0 %955
      %959 = vset.pattern.permute.xlu0 0
      %960 = vperm.xlu0 %959, %v764
      %v961 = vpop.permute.xlu0 %960
      %964 = vset.pattern.permute.xlu0 0
      %965 = vperm.xlu0 %964, %v765
      %v966 = vpop.permute.xlu0 %965
      %969 = vset.pattern.permute.xlu0 0
      %970 = vperm.xlu0 %969, %v766
      %v971 = vpop.permute.xlu0 %970
      %v973 = vperm.slane %v767, 0
      %v974 = vmul.f32 %v771, %v973
      %v975 = vmul.f32 %v776, %v973
      %v976 = vmul.f32 %v781, %v973
      %v977 = vmul.f32 %v786, %v973
      %v978 = vmul.f32 %v791, %v973
      %v979 = vmul.f32 %v796, %v973
      %v980 = vmul.f32 %v801, %v973
      %v981 = vmul.f32 %v806, %v973
      %v982 = vmul.f32 %v811, %v973
      %v983 = vmul.f32 %v816, %v973
      %v984 = vmul.f32 %v821, %v973
      %v985 = vmul.f32 %v826, %v973
      %v986 = vmul.f32 %v831, %v973
      %v987 = vmul.f32 %v836, %v973
      %v988 = vmul.f32 %v841, %v973
      %v989 = vmul.f32 %v846, %v973
      %v990 = vmul.f32 %v851, %v973
      %v991 = vmul.f32 %v856, %v973
      %v992 = vmul.f32 %v861, %v973
      %v993 = vmul.f32 %v866, %v973
      %v994 = vmul.f32 %v871, %v973
      %v995 = vmul.f32 %v876, %v973
      %v996 = vmul.f32 %v881, %v973
      %v997 = vmul.f32 %v886, %v973
      %v998 = vmul.f32 %v891, %v973
      %v999 = vmul.f32 %v896, %v973
      %v1000 = vmul.f32 %v901, %v973
      %v1001 = vmul.f32 %v906, %v973
      %v1002 = vmul.f32 %v911, %v973
      %v1003 = vmul.f32 %v916, %v973
      %v1004 = vmul.f32 %v921, %v973
      %v1005 = vmul.f32 %v926, %v973
      %v1006 = vmul.f32 %v931, %v973
      %v1007 = vmul.f32 %v936, %v973
      %v1008 = vmul.f32 %v941, %v973
      %v1009 = vmul.f32 %v946, %v973
      %v1010 = vmul.f32 %v951, %v973
      %v1011 = vmul.f32 %v956, %v973
      %v1012 = vmul.f32 %v961, %v973
      %v1013 = vmul.f32 %v966, %v973
      %v1014 = vmul.f32 %v971, %v973
      %vm1056 = vcmask 1046528
      %v1057 = vrot.slane %v974, 1
      %v1058 = vrot.slane %v975, 1
      %v1059 = vsel %vm1056, %v1057, %v1058
      %v1060 = vrot.slane %v976, 1
      %v1061 = vsel %vm1056, %v1058, %v1060
      %v1062 = vrot.slane %v977, 1
      %v1063 = vsel %vm1056, %v1060, %v1062
      %v1064 = vrot.slane %v978, 1
      %v1065 = vsel %vm1056, %v1062, %v1064
      %v1066 = vrot.slane %v979, 1
      %v1067 = vsel %vm1056, %v1064, %v1066
      %v1068 = vrot.slane %v980, 1
      %v1069 = vsel %vm1056, %v1066, %v1068
      %v1070 = vrot.slane %v981, 1
      %v1071 = vsel %vm1056, %v1068, %v1070
      %v1072 = vrot.slane %v982, 1
      %v1073 = vsel %vm1056, %v1070, %v1072
      %v1074 = vrot.slane %v983, 1
      %v1075 = vsel %vm1056, %v1072, %v1074
      %v1076 = vrot.slane %v984, 1
      %v1077 = vsel %vm1056, %v1074, %v1076
      %v1078 = vrot.slane %v985, 1
      %v1079 = vsel %vm1056, %v1076, %v1078
      %v1080 = vrot.slane %v986, 1
      %v1081 = vsel %vm1056, %v1078, %v1080
      %v1082 = vrot.slane %v987, 1
      %v1083 = vsel %vm1056, %v1080, %v1082
      %v1084 = vrot.slane %v988, 1
      %v1085 = vsel %vm1056, %v1082, %v1084
      %v1086 = vrot.slane %v989, 1
      %v1087 = vsel %vm1056, %v1084, %v1086
      %v1088 = vrot.slane %v990, 1
      %v1089 = vsel %vm1056, %v1086, %v1088
      %v1090 = vrot.slane %v991, 1
      %v1091 = vsel %vm1056, %v1088, %v1090
      %v1092 = vrot.slane %v992, 1
      %v1093 = vsel %vm1056, %v1090, %v1092
      %v1094 = vrot.slane %v993, 1
      %v1095 = vsel %vm1056, %v1092, %v1094
      %v1096 = vrot.slane %v994, 1
      %v1097 = vsel %vm1056, %v1094, %v1096
      %v1098 = vrot.slane %v995, 1
      %v1099 = vsel %vm1056, %v1096, %v1098
      %v1100 = vrot.slane %v996, 1
      %v1101 = vsel %vm1056, %v1098, %v1100
      %v1102 = vrot.slane %v997, 1
      %v1103 = vsel %vm1056, %v1100, %v1102
      %v1104 = vrot.slane %v998, 1
      %v1105 = vsel %vm1056, %v1102, %v1104
      %v1106 = vrot.slane %v999, 1
      %v1107 = vsel %vm1056, %v1104, %v1106
      %v1108 = vrot.slane %v1000, 1
      %v1109 = vsel %vm1056, %v1106, %v1108
      %v1110 = vrot.slane %v1001, 1
      %v1111 = vsel %vm1056, %v1108, %v1110
      %v1112 = vrot.slane %v1002, 1
      %v1113 = vsel %vm1056, %v1110, %v1112
      %v1114 = vrot.slane %v1003, 1
      %v1115 = vsel %vm1056, %v1112, %v1114
      %v1116 = vrot.slane %v1004, 1
      %v1117 = vsel %vm1056, %v1114, %v1116
      %v1118 = vrot.slane %v1005, 1
      %v1119 = vsel %vm1056, %v1116, %v1118
      %v1120 = vrot.slane %v1006, 1
      %v1121 = vsel %vm1056, %v1118, %v1120
      %v1122 = vrot.slane %v1007, 1
      %v1123 = vsel %vm1056, %v1120, %v1122
      %v1124 = vrot.slane %v1008, 1
      %v1125 = vsel %vm1056, %v1122, %v1124
      %v1126 = vrot.slane %v1009, 1
      %v1127 = vsel %vm1056, %v1124, %v1126
      %v1128 = vrot.slane %v1010, 1
      %v1129 = vsel %vm1056, %v1126, %v1128
      %v1130 = vrot.slane %v1011, 1
      %v1131 = vsel %vm1056, %v1128, %v1130
      %v1132 = vrot.slane %v1012, 1
      %v1133 = vsel %vm1056, %v1130, %v1132
      %v1134 = vrot.slane %v1013, 1
      %v1135 = vsel %vm1056, %v1132, %v1134
      %v1136 = vrot.slane %v1014, 1
      %v1137 = vsel %vm1056, %v1134, %v1136
      %v1178 = vadd.f32 %v643, %v1059
      %v1179 = vadd.f32 %v644, %v1061
      %v1180 = vadd.f32 %v645, %v1063
      %v1181 = vadd.f32 %v646, %v1065
      %v1182 = vadd.f32 %v647, %v1067
      %v1183 = vadd.f32 %v648, %v1069
      %v1184 = vadd.f32 %v649, %v1071
      %v1185 = vadd.f32 %v650, %v1073
      %v1186 = vadd.f32 %v651, %v1075
      %v1187 = vadd.f32 %v652, %v1077
      %v1188 = vadd.f32 %v653, %v1079
      %v1189 = vadd.f32 %v654, %v1081
      %v1190 = vadd.f32 %v655, %v1083
      %v1191 = vadd.f32 %v656, %v1085
      %v1192 = vadd.f32 %v657, %v1087
      %v1193 = vadd.f32 %v658, %v1089
      %v1194 = vadd.f32 %v659, %v1091
      %v1195 = vadd.f32 %v660, %v1093
      %v1196 = vadd.f32 %v661, %v1095
      %v1197 = vadd.f32 %v662, %v1097
      %v1198 = vadd.f32 %v663, %v1099
      %v1199 = vadd.f32 %v664, %v1101
      %v1200 = vadd.f32 %v665, %v1103
      %v1201 = vadd.f32 %v666, %v1105
      %v1202 = vadd.f32 %v667, %v1107
      %v1203 = vadd.f32 %v668, %v1109
      %v1204 = vadd.f32 %v669, %v1111
      %v1205 = vadd.f32 %v670, %v1113
      %v1206 = vadd.f32 %v671, %v1115
      %v1207 = vadd.f32 %v672, %v1117
      %v1208 = vadd.f32 %v673, %v1119
      %v1209 = vadd.f32 %v674, %v1121
      %v1210 = vadd.f32 %v675, %v1123
      %v1211 = vadd.f32 %v676, %v1125
      %v1212 = vadd.f32 %v677, %v1127
      %v1213 = vadd.f32 %v678, %v1129
      %v1214 = vadd.f32 %v679, %v1131
      %v1215 = vadd.f32 %v680, %v1133
      %v1216 = vadd.f32 %v681, %v1135
      %v1217 = vadd.f32 %v682, %v1137
      %v1218 = vld [vmem:[%s311] sm:$0xe]
      %s1219 = scalar_lea.vmem %s1, 2
      %v1220 = vld [vmem:[%s1219] sm:$0x1]
      %v1221 = vunpack.c.l.bf16 %v1218
      %v1222 = vunpack.c.l.bf16 %v1220
      %1224 = vset.pattern.permute.xlu0 0
      %1225 = vperm.xlu0 %1224, %v1221
      %v1226 = vpop.permute.xlu0 %1225
      %v1228 = vperm.slane %v1222, 0
      %v1229 = vmul.f32 %v1226, %v1228
      %v1230 = vmul.f32 %v776, %v1228
      %v1231 = vmul.f32 %v781, %v1228
      %v1232 = vmul.f32 %v786, %v1228
      %v1233 = vmul.f32 %v791, %v1228
      %v1234 = vmul.f32 %v796, %v1228
      %v1235 = vmul.f32 %v801, %v1228
      %v1236 = vmul.f32 %v806, %v1228
      %v1237 = vmul.f32 %v811, %v1228
      %v1238 = vmul.f32 %v816, %v1228
      %v1239 = vmul.f32 %v821, %v1228
      %v1240 = vmul.f32 %v826, %v1228
      %v1241 = vmul.f32 %v831, %v1228
      %v1242 = vmul.f32 %v836, %v1228
      %v1243 = vmul.f32 %v841, %v1228
      %v1244 = vmul.f32 %v846, %v1228
      %v1245 = vmul.f32 %v851, %v1228
      %v1246 = vmul.f32 %v856, %v1228
      %v1247 = vmul.f32 %v861, %v1228
      %v1248 = vmul.f32 %v866, %v1228
      %v1249 = vmul.f32 %v871, %v1228
      %v1250 = vmul.f32 %v876, %v1228
      %v1251 = vmul.f32 %v881, %v1228
      %v1252 = vmul.f32 %v886, %v1228
      %v1253 = vmul.f32 %v891, %v1228
      %v1254 = vmul.f32 %v896, %v1228
      %v1255 = vmul.f32 %v901, %v1228
      %v1256 = vmul.f32 %v906, %v1228
      %v1257 = vmul.f32 %v911, %v1228
      %v1258 = vmul.f32 %v916, %v1228
      %v1259 = vmul.f32 %v921, %v1228
      %v1260 = vmul.f32 %v926, %v1228
      %v1261 = vmul.f32 %v931, %v1228
      %v1262 = vmul.f32 %v936, %v1228
      %v1263 = vmul.f32 %v941, %v1228
      %v1264 = vmul.f32 %v946, %v1228
      %v1265 = vmul.f32 %v951, %v1228
      %v1266 = vmul.f32 %v956, %v1228
      %v1267 = vmul.f32 %v961, %v1228
      %v1268 = vmul.f32 %v966, %v1228
      %v1269 = vmul.f32 %v971, %v1228
      %vm1311 = vcmask 1045504
      %v1312 = vrot.slane %v1229, 2
      %v1313 = vrot.slane %v1230, 2
      %v1314 = vsel %vm1311, %v1312, %v1313
      %v1315 = vrot.slane %v1231, 2
      %v1316 = vsel %vm1311, %v1313, %v1315
      %v1317 = vrot.slane %v1232, 2
      %v1318 = vsel %vm1311, %v1315, %v1317
      %v1319 = vrot.slane %v1233, 2
      %v1320 = vsel %vm1311, %v1317, %v1319
      %v1321 = vrot.slane %v1234, 2
      %v1322 = vsel %vm1311, %v1319, %v1321
      %v1323 = vrot.slane %v1235, 2
      %v1324 = vsel %vm1311, %v1321, %v1323
      %v1325 = vrot.slane %v1236, 2
      %v1326 = vsel %vm1311, %v1323, %v1325
      %v1327 = vrot.slane %v1237, 2
      %v1328 = vsel %vm1311, %v1325, %v1327
      %v1329 = vrot.slane %v1238, 2
      %v1330 = vsel %vm1311, %v1327, %v1329
      %v1331 = vrot.slane %v1239, 2
      %v1332 = vsel %vm1311, %v1329, %v1331
      %v1333 = vrot.slane %v1240, 2
      %v1334 = vsel %vm1311, %v1331, %v1333
      %v1335 = vrot.slane %v1241, 2
      %v1336 = vsel %vm1311, %v1333, %v1335
      %v1337 = vrot.slane %v1242, 2
      %v1338 = vsel %vm1311, %v1335, %v1337
      %v1339 = vrot.slane %v1243, 2
      %v1340 = vsel %vm1311, %v1337, %v1339
      %v1341 = vrot.slane %v1244, 2
      %v1342 = vsel %vm1311, %v1339, %v1341
      %v1343 = vrot.slane %v1245, 2
      %v1344 = vsel %vm1311, %v1341, %v1343
      %v1345 = vrot.slane %v1246, 2
      %v1346 = vsel %vm1311, %v1343, %v1345
      %v1347 = vrot.slane %v1247, 2
      %v1348 = vsel %vm1311, %v1345, %v1347
      %v1349 = vrot.slane %v1248, 2
      %v1350 = vsel %vm1311, %v1347, %v1349
      %v1351 = vrot.slane %v1249, 2
      %v1352 = vsel %vm1311, %v1349, %v1351
      %v1353 = vrot.slane %v1250, 2
      %v1354 = vsel %vm1311, %v1351, %v1353
      %v1355 = vrot.slane %v1251, 2
      %v1356 = vsel %vm1311, %v1353, %v1355
      %v1357 = vrot.slane %v1252, 2
      %v1358 = vsel %vm1311, %v1355, %v1357
      %v1359 = vrot.slane %v1253, 2
      %v1360 = vsel %vm1311, %v1357, %v1359
      %v1361 = vrot.slane %v1254, 2
      %v1362 = vsel %vm1311, %v1359, %v1361
      %v1363 = vrot.slane %v1255, 2
      %v1364 = vsel %vm1311, %v1361, %v1363
      %v1365 = vrot.slane %v1256, 2
      %v1366 = vsel %vm1311, %v1363, %v1365
      %v1367 = vrot.slane %v1257, 2
      %v1368 = vsel %vm1311, %v1365, %v1367
      %v1369 = vrot.slane %v1258, 2
      %v1370 = vsel %vm1311, %v1367, %v1369
      %v1371 = vrot.slane %v1259, 2
      %v1372 = vsel %vm1311, %v1369, %v1371
      %v1373 = vrot.slane %v1260, 2
      %v1374 = vsel %vm1311, %v1371, %v1373
      %v1375 = vrot.slane %v1261, 2
      %v1376 = vsel %vm1311, %v1373, %v1375
      %v1377 = vrot.slane %v1262, 2
      %v1378 = vsel %vm1311, %v1375, %v1377
      %v1379 = vrot.slane %v1263, 2
      %v1380 = vsel %vm1311, %v1377, %v1379
      %v1381 = vrot.slane %v1264, 2
      %v1382 = vsel %vm1311, %v1379, %v1381
      %v1383 = vrot.slane %v1265, 2
      %v1384 = vsel %vm1311, %v1381, %v1383
      %v1385 = vrot.slane %v1266, 2
      %v1386 = vsel %vm1311, %v1383, %v1385
      %v1387 = vrot.slane %v1267, 2
      %v1388 = vsel %vm1311, %v1385, %v1387
      %v1389 = vrot.slane %v1268, 2
      %v1390 = vsel %vm1311, %v1387, %v1389
      %v1391 = vrot.slane %v1269, 2
      %v1392 = vsel %vm1311, %v1389, %v1391
      %v1433 = vadd.f32 %v1178, %v1314
      %v1434 = vadd.f32 %v1179, %v1316
      %v1435 = vadd.f32 %v1180, %v1318
      %v1436 = vadd.f32 %v1181, %v1320
      %v1437 = vadd.f32 %v1182, %v1322
      %v1438 = vadd.f32 %v1183, %v1324
      %v1439 = vadd.f32 %v1184, %v1326
      %v1440 = vadd.f32 %v1185, %v1328
      %v1441 = vadd.f32 %v1186, %v1330
      %v1442 = vadd.f32 %v1187, %v1332
      %v1443 = vadd.f32 %v1188, %v1334
      %v1444 = vadd.f32 %v1189, %v1336
      %v1445 = vadd.f32 %v1190, %v1338
      %v1446 = vadd.f32 %v1191, %v1340
      %v1447 = vadd.f32 %v1192, %v1342
      %v1448 = vadd.f32 %v1193, %v1344
      %v1449 = vadd.f32 %v1194, %v1346
      %v1450 = vadd.f32 %v1195, %v1348
      %v1451 = vadd.f32 %v1196, %v1350
      %v1452 = vadd.f32 %v1197, %v1352
      %v1453 = vadd.f32 %v1198, %v1354
      %v1454 = vadd.f32 %v1199, %v1356
      %v1455 = vadd.f32 %v1200, %v1358
      %v1456 = vadd.f32 %v1201, %v1360
      %v1457 = vadd.f32 %v1202, %v1362
      %v1458 = vadd.f32 %v1203, %v1364
      %v1459 = vadd.f32 %v1204, %v1366
      %v1460 = vadd.f32 %v1205, %v1368
      %v1461 = vadd.f32 %v1206, %v1370
      %v1462 = vadd.f32 %v1207, %v1372
      %v1463 = vadd.f32 %v1208, %v1374
      %v1464 = vadd.f32 %v1209, %v1376
      %v1465 = vadd.f32 %v1210, %v1378
      %v1466 = vadd.f32 %v1211, %v1380
      %v1467 = vadd.f32 %v1212, %v1382
      %v1468 = vadd.f32 %v1213, %v1384
      %v1469 = vadd.f32 %v1214, %v1386
      %v1470 = vadd.f32 %v1215, %v1388
      %v1471 = vadd.f32 %v1216, %v1390
      %v1472 = vadd.f32 %v1217, %v1392
      %v1473 = vld [vmem:[%s311 + $0xa0] sm:$0x3]
      %s1474 = scalar_lea.vmem %s1, 3
      %v1475 = vld [vmem:[%s1474] sm:$0x1]
      %v1476 = vunpack.c.l.bf16 %v1473
      %v1477 = vunpack.c.l.bf16 %v1475
      %1479 = vset.pattern.permute.xlu0 0
      %1480 = vperm.xlu0 %1479, %v1476
      %v1481 = vpop.permute.xlu0 %1480
      %v1483 = vperm.slane %v1477, 0
      %v1484 = vmul.f32 %v1226, %v1483
      %v1485 = vmul.f32 %v776, %v1483
      %v1486 = vmul.f32 %v781, %v1483
      %v1487 = vmul.f32 %v786, %v1483
      %v1488 = vmul.f32 %v791, %v1483
      %v1489 = vmul.f32 %v796, %v1483
      %v1490 = vmul.f32 %v801, %v1483
      %v1491 = vmul.f32 %v806, %v1483
      %v1492 = vmul.f32 %v811, %v1483
      %v1493 = vmul.f32 %v816, %v1483
      %v1494 = vmul.f32 %v821, %v1483
      %v1495 = vmul.f32 %v826, %v1483
      %v1496 = vmul.f32 %v831, %v1483
      %v1497 = vmul.f32 %v836, %v1483
      %v1498 = vmul.f32 %v841, %v1483
      %v1499 = vmul.f32 %v846, %v1483
      %v1500 = vmul.f32 %v851, %v1483
      %v1501 = vmul.f32 %v856, %v1483
      %v1502 = vmul.f32 %v861, %v1483
      %v1503 = vmul.f32 %v866, %v1483
      %v1504 = vmul.f32 %v871, %v1483
      %v1505 = vmul.f32 %v876, %v1483
      %v1506 = vmul.f32 %v881, %v1483
      %v1507 = vmul.f32 %v886, %v1483
      %v1508 = vmul.f32 %v891, %v1483
      %v1509 = vmul.f32 %v896, %v1483
      %v1510 = vmul.f32 %v901, %v1483
      %v1511 = vmul.f32 %v906, %v1483
      %v1512 = vmul.f32 %v911, %v1483
      %v1513 = vmul.f32 %v916, %v1483
      %v1514 = vmul.f32 %v921, %v1483
      %v1515 = vmul.f32 %v926, %v1483
      %v1516 = vmul.f32 %v931, %v1483
      %v1517 = vmul.f32 %v936, %v1483
      %v1518 = vmul.f32 %v941, %v1483
      %v1519 = vmul.f32 %v946, %v1483
      %v1520 = vmul.f32 %v951, %v1483
      %v1521 = vmul.f32 %v956, %v1483
      %v1522 = vmul.f32 %v961, %v1483
      %v1523 = vmul.f32 %v966, %v1483
      %v1524 = vmul.f32 %v1481, %v1483
      %vm1566 = vcmask 1044480
      %v1567 = vrot.slane %v1484, 3
      %v1568 = vrot.slane %v1485, 3
      %v1569 = vsel %vm1566, %v1567, %v1568
      %v1570 = vrot.slane %v1486, 3
      %v1571 = vsel %vm1566, %v1568, %v1570
      %v1572 = vrot.slane %v1487, 3
      %v1573 = vsel %vm1566, %v1570, %v1572
      %v1574 = vrot.slane %v1488, 3
      %v1575 = vsel %vm1566, %v1572, %v1574
      %v1576 = vrot.slane %v1489, 3
      %v1577 = vsel %vm1566, %v1574, %v1576
      %v1578 = vrot.slane %v1490, 3
      %v1579 = vsel %vm1566, %v1576, %v1578
      %v1580 = vrot.slane %v1491, 3
      %v1581 = vsel %vm1566, %v1578, %v1580
      %v1582 = vrot.slane %v1492, 3
      %v1583 = vsel %vm1566, %v1580, %v1582
      %v1584 = vrot.slane %v1493, 3
      %v1585 = vsel %vm1566, %v1582, %v1584
      %v1586 = vrot.slane %v1494, 3
      %v1587 = vsel %vm1566, %v1584, %v1586
      %v1588 = vrot.slane %v1495, 3
      %v1589 = vsel %vm1566, %v1586, %v1588
      %v1590 = vrot.slane %v1496, 3
      %v1591 = vsel %vm1566, %v1588, %v1590
      %v1592 = vrot.slane %v1497, 3
      %v1593 = vsel %vm1566, %v1590, %v1592
      %v1594 = vrot.slane %v1498, 3
      %v1595 = vsel %vm1566, %v1592, %v1594
      %v1596 = vrot.slane %v1499, 3
      %v1597 = vsel %vm1566, %v1594, %v1596
      %v1598 = vrot.slane %v1500, 3
      %v1599 = vsel %vm1566, %v1596, %v1598
      %v1600 = vrot.slane %v1501, 3
      %v1601 = vsel %vm1566, %v1598, %v1600
      %v1602 = vrot.slane %v1502, 3
      %v1603 = vsel %vm1566, %v1600, %v1602
      %v1604 = vrot.slane %v1503, 3
      %v1605 = vsel %vm1566, %v1602, %v1604
      %v1606 = vrot.slane %v1504, 3
      %v1607 = vsel %vm1566, %v1604, %v1606
      %v1608 = vrot.slane %v1505, 3
      %v1609 = vsel %vm1566, %v1606, %v1608
      %v1610 = vrot.slane %v1506, 3
      %v1611 = vsel %vm1566, %v1608, %v1610
      %v1612 = vrot.slane %v1507, 3
      %v1613 = vsel %vm1566, %v1610, %v1612
      %v1614 = vrot.slane %v1508, 3
      %v1615 = vsel %vm1566, %v1612, %v1614
      %v1616 = vrot.slane %v1509, 3
      %v1617 = vsel %vm1566, %v1614, %v1616
      %v1618 = vrot.slane %v1510, 3
      %v1619 = vsel %vm1566, %v1616, %v1618
      %v1620 = vrot.slane %v1511, 3
      %v1621 = vsel %vm1566, %v1618, %v1620
      %v1622 = vrot.slane %v1512, 3
      %v1623 = vsel %vm1566, %v1620, %v1622
      %v1624 = vrot.slane %v1513, 3
      %v1625 = vsel %vm1566, %v1622, %v1624
      %v1626 = vrot.slane %v1514, 3
      %v1627 = vsel %vm1566, %v1624, %v1626
      %v1628 = vrot.slane %v1515, 3
      %v1629 = vsel %vm1566, %v1626, %v1628
      %v1630 = vrot.slane %v1516, 3
      %v1631 = vsel %vm1566, %v1628, %v1630
      %v1632 = vrot.slane %v1517, 3
      %v1633 = vsel %vm1566, %v1630, %v1632
      %v1634 = vrot.slane %v1518, 3
      %v1635 = vsel %vm1566, %v1632, %v1634
      %v1636 = vrot.slane %v1519, 3
      %v1637 = vsel %vm1566, %v1634, %v1636
      %v1638 = vrot.slane %v1520, 3
      %v1639 = vsel %vm1566, %v1636, %v1638
      %v1640 = vrot.slane %v1521, 3
      %v1641 = vsel %vm1566, %v1638, %v1640
      %v1642 = vrot.slane %v1522, 3
      %v1643 = vsel %vm1566, %v1640, %v1642
      %v1644 = vrot.slane %v1523, 3
      %v1645 = vsel %vm1566, %v1642, %v1644
      %v1646 = vrot.slane %v1524, 3
      %v1647 = vsel %vm1566, %v1644, %v1646
      %v1688 = vadd.f32 %v1433, %v1569
      %v1689 = vadd.f32 %v1434, %v1571
      %v1690 = vadd.f32 %v1435, %v1573
      %v1691 = vadd.f32 %v1436, %v1575
      %v1692 = vadd.f32 %v1437, %v1577
      %v1693 = vadd.f32 %v1438, %v1579
      %v1694 = vadd.f32 %v1439, %v1581
      %v1695 = vadd.f32 %v1440, %v1583
      %v1696 = vadd.f32 %v1441, %v1585
      %v1697 = vadd.f32 %v1442, %v1587
      %v1698 = vadd.f32 %v1443, %v1589
      %v1699 = vadd.f32 %v1444, %v1591
      %v1700 = vadd.f32 %v1445, %v1593
      %v1701 = vadd.f32 %v1446, %v1595
      %v1702 = vadd.f32 %v1447, %v1597
      %v1703 = vadd.f32 %v1448, %v1599
      %v1704 = vadd.f32 %v1449, %v1601
      %v1705 = vadd.f32 %v1450, %v1603
      %v1706 = vadd.f32 %v1451, %v1605
      %v1707 = vadd.f32 %v1452, %v1607
      %v1708 = vadd.f32 %v1453, %v1609
      %v1709 = vadd.f32 %v1454, %v1611
      %v1710 = vadd.f32 %v1455, %v1613
      %v1711 = vadd.f32 %v1456, %v1615
      %v1712 = vadd.f32 %v1457, %v1617
      %v1713 = vadd.f32 %v1458, %v1619
      %v1714 = vadd.f32 %v1459, %v1621
      %v1715 = vadd.f32 %v1460, %v1623
      %v1716 = vadd.f32 %v1461, %v1625
      %v1717 = vadd.f32 %v1462, %v1627
      %v1718 = vadd.f32 %v1463, %v1629
      %v1719 = vadd.f32 %v1464, %v1631
      %v1720 = vadd.f32 %v1465, %v1633
      %v1721 = vadd.f32 %v1466, %v1635
      %v1722 = vadd.f32 %v1467, %v1637
      %v1723 = vadd.f32 %v1468, %v1639
      %v1724 = vadd.f32 %v1469, %v1641
      %v1725 = vadd.f32 %v1470, %v1643
      %v1726 = vadd.f32 %v1471, %v1645
      %v1727 = vadd.f32 %v1472, %v1647
      %v1728 = vld [vmem:[%s311] sm:$0xc]
      %s1729 = scalar_lea.vmem %s1, 4
      %v1730 = vld [vmem:[%s1729] sm:$0x1]
      %v1731 = vunpack.c.l.bf16 %v1728
      %v1732 = vunpack.c.l.bf16 %v1730
      %1734 = vset.pattern.permute.xlu0 0
      %1735 = vperm.xlu0 %1734, %v1731
      %v1736 = vpop.permute.xlu0 %1735
      %v1738 = vperm.slane %v1732, 0
      %v1739 = vmul.f32 %v1736, %v1738
      %v1740 = vmul.f32 %v776, %v1738
      %v1741 = vmul.f32 %v781, %v1738
      %v1742 = vmul.f32 %v786, %v1738
      %v1743 = vmul.f32 %v791, %v1738
      %v1744 = vmul.f32 %v796, %v1738
      %v1745 = vmul.f32 %v801, %v1738
      %v1746 = vmul.f32 %v806, %v1738
      %v1747 = vmul.f32 %v811, %v1738
      %v1748 = vmul.f32 %v816, %v1738
      %v1749 = vmul.f32 %v821, %v1738
      %v1750 = vmul.f32 %v826, %v1738
      %v1751 = vmul.f32 %v831, %v1738
      %v1752 = vmul.f32 %v836, %v1738
      %v1753 = vmul.f32 %v841, %v1738
      %v1754 = vmul.f32 %v846, %v1738
      %v1755 = vmul.f32 %v851, %v1738
      %v1756 = vmul.f32 %v856, %v1738
      %v1757 = vmul.f32 %v861, %v1738
      %v1758 = vmul.f32 %v866, %v1738
      %v1759 = vmul.f32 %v871, %v1738
      %v1760 = vmul.f32 %v876, %v1738
      %v1761 = vmul.f32 %v881, %v1738
      %v1762 = vmul.f32 %v886, %v1738
      %v1763 = vmul.f32 %v891, %v1738
      %v1764 = vmul.f32 %v896, %v1738
      %v1765 = vmul.f32 %v901, %v1738
      %v1766 = vmul.f32 %v906, %v1738
      %v1767 = vmul.f32 %v911, %v1738
      %v1768 = vmul.f32 %v916, %v1738
      %v1769 = vmul.f32 %v921, %v1738
      %v1770 = vmul.f32 %v926, %v1738
      %v1771 = vmul.f32 %v931, %v1738
      %v1772 = vmul.f32 %v936, %v1738
      %v1773 = vmul.f32 %v941, %v1738
      %v1774 = vmul.f32 %v946, %v1738
      %v1775 = vmul.f32 %v951, %v1738
      %v1776 = vmul.f32 %v956, %v1738
      %v1777 = vmul.f32 %v961, %v1738
      %v1778 = vmul.f32 %v966, %v1738
      %v1779 = vmul.f32 %v1481, %v1738
      %vm1821 = vcmask 1043456
      %v1822 = vrot.slane %v1739, 4
      %v1823 = vrot.slane %v1740, 4
      %v1824 = vsel %vm1821, %v1822, %v1823
      %v1825 = vrot.slane %v1741, 4
      %v1826 = vsel %vm1821, %v1823, %v1825
      %v1827 = vrot.slane %v1742, 4
      %v1828 = vsel %vm1821, %v1825, %v1827
      %v1829 = vrot.slane %v1743, 4
      %v1830 = vsel %vm1821, %v1827, %v1829
      %v1831 = vrot.slane %v1744, 4
      %v1832 = vsel %vm1821, %v1829, %v1831
      %v1833 = vrot.slane %v1745, 4
      %v1834 = vsel %vm1821, %v1831, %v1833
      %v1835 = vrot.slane %v1746, 4
      %v1836 = vsel %vm1821, %v1833, %v1835
      %v1837 = vrot.slane %v1747, 4
      %v1838 = vsel %vm1821, %v1835, %v1837
      %v1839 = vrot.slane %v1748, 4
      %v1840 = vsel %vm1821, %v1837, %v1839
      %v1841 = vrot.slane %v1749, 4
      %v1842 = vsel %vm1821, %v1839, %v1841
      %v1843 = vrot.slane %v1750, 4
      %v1844 = vsel %vm1821, %v1841, %v1843
      %v1845 = vrot.slane %v1751, 4
      %v1846 = vsel %vm1821, %v1843, %v1845
      %v1847 = vrot.slane %v1752, 4
      %v1848 = vsel %vm1821, %v1845, %v1847
      %v1849 = vrot.slane %v1753, 4
      %v1850 = vsel %vm1821, %v1847, %v1849
      %v1851 = vrot.slane %v1754, 4
      %v1852 = vsel %vm1821, %v1849, %v1851
      %v1853 = vrot.slane %v1755, 4
      %v1854 = vsel %vm1821, %v1851, %v1853
      %v1855 = vrot.slane %v1756, 4
      %v1856 = vsel %vm1821, %v1853, %v1855
      %v1857 = vrot.slane %v1757, 4
      %v1858 = vsel %vm1821, %v1855, %v1857
      %v1859 = vrot.slane %v1758, 4
      %v1860 = vsel %vm1821, %v1857, %v1859
      %v1861 = vrot.slane %v1759, 4
      %v1862 = vsel %vm1821, %v1859, %v1861
      %v1863 = vrot.slane %v1760, 4
      %v1864 = vsel %vm1821, %v1861, %v1863
      %v1865 = vrot.slane %v1761, 4
      %v1866 = vsel %vm1821, %v1863, %v1865
      %v1867 = vrot.slane %v1762, 4
      %v1868 = vsel %vm1821, %v1865, %v1867
      %v1869 = vrot.slane %v1763, 4
      %v1870 = vsel %vm1821, %v1867, %v1869
      %v1871 = vrot.slane %v1764, 4
      %v1872 = vsel %vm1821, %v1869, %v1871
      %v1873 = vrot.slane %v1765, 4
      %v1874 = vsel %vm1821, %v1871, %v1873
      %v1875 = vrot.slane %v1766, 4
      %v1876 = vsel %vm1821, %v1873, %v1875
      %v1877 = vrot.slane %v1767, 4
      %v1878 = vsel %vm1821, %v1875, %v1877
      %v1879 = vrot.slane %v1768, 4
      %v1880 = vsel %vm1821, %v1877, %v1879
      %v1881 = vrot.slane %v1769, 4
      %v1882 = vsel %vm1821, %v1879, %v1881
      %v1883 = vrot.slane %v1770, 4
      %v1884 = vsel %vm1821, %v1881, %v1883
      %v1885 = vrot.slane %v1771, 4
      %v1886 = vsel %vm1821, %v1883, %v1885
      %v1887 = vrot.slane %v1772, 4
      %v1888 = vsel %vm1821, %v1885, %v1887
      %v1889 = vrot.slane %v1773, 4
      %v1890 = vsel %vm1821, %v1887, %v1889
      %v1891 = vrot.slane %v1774, 4
      %v1892 = vsel %vm1821, %v1889, %v1891
      %v1893 = vrot.slane %v1775, 4
      %v1894 = vsel %vm1821, %v1891, %v1893
      %v1895 = vrot.slane %v1776, 4
      %v1896 = vsel %vm1821, %v1893, %v1895
      %v1897 = vrot.slane %v1777, 4
      %v1898 = vsel %vm1821, %v1895, %v1897
      %v1899 = vrot.slane %v1778, 4
      %v1900 = vsel %vm1821, %v1897, %v1899
      %v1901 = vrot.slane %v1779, 4
      %v1902 = vsel %vm1821, %v1899, %v1901
      %v1943 = vadd.f32 %v1688, %v1824
      %v1944 = vadd.f32 %v1689, %v1826
      %v1945 = vadd.f32 %v1690, %v1828
      %v1946 = vadd.f32 %v1691, %v1830
      %v1947 = vadd.f32 %v1692, %v1832
      %v1948 = vadd.f32 %v1693, %v1834
      %v1949 = vadd.f32 %v1694, %v1836
      %v1950 = vadd.f32 %v1695, %v1838
      %v1951 = vadd.f32 %v1696, %v1840
      %v1952 = vadd.f32 %v1697, %v1842
      %v1953 = vadd.f32 %v1698, %v1844
      %v1954 = vadd.f32 %v1699, %v1846
      %v1955 = vadd.f32 %v1700, %v1848
      %v1956 = vadd.f32 %v1701, %v1850
      %v1957 = vadd.f32 %v1702, %v1852
      %v1958 = vadd.f32 %v1703, %v1854
      %v1959 = vadd.f32 %v1704, %v1856
      %v1960 = vadd.f32 %v1705, %v1858
      %v1961 = vadd.f32 %v1706, %v1860
      %v1962 = vadd.f32 %v1707, %v1862
      %v1963 = vadd.f32 %v1708, %v1864
      %v1964 = vadd.f32 %v1709, %v1866
      %v1965 = vadd.f32 %v1710, %v1868
      %v1966 = vadd.f32 %v1711, %v1870
      %v1967 = vadd.f32 %v1712, %v1872
      %v1968 = vadd.f32 %v1713, %v1874
      %v1969 = vadd.f32 %v1714, %v1876
      %v1970 = vadd.f32 %v1715, %v1878
      %v1971 = vadd.f32 %v1716, %v1880
      %v1972 = vadd.f32 %v1717, %v1882
      %v1973 = vadd.f32 %v1718, %v1884
      %v1974 = vadd.f32 %v1719, %v1886
      %v1975 = vadd.f32 %v1720, %v1888
      %v1976 = vadd.f32 %v1721, %v1890
      %v1977 = vadd.f32 %v1722, %v1892
      %v1978 = vadd.f32 %v1723, %v1894
      %v1979 = vadd.f32 %v1724, %v1896
      %v1980 = vadd.f32 %v1725, %v1898
      %v1981 = vadd.f32 %v1726, %v1900
      %v1982 = vadd.f32 %v1727, %v1902
      %v1983 = vld [vmem:[%s2] sm:$0x1]
      %v1985 = vperm.slane %v1983, 0
      %v1987 = vadd.f32 %v1943, %v1985
      %v1988 = vadd.f32 %v1944, %v1985
      %v1989 = vadd.f32 %v1945, %v1985
      %v1990 = vadd.f32 %v1946, %v1985
      %v1991 = vadd.f32 %v1947, %v1985
      %v1992 = vadd.f32 %v1948, %v1985
      %v1993 = vadd.f32 %v1949, %v1985
      %v1994 = vadd.f32 %v1950, %v1985
      %v1995 = vadd.f32 %v1951, %v1985
      %v1996 = vadd.f32 %v1952, %v1985
      %v1997 = vadd.f32 %v1953, %v1985
      %v1998 = vadd.f32 %v1954, %v1985
      %v1999 = vadd.f32 %v1955, %v1985
      %v2000 = vadd.f32 %v1956, %v1985
      %v2001 = vadd.f32 %v1957, %v1985
      %v2002 = vadd.f32 %v1958, %v1985
      %v2003 = vadd.f32 %v1959, %v1985
      %v2004 = vadd.f32 %v1960, %v1985
      %v2005 = vadd.f32 %v1961, %v1985
      %v2006 = vadd.f32 %v1962, %v1985
      %v2007 = vadd.f32 %v1963, %v1985
      %v2008 = vadd.f32 %v1964, %v1985
      %v2009 = vadd.f32 %v1965, %v1985
      %v2010 = vadd.f32 %v1966, %v1985
      %v2011 = vadd.f32 %v1967, %v1985
      %v2012 = vadd.f32 %v1968, %v1985
      %v2013 = vadd.f32 %v1969, %v1985
      %v2014 = vadd.f32 %v1970, %v1985
      %v2015 = vadd.f32 %v1971, %v1985
      %v2016 = vadd.f32 %v1972, %v1985
      %v2017 = vadd.f32 %v1973, %v1985
      %v2018 = vadd.f32 %v1974, %v1985
      %v2019 = vadd.f32 %v1975, %v1985
      %v2020 = vadd.f32 %v1976, %v1985
      %v2021 = vadd.f32 %v1977, %v1985
      %v2022 = vadd.f32 %v1978, %v1985
      %v2023 = vadd.f32 %v1979, %v1985
      %v2024 = vadd.f32 %v1980, %v1985
      %v2025 = vadd.f32 %v1981, %v1985
      %v2026 = vadd.f32 %v1982, %v1985
      %v2027 = vld [vmem:[%s314] sm:$0x1]
      %v2029 = vperm.slane %v2027, 0
      %v2031 = vadd.f32 %v1987, %v2029
      %v2032 = vadd.f32 %v1988, %v2029
      %v2033 = vadd.f32 %v1989, %v2029
      %v2034 = vadd.f32 %v1990, %v2029
      %v2035 = vadd.f32 %v1991, %v2029
      %v2036 = vadd.f32 %v1992, %v2029
      %v2037 = vadd.f32 %v1993, %v2029
      %v2038 = vadd.f32 %v1994, %v2029
      %v2039 = vadd.f32 %v1995, %v2029
      %v2040 = vadd.f32 %v1996, %v2029
      %v2041 = vadd.f32 %v1997, %v2029
      %v2042 = vadd.f32 %v1998, %v2029
      %v2043 = vadd.f32 %v1999, %v2029
      %v2044 = vadd.f32 %v2000, %v2029
      %v2045 = vadd.f32 %v2001, %v2029
      %v2046 = vadd.f32 %v2002, %v2029
      %v2047 = vadd.f32 %v2003, %v2029
      %v2048 = vadd.f32 %v2004, %v2029
      %v2049 = vadd.f32 %v2005, %v2029
      %v2050 = vadd.f32 %v2006, %v2029
      %v2051 = vadd.f32 %v2007, %v2029
      %v2052 = vadd.f32 %v2008, %v2029
      %v2053 = vadd.f32 %v2009, %v2029
      %v2054 = vadd.f32 %v2010, %v2029
      %v2055 = vadd.f32 %v2011, %v2029
      %v2056 = vadd.f32 %v2012, %v2029
      %v2057 = vadd.f32 %v2013, %v2029
      %v2058 = vadd.f32 %v2014, %v2029
      %v2059 = vadd.f32 %v2015, %v2029
      %v2060 = vadd.f32 %v2016, %v2029
      %v2061 = vadd.f32 %v2017, %v2029
      %v2062 = vadd.f32 %v2018, %v2029
      %v2063 = vadd.f32 %v2019, %v2029
      %v2064 = vadd.f32 %v2020, %v2029
      %v2065 = vadd.f32 %v2021, %v2029
      %v2066 = vadd.f32 %v2022, %v2029
      %v2067 = vadd.f32 %v2023, %v2029
      %v2068 = vadd.f32 %v2024, %v2029
      %v2069 = vadd.f32 %v2025, %v2029
      %v2070 = vadd.f32 %v2026, %v2029
      %vm2071 = vcmask 261120
      %v2072 = vsel %vm2071, %v2031, 0.0
      %v2073 = vsel %vm2071, %v2032, 0.0
      %v2074 = vadd.f32 %v2072, %v2073
      %v2075 = vsel %vm2071, %v2033, 0.0
      %v2076 = vadd.f32 %v2074, %v2075
      %v2077 = vsel %vm2071, %v2034, 0.0
      %v2078 = vadd.f32 %v2076, %v2077
      %v2079 = vsel %vm2071, %v2035, 0.0
      %v2080 = vadd.f32 %v2078, %v2079
      %v2081 = vsel %vm2071, %v2036, 0.0
      %v2082 = vadd.f32 %v2080, %v2081
      %v2083 = vsel %vm2071, %v2037, 0.0
      %v2084 = vadd.f32 %v2082, %v2083
      %v2085 = vsel %vm2071, %v2038, 0.0
      %v2086 = vadd.f32 %v2084, %v2085
      %v2087 = vsel %vm2071, %v2039, 0.0
      %v2088 = vadd.f32 %v2086, %v2087
      %v2089 = vsel %vm2071, %v2040, 0.0
      %v2090 = vadd.f32 %v2088, %v2089
      %v2091 = vsel %vm2071, %v2041, 0.0
      %v2092 = vadd.f32 %v2090, %v2091
      %v2093 = vsel %vm2071, %v2042, 0.0
      %v2094 = vadd.f32 %v2092, %v2093
      %v2095 = vsel %vm2071, %v2043, 0.0
      %v2096 = vadd.f32 %v2094, %v2095
      %v2097 = vsel %vm2071, %v2044, 0.0
      %v2098 = vadd.f32 %v2096, %v2097
      %v2099 = vsel %vm2071, %v2045, 0.0
      %v2100 = vadd.f32 %v2098, %v2099
      %v2101 = vsel %vm2071, %v2046, 0.0
      %v2102 = vadd.f32 %v2100, %v2101
      %v2103 = vsel %vm2071, %v2047, 0.0
      %v2104 = vadd.f32 %v2102, %v2103
      %v2105 = vsel %vm2071, %v2048, 0.0
      %v2106 = vadd.f32 %v2104, %v2105
      %v2107 = vsel %vm2071, %v2049, 0.0
      %v2108 = vadd.f32 %v2106, %v2107
      %v2109 = vsel %vm2071, %v2050, 0.0
      %v2110 = vadd.f32 %v2108, %v2109
      %v2111 = vsel %vm2071, %v2051, 0.0
      %v2112 = vadd.f32 %v2110, %v2111
      %v2113 = vsel %vm2071, %v2052, 0.0
      %v2114 = vadd.f32 %v2112, %v2113
      %v2115 = vsel %vm2071, %v2053, 0.0
      %v2116 = vadd.f32 %v2114, %v2115
      %v2117 = vsel %vm2071, %v2054, 0.0
      %v2118 = vadd.f32 %v2116, %v2117
      %v2119 = vsel %vm2071, %v2055, 0.0
      %v2120 = vadd.f32 %v2118, %v2119
      %v2121 = vsel %vm2071, %v2056, 0.0
      %v2122 = vadd.f32 %v2120, %v2121
      %v2123 = vsel %vm2071, %v2057, 0.0
      %v2124 = vadd.f32 %v2122, %v2123
      %v2125 = vsel %vm2071, %v2058, 0.0
      %v2126 = vadd.f32 %v2124, %v2125
      %v2127 = vsel %vm2071, %v2059, 0.0
      %v2128 = vadd.f32 %v2126, %v2127
      %v2129 = vsel %vm2071, %v2060, 0.0
      %v2130 = vadd.f32 %v2128, %v2129
      %v2131 = vsel %vm2071, %v2061, 0.0
      %v2132 = vadd.f32 %v2130, %v2131
      %v2133 = vsel %vm2071, %v2062, 0.0
      %v2134 = vadd.f32 %v2132, %v2133
      %v2135 = vsel %vm2071, %v2063, 0.0
      %v2136 = vadd.f32 %v2134, %v2135
      %v2137 = vsel %vm2071, %v2064, 0.0
      %v2138 = vadd.f32 %v2136, %v2137
      %v2139 = vsel %vm2071, %v2065, 0.0
      %v2140 = vadd.f32 %v2138, %v2139
      %v2141 = vsel %vm2071, %v2066, 0.0
      %v2142 = vadd.f32 %v2140, %v2141
      %v2143 = vsel %vm2071, %v2067, 0.0
      %v2144 = vadd.f32 %v2142, %v2143
      %v2145 = vsel %vm2071, %v2068, 0.0
      %v2146 = vadd.f32 %v2144, %v2145
      %v2147 = vsel %vm2071, %v2069, 0.0
      %v2148 = vadd.f32 %v2146, %v2147
      %v2149 = vsel %vm2071, %v2070, 0.0
      %v2150 = vadd.f32 %v2148, %v2149
      %v2151 = vrot.slane %v2150, 4
      %v2152 = vadd.f32 %v2150, %v2151
      %v2153 = vrot.slane %v2152, 2
      %v2154 = vadd.f32 %v2152, %v2153
      %v2155 = vrot.slane %v2154, 1
      %v2156 = vadd.f32 %v2154, %v2155
      %v2157 = vld [vmem:[%s6] sm:$0xff]
      %v2158 = vld [vmem:[%s6 + $0x8] sm:$0xff]
      %v2159 = vld [vmem:[%s6 + $0x10] sm:$0xff]
      %v2160 = vld [vmem:[%s6 + $0x18] sm:$0xff]
      %v2162 = vsel %vm2071, %v2156, 0
      %2164 = vmatpush.msra.mxu0 0.0
      %2165 = vmatpush.msra.mxu0 0.0
      %2166 = vmatpush.msra.mxu0 0.0
      %2167 = vmatpush.msra.mxu0 0.0
      %2168 = vmatpush.msra.mxu0 0.0
      %2169 = vmatpush.msra.mxu0 0.0
      %2170 = vmatpush.msra.mxu0 0.0
      %2171 = vmatpush.msra.mxu0 0.0
      %2172 = vmatpush.msra.mxu0 0.0
      %2173 = vmatpush.msra.mxu0 0.0
      %2174 = vmatpush.msra.mxu0 0.0
      %2175 = vmatpush.msra.mxu0 0.0
      %2176 = vmatpush.msra.mxu0 %v2160
      %2177 = vmatpush.msra.mxu0 %v2159
      %2178 = vmatpush.msra.mxu0 %v2158
      %2179 = vmatpush.msra.mxu0 %v2157
      %2180 = vmatmul.f32.gmra.mxu0 %v2162
      %v2181 = vpop.f32.mrf.mxu0
      %v2182 = vadd.f32 0.0, %v2181
      %2183 = vdwg.mxu0
      %v2184 = vmul.f32 %v2182, 0.00078125
      %v2185 = vld [vmem:[%s7] sm:$0xff]
      %vm2186 = vcmask 64512
      %v2188 = vsel %vm2186, %v2184, 0
      %2190 = vmatpush.msra.mxu0 0.0
      %2191 = vmatpush.msra.mxu0 0.0
      %2192 = vmatpush.msra.mxu0 0.0
      %2193 = vmatpush.msra.mxu0 0.0
      %2194 = vmatpush.msra.mxu0 0.0
      %2195 = vmatpush.msra.mxu0 0.0
      %2196 = vmatpush.msra.mxu0 0.0
      %2197 = vmatpush.msra.mxu0 0.0
      %2198 = vmatpush.msra.mxu0 0.0
      %2199 = vmatpush.msra.mxu0 0.0
      %2200 = vmatpush.msra.mxu0 0.0
      %2201 = vmatpush.msra.mxu0 0.0
      %2202 = vmatpush.msra.mxu0 0.0
      %2203 = vmatpush.msra.mxu0 0.0
      %2204 = vmatpush.msra.mxu0 0.0
      %2205 = vmatpush.msra.mxu0 %v2185
      %2206 = vmatmul.f32.gmra.mxu0 %v2188
      %v2207 = vpop.f32.mrf.mxu0
      %v2208 = vadd.f32 0.0, %v2207
      %2209 = vdwg.mxu0
      %v2210 = vperm.slane %v2208, 0
      %v2211 = vsub.f32 %v2031, %v2210
      %v2212 = vsub.f32 %v2032, %v2210
      %v2213 = vsub.f32 %v2033, %v2210
      %v2214 = vsub.f32 %v2034, %v2210
      %v2215 = vsub.f32 %v2035, %v2210
      %v2216 = vsub.f32 %v2036, %v2210
      %v2217 = vsub.f32 %v2037, %v2210
      %v2218 = vsub.f32 %v2038, %v2210
      %v2219 = vsub.f32 %v2039, %v2210
      %v2220 = vsub.f32 %v2040, %v2210
      %v2221 = vsub.f32 %v2041, %v2210
      %v2222 = vsub.f32 %v2042, %v2210
      %v2223 = vsub.f32 %v2043, %v2210
      %v2224 = vsub.f32 %v2044, %v2210
      %v2225 = vsub.f32 %v2045, %v2210
      %v2226 = vsub.f32 %v2046, %v2210
      %v2227 = vsub.f32 %v2047, %v2210
      %v2228 = vsub.f32 %v2048, %v2210
      %v2229 = vsub.f32 %v2049, %v2210
      %v2230 = vsub.f32 %v2050, %v2210
      %v2231 = vsub.f32 %v2051, %v2210
      %v2232 = vsub.f32 %v2052, %v2210
      %v2233 = vsub.f32 %v2053, %v2210
      %v2234 = vsub.f32 %v2054, %v2210
      %v2235 = vsub.f32 %v2055, %v2210
      %v2236 = vsub.f32 %v2056, %v2210
      %v2237 = vsub.f32 %v2057, %v2210
      %v2238 = vsub.f32 %v2058, %v2210
      %v2239 = vsub.f32 %v2059, %v2210
      %v2240 = vsub.f32 %v2060, %v2210
      %v2241 = vsub.f32 %v2061, %v2210
      %v2242 = vsub.f32 %v2062, %v2210
      %v2243 = vsub.f32 %v2063, %v2210
      %v2244 = vsub.f32 %v2064, %v2210
      %v2245 = vsub.f32 %v2065, %v2210
      %v2246 = vsub.f32 %v2066, %v2210
      %v2247 = vsub.f32 %v2067, %v2210
      %v2248 = vsub.f32 %v2068, %v2210
      %v2249 = vsub.f32 %v2069, %v2210
      %v2250 = vsub.f32 %v2070, %v2210
      %v2251 = vmul.f32 %v2211, %v2211
      %v2252 = vmul.f32 %v2212, %v2212
      %v2253 = vmul.f32 %v2213, %v2213
      %v2254 = vmul.f32 %v2214, %v2214
      %v2255 = vmul.f32 %v2215, %v2215
      %v2256 = vmul.f32 %v2216, %v2216
      %v2257 = vmul.f32 %v2217, %v2217
      %v2258 = vmul.f32 %v2218, %v2218
      %v2259 = vmul.f32 %v2219, %v2219
      %v2260 = vmul.f32 %v2220, %v2220
      %v2261 = vmul.f32 %v2221, %v2221
      %v2262 = vmul.f32 %v2222, %v2222
      %v2263 = vmul.f32 %v2223, %v2223
      %v2264 = vmul.f32 %v2224, %v2224
      %v2265 = vmul.f32 %v2225, %v2225
      %v2266 = vmul.f32 %v2226, %v2226
      %v2267 = vmul.f32 %v2227, %v2227
      %v2268 = vmul.f32 %v2228, %v2228
      %v2269 = vmul.f32 %v2229, %v2229
      %v2270 = vmul.f32 %v2230, %v2230
      %v2271 = vmul.f32 %v2231, %v2231
      %v2272 = vmul.f32 %v2232, %v2232
      %v2273 = vmul.f32 %v2233, %v2233
      %v2274 = vmul.f32 %v2234, %v2234
      %v2275 = vmul.f32 %v2235, %v2235
      %v2276 = vmul.f32 %v2236, %v2236
      %v2277 = vmul.f32 %v2237, %v2237
      %v2278 = vmul.f32 %v2238, %v2238
      %v2279 = vmul.f32 %v2239, %v2239
      %v2280 = vmul.f32 %v2240, %v2240
      %v2281 = vmul.f32 %v2241, %v2241
      %v2282 = vmul.f32 %v2242, %v2242
      %v2283 = vmul.f32 %v2243, %v2243
      %v2284 = vmul.f32 %v2244, %v2244
      %v2285 = vmul.f32 %v2245, %v2245
      %v2286 = vmul.f32 %v2246, %v2246
      %v2287 = vmul.f32 %v2247, %v2247
      %v2288 = vmul.f32 %v2248, %v2248
      %v2289 = vmul.f32 %v2249, %v2249
      %v2290 = vmul.f32 %v2250, %v2250
      %v2291 = vsel %vm2071, %v2251, 0.0
      %v2292 = vsel %vm2071, %v2252, 0.0
      %v2293 = vadd.f32 %v2291, %v2292
      %v2294 = vsel %vm2071, %v2253, 0.0
      %v2295 = vadd.f32 %v2293, %v2294
      %v2296 = vsel %vm2071, %v2254, 0.0
      %v2297 = vadd.f32 %v2295, %v2296
      %v2298 = vsel %vm2071, %v2255, 0.0
      %v2299 = vadd.f32 %v2297, %v2298
      %v2300 = vsel %vm2071, %v2256, 0.0
      %v2301 = vadd.f32 %v2299, %v2300
      %v2302 = vsel %vm2071, %v2257, 0.0
      %v2303 = vadd.f32 %v2301, %v2302
      %v2304 = vsel %vm2071, %v2258, 0.0
      %v2305 = vadd.f32 %v2303, %v2304
      %v2306 = vsel %vm2071, %v2259, 0.0
      %v2307 = vadd.f32 %v2305, %v2306
      %v2308 = vsel %vm2071, %v2260, 0.0
      %v2309 = vadd.f32 %v2307, %v2308
      %v2310 = vsel %vm2071, %v2261, 0.0
      %v2311 = vadd.f32 %v2309, %v2310
      %v2312 = vsel %vm2071, %v2262, 0.0
      %v2313 = vadd.f32 %v2311, %v2312
      %v2314 = vsel %vm2071, %v2263, 0.0
      %v2315 = vadd.f32 %v2313, %v2314
      %v2316 = vsel %vm2071, %v2264, 0.0
      %v2317 = vadd.f32 %v2315, %v2316
      %v2318 = vsel %vm2071, %v2265, 0.0
      %v2319 = vadd.f32 %v2317, %v2318
      %v2320 = vsel %vm2071, %v2266, 0.0
      %v2321 = vadd.f32 %v2319, %v2320
      %v2322 = vsel %vm2071, %v2267, 0.0
      %v2323 = vadd.f32 %v2321, %v2322
      %v2324 = vsel %vm2071, %v2268, 0.0
      %v2325 = vadd.f32 %v2323, %v2324
      %v2326 = vsel %vm2071, %v2269, 0.0
      %v2327 = vadd.f32 %v2325, %v2326
      %v2328 = vsel %vm2071, %v2270, 0.0
      %v2329 = vadd.f32 %v2327, %v2328
      %v2330 = vsel %vm2071, %v2271, 0.0
      %v2331 = vadd.f32 %v2329, %v2330
      %v2332 = vsel %vm2071, %v2272, 0.0
      %v2333 = vadd.f32 %v2331, %v2332
      %v2334 = vsel %vm2071, %v2273, 0.0
      %v2335 = vadd.f32 %v2333, %v2334
      %v2336 = vsel %vm2071, %v2274, 0.0
      %v2337 = vadd.f32 %v2335, %v2336
      %v2338 = vsel %vm2071, %v2275, 0.0
      %v2339 = vadd.f32 %v2337, %v2338
      %v2340 = vsel %vm2071, %v2276, 0.0
      %v2341 = vadd.f32 %v2339, %v2340
      %v2342 = vsel %vm2071, %v2277, 0.0
      %v2343 = vadd.f32 %v2341, %v2342
      %v2344 = vsel %vm2071, %v2278, 0.0
      %v2345 = vadd.f32 %v2343, %v2344
      %v2346 = vsel %vm2071, %v2279, 0.0
      %v2347 = vadd.f32 %v2345, %v2346
      %v2348 = vsel %vm2071, %v2280, 0.0
      %v2349 = vadd.f32 %v2347, %v2348
      %v2350 = vsel %vm2071, %v2281, 0.0
      %v2351 = vadd.f32 %v2349, %v2350
      %v2352 = vsel %vm2071, %v2282, 0.0
      %v2353 = vadd.f32 %v2351, %v2352
      %v2354 = vsel %vm2071, %v2283, 0.0
      %v2355 = vadd.f32 %v2353, %v2354
      %v2356 = vsel %vm2071, %v2284, 0.0
      %v2357 = vadd.f32 %v2355, %v2356
      %v2358 = vsel %vm2071, %v2285, 0.0
      %v2359 = vadd.f32 %v2357, %v2358
      %v2360 = vsel %vm2071, %v2286, 0.0
      %v2361 = vadd.f32 %v2359, %v2360
      %v2362 = vsel %vm2071, %v2287, 0.0
      %v2363 = vadd.f32 %v2361, %v2362
      %v2364 = vsel %vm2071, %v2288, 0.0
      %v2365 = vadd.f32 %v2363, %v2364
      %v2366 = vsel %vm2071, %v2289, 0.0
      %v2367 = vadd.f32 %v2365, %v2366
      %v2368 = vsel %vm2071, %v2290, 0.0
      %v2369 = vadd.f32 %v2367, %v2368
      %v2370 = vrot.slane %v2369, 4
      %v2371 = vadd.f32 %v2369, %v2370
      %v2372 = vrot.slane %v2371, 2
      %v2373 = vadd.f32 %v2371, %v2372
      %v2374 = vrot.slane %v2373, 1
      %v2375 = vadd.f32 %v2373, %v2374
      %v2377 = vsel %vm2071, %v2375, 0
      %2379 = vmatpush.msra.mxu0 0.0
      %2380 = vmatpush.msra.mxu0 0.0
      %2381 = vmatpush.msra.mxu0 0.0
      %2382 = vmatpush.msra.mxu0 0.0
      %2383 = vmatpush.msra.mxu0 0.0
      %2384 = vmatpush.msra.mxu0 0.0
      %2385 = vmatpush.msra.mxu0 0.0
      %2386 = vmatpush.msra.mxu0 0.0
      %2387 = vmatpush.msra.mxu0 0.0
      %2388 = vmatpush.msra.mxu0 0.0
      %2389 = vmatpush.msra.mxu0 0.0
      %2390 = vmatpush.msra.mxu0 0.0
      %2391 = vmatpush.msra.mxu0 %v2160
      %2392 = vmatpush.msra.mxu0 %v2159
      %2393 = vmatpush.msra.mxu0 %v2158
      %2394 = vmatpush.msra.mxu0 %v2157
      %2395 = vmatmul.f32.gmra.mxu0 %v2377
      %v2396 = vpop.f32.mrf.mxu0
      %v2397 = vadd.f32 0.0, %v2396
      %2398 = vdwg.mxu0
      %v2399 = vmul.f32 %v2397, 0.00078125
      %v2401 = vsel %vm2186, %v2399, 0
      %2403 = vmatpush.msra.mxu0 0.0
      %2404 = vmatpush.msra.mxu0 0.0
      %2405 = vmatpush.msra.mxu0 0.0
      %2406 = vmatpush.msra.mxu0 0.0
      %2407 = vmatpush.msra.mxu0 0.0
      %2408 = vmatpush.msra.mxu0 0.0
      %2409 = vmatpush.msra.mxu0 0.0
      %2410 = vmatpush.msra.mxu0 0.0
      %2411 = vmatpush.msra.mxu0 0.0
      %2412 = vmatpush.msra.mxu0 0.0
      %2413 = vmatpush.msra.mxu0 0.0
      %2414 = vmatpush.msra.mxu0 0.0
      %2415 = vmatpush.msra.mxu0 0.0
      %2416 = vmatpush.msra.mxu0 0.0
      %2417 = vmatpush.msra.mxu0 0.0
      %2418 = vmatpush.msra.mxu0 %v2185
      %2419 = vmatmul.f32.gmra.mxu0 %v2401
      %v2420 = vpop.f32.mrf.mxu0
      %v2421 = vadd.f32 1e-05, %v2420
      %2422 = vdwg.mxu0
      %v2423 = vrsqrt.pop %v2421
      %v2424 = vmul.f32 %v2423, %v2421
      %v2425 = vmul.f32 %v2424, %v2423
      %v2426 = vmul.f32 0.5, %v2425
      %v2427 = vsub.f32 1.5, %v2426
      %v2428 = vmul.f32 %v2423, %v2427
      %vm2429 = vweird.f32 %v2421
      %vm2430 = vweird.f32 %v2423
      %vm2431 = vmor %vm2429, %vm2430
      %v2432 = vsel %vm2431, %v2423, %v2428
      %v2433 = vperm.slane %v2432, 0
      %v2434 = vmul.f32 %v2211, %v2433
      %v2435 = vmul.f32 %v2212, %v2433
      %v2436 = vmul.f32 %v2213, %v2433
      %v2437 = vmul.f32 %v2214, %v2433
      %v2438 = vmul.f32 %v2215, %v2433
      %v2439 = vmul.f32 %v2216, %v2433
      %v2440 = vmul.f32 %v2217, %v2433
      %v2441 = vmul.f32 %v2218, %v2433
      %v2442 = vmul.f32 %v2219, %v2433
      %v2443 = vmul.f32 %v2220, %v2433
      %v2444 = vmul.f32 %v2221, %v2433
      %v2445 = vmul.f32 %v2222, %v2433
      %v2446 = vmul.f32 %v2223, %v2433
      %v2447 = vmul.f32 %v2224, %v2433
      %v2448 = vmul.f32 %v2225, %v2433
      %v2449 = vmul.f32 %v2226, %v2433
      %v2450 = vmul.f32 %v2227, %v2433
      %v2451 = vmul.f32 %v2228, %v2433
      %v2452 = vmul.f32 %v2229, %v2433
      %v2453 = vmul.f32 %v2230, %v2433
      %v2454 = vmul.f32 %v2231, %v2433
      %v2455 = vmul.f32 %v2232, %v2433
      %v2456 = vmul.f32 %v2233, %v2433
      %v2457 = vmul.f32 %v2234, %v2433
      %v2458 = vmul.f32 %v2235, %v2433
      %v2459 = vmul.f32 %v2236, %v2433
      %v2460 = vmul.f32 %v2237, %v2433
      %v2461 = vmul.f32 %v2238, %v2433
      %v2462 = vmul.f32 %v2239, %v2433
      %v2463 = vmul.f32 %v2240, %v2433
      %v2464 = vmul.f32 %v2241, %v2433
      %v2465 = vmul.f32 %v2242, %v2433
      %v2466 = vmul.f32 %v2243, %v2433
      %v2467 = vmul.f32 %v2244, %v2433
      %v2468 = vmul.f32 %v2245, %v2433
      %v2469 = vmul.f32 %v2246, %v2433
      %v2470 = vmul.f32 %v2247, %v2433
      %v2471 = vmul.f32 %v2248, %v2433
      %v2472 = vmul.f32 %v2249, %v2433
      %v2473 = vmul.f32 %v2250, %v2433
      %v2474 = vld [vmem:[%s4] sm:$0x1]
      %v2476 = vperm.slane %v2474, 0
      %v2478 = vmul.f32 %v2434, %v2476
      %v2479 = vmul.f32 %v2435, %v2476
      %v2480 = vmul.f32 %v2436, %v2476
      %v2481 = vmul.f32 %v2437, %v2476
      %v2482 = vmul.f32 %v2438, %v2476
      %v2483 = vmul.f32 %v2439, %v2476
      %v2484 = vmul.f32 %v2440, %v2476
      %v2485 = vmul.f32 %v2441, %v2476
      %v2486 = vmul.f32 %v2442, %v2476
      %v2487 = vmul.f32 %v2443, %v2476
      %v2488 = vmul.f32 %v2444, %v2476
      %v2489 = vmul.f32 %v2445, %v2476
      %v2490 = vmul.f32 %v2446, %v2476
      %v2491 = vmul.f32 %v2447, %v2476
      %v2492 = vmul.f32 %v2448, %v2476
      %v2493 = vmul.f32 %v2449, %v2476
      %v2494 = vmul.f32 %v2450, %v2476
      %v2495 = vmul.f32 %v2451, %v2476
      %v2496 = vmul.f32 %v2452, %v2476
      %v2497 = vmul.f32 %v2453, %v2476
      %v2498 = vmul.f32 %v2454, %v2476
      %v2499 = vmul.f32 %v2455, %v2476
      %v2500 = vmul.f32 %v2456, %v2476
      %v2501 = vmul.f32 %v2457, %v2476
      %v2502 = vmul.f32 %v2458, %v2476
      %v2503 = vmul.f32 %v2459, %v2476
      %v2504 = vmul.f32 %v2460, %v2476
      %v2505 = vmul.f32 %v2461, %v2476
      %v2506 = vmul.f32 %v2462, %v2476
      %v2507 = vmul.f32 %v2463, %v2476
      %v2508 = vmul.f32 %v2464, %v2476
      %v2509 = vmul.f32 %v2465, %v2476
      %v2510 = vmul.f32 %v2466, %v2476
      %v2511 = vmul.f32 %v2467, %v2476
      %v2512 = vmul.f32 %v2468, %v2476
      %v2513 = vmul.f32 %v2469, %v2476
      %v2514 = vmul.f32 %v2470, %v2476
      %v2515 = vmul.f32 %v2471, %v2476
      %v2516 = vmul.f32 %v2472, %v2476
      %v2517 = vmul.f32 %v2473, %v2476
      %v2518 = vld [vmem:[%s5] sm:$0x1]
      %v2520 = vperm.slane %v2518, 0
      %v2522 = vadd.f32 %v2478, %v2520
      %v2523 = vadd.f32 %v2479, %v2520
      %v2524 = vadd.f32 %v2480, %v2520
      %v2525 = vadd.f32 %v2481, %v2520
      %v2526 = vadd.f32 %v2482, %v2520
      %v2527 = vadd.f32 %v2483, %v2520
      %v2528 = vadd.f32 %v2484, %v2520
      %v2529 = vadd.f32 %v2485, %v2520
      %v2530 = vadd.f32 %v2486, %v2520
      %v2531 = vadd.f32 %v2487, %v2520
      %v2532 = vadd.f32 %v2488, %v2520
      %v2533 = vadd.f32 %v2489, %v2520
      %v2534 = vadd.f32 %v2490, %v2520
      %v2535 = vadd.f32 %v2491, %v2520
      %v2536 = vadd.f32 %v2492, %v2520
      %v2537 = vadd.f32 %v2493, %v2520
      %v2538 = vadd.f32 %v2494, %v2520
      %v2539 = vadd.f32 %v2495, %v2520
      %v2540 = vadd.f32 %v2496, %v2520
      %v2541 = vadd.f32 %v2497, %v2520
      %v2542 = vadd.f32 %v2498, %v2520
      %v2543 = vadd.f32 %v2499, %v2520
      %v2544 = vadd.f32 %v2500, %v2520
      %v2545 = vadd.f32 %v2501, %v2520
      %v2546 = vadd.f32 %v2502, %v2520
      %v2547 = vadd.f32 %v2503, %v2520
      %v2548 = vadd.f32 %v2504, %v2520
      %v2549 = vadd.f32 %v2505, %v2520
      %v2550 = vadd.f32 %v2506, %v2520
      %v2551 = vadd.f32 %v2507, %v2520
      %v2552 = vadd.f32 %v2508, %v2520
      %v2553 = vadd.f32 %v2509, %v2520
      %v2554 = vadd.f32 %v2510, %v2520
      %v2555 = vadd.f32 %v2511, %v2520
      %v2556 = vadd.f32 %v2512, %v2520
      %v2557 = vadd.f32 %v2513, %v2520
      %v2558 = vadd.f32 %v2514, %v2520
      %v2559 = vadd.f32 %v2515, %v2520
      %v2560 = vadd.f32 %v2516, %v2520
      %v2561 = vadd.f32 %v2517, %v2520
      %v2562 = vxor.u32 %v2522, 2147483648
      %v2563 = vxor.u32 %v2523, 2147483648
      %v2564 = vxor.u32 %v2524, 2147483648
      %v2565 = vxor.u32 %v2525, 2147483648
      %v2566 = vxor.u32 %v2526, 2147483648
      %v2567 = vxor.u32 %v2527, 2147483648
      %v2568 = vxor.u32 %v2528, 2147483648
      %v2569 = vxor.u32 %v2529, 2147483648
      %v2570 = vxor.u32 %v2530, 2147483648
      %v2571 = vxor.u32 %v2531, 2147483648
      %v2572 = vxor.u32 %v2532, 2147483648
      %v2573 = vxor.u32 %v2533, 2147483648
      %v2574 = vxor.u32 %v2534, 2147483648
      %v2575 = vxor.u32 %v2535, 2147483648
      %v2576 = vxor.u32 %v2536, 2147483648
      %v2577 = vxor.u32 %v2537, 2147483648
      %v2578 = vxor.u32 %v2538, 2147483648
      %v2579 = vxor.u32 %v2539, 2147483648
      %v2580 = vxor.u32 %v2540, 2147483648
      %v2581 = vxor.u32 %v2541, 2147483648
      %v2582 = vxor.u32 %v2542, 2147483648
      %v2583 = vxor.u32 %v2543, 2147483648
      %v2584 = vxor.u32 %v2544, 2147483648
      %v2585 = vxor.u32 %v2545, 2147483648
      %v2586 = vxor.u32 %v2546, 2147483648
      %v2587 = vxor.u32 %v2547, 2147483648
      %v2588 = vxor.u32 %v2548, 2147483648
      %v2589 = vxor.u32 %v2549, 2147483648
      %v2590 = vxor.u32 %v2550, 2147483648
      %v2591 = vxor.u32 %v2551, 2147483648
      %v2592 = vxor.u32 %v2552, 2147483648
      %v2593 = vxor.u32 %v2553, 2147483648
      %v2594 = vxor.u32 %v2554, 2147483648
      %v2595 = vxor.u32 %v2555, 2147483648
      %v2596 = vxor.u32 %v2556, 2147483648
      %v2597 = vxor.u32 %v2557, 2147483648
      %v2598 = vxor.u32 %v2558, 2147483648
      %v2599 = vxor.u32 %v2559, 2147483648
      %v2600 = vxor.u32 %v2560, 2147483648
      %v2601 = vxor.u32 %v2561, 2147483648
      %v2602 = vmul.f32 %v2562, 1.442695
      %v2603 = vpow.pop %v2602
      %v2604 = vmul.f32 %v2563, 1.442695
      %v2605 = vpow.pop %v2604
      %v2606 = vmul.f32 %v2564, 1.442695
      %v2607 = vpow.pop %v2606
      %v2608 = vmul.f32 %v2565, 1.442695
      %v2609 = vpow.pop %v2608
      %v2610 = vmul.f32 %v2566, 1.442695
      %v2611 = vpow.pop %v2610
      %v2612 = vmul.f32 %v2567, 1.442695
      %v2613 = vpow.pop %v2612
      %v2614 = vmul.f32 %v2568, 1.442695
      %v2615 = vpow.pop %v2614
      %v2616 = vmul.f32 %v2569, 1.442695
      %v2617 = vpow.pop %v2616
      %v2618 = vmul.f32 %v2570, 1.442695
      %v2619 = vpow.pop %v2618
      %v2620 = vmul.f32 %v2571, 1.442695
      %v2621 = vpow.pop %v2620
      %v2622 = vmul.f32 %v2572, 1.442695
      %v2623 = vpow.pop %v2622
      %v2624 = vmul.f32 %v2573, 1.442695
      %v2625 = vpow.pop %v2624
      %v2626 = vmul.f32 %v2574, 1.442695
      %v2627 = vpow.pop %v2626
      %v2628 = vmul.f32 %v2575, 1.442695
      %v2629 = vpow.pop %v2628
      %v2630 = vmul.f32 %v2576, 1.442695
      %v2631 = vpow.pop %v2630
      %v2632 = vmul.f32 %v2577, 1.442695
      %v2633 = vpow.pop %v2632
      %v2634 = vmul.f32 %v2578, 1.442695
      %v2635 = vpow.pop %v2634
      %v2636 = vmul.f32 %v2579, 1.442695
      %v2637 = vpow.pop %v2636
      %v2638 = vmul.f32 %v2580, 1.442695
      %v2639 = vpow.pop %v2638
      %v2640 = vmul.f32 %v2581, 1.442695
      %v2641 = vpow.pop %v2640
      %v2642 = vmul.f32 %v2582, 1.442695
      %v2643 = vpow.pop %v2642
      %v2644 = vmul.f32 %v2583, 1.442695
      %v2645 = vpow.pop %v2644
      %v2646 = vmul.f32 %v2584, 1.442695
      %v2647 = vpow.pop %v2646
      %v2648 = vmul.f32 %v2585, 1.442695
      %v2649 = vpow.pop %v2648
      %v2650 = vmul.f32 %v2586, 1.442695
      %v2651 = vpow.pop %v2650
      %v2652 = vmul.f32 %v2587, 1.442695
      %v2653 = vpow.pop %v2652
      %v2654 = vmul.f32 %v2588, 1.442695
      %v2655 = vpow.pop %v2654
      %v2656 = vmul.f32 %v2589, 1.442695
      %v2657 = vpow.pop %v2656
      %v2658 = vmul.f32 %v2590, 1.442695
      %v2659 = vpow.pop %v2658
      %v2660 = vmul.f32 %v2591, 1.442695
      %v2661 = vpow.pop %v2660
      %v2662 = vmul.f32 %v2592, 1.442695
      %v2663 = vpow.pop %v2662
      %v2664 = vmul.f32 %v2593, 1.442695
      %v2665 = vpow.pop %v2664
      %v2666 = vmul.f32 %v2594, 1.442695
      %v2667 = vpow.pop %v2666
      %v2668 = vmul.f32 %v2595, 1.442695
      %v2669 = vpow.pop %v2668
      %v2670 = vmul.f32 %v2596, 1.442695
      %v2671 = vpow.pop %v2670
      %v2672 = vmul.f32 %v2597, 1.442695
      %v2673 = vpow.pop %v2672
      %v2674 = vmul.f32 %v2598, 1.442695
      %v2675 = vpow.pop %v2674
      %v2676 = vmul.f32 %v2599, 1.442695
      %v2677 = vpow.pop %v2676
      %v2678 = vmul.f32 %v2600, 1.442695
      %v2679 = vpow.pop %v2678
      %v2680 = vmul.f32 %v2601, 1.442695
      %v2681 = vpow.pop %v2680
      %v2682 = vadd.f32 %v2603, 1.0
      %v2683 = vadd.f32 %v2605, 1.0
      %v2684 = vadd.f32 %v2607, 1.0
      %v2685 = vadd.f32 %v2609, 1.0
      %v2686 = vadd.f32 %v2611, 1.0
      %v2687 = vadd.f32 %v2613, 1.0
      %v2688 = vadd.f32 %v2615, 1.0
      %v2689 = vadd.f32 %v2617, 1.0
      %v2690 = vadd.f32 %v2619, 1.0
      %v2691 = vadd.f32 %v2621, 1.0
      %v2692 = vadd.f32 %v2623, 1.0
      %v2693 = vadd.f32 %v2625, 1.0
      %v2694 = vadd.f32 %v2627, 1.0
      %v2695 = vadd.f32 %v2629, 1.0
      %v2696 = vadd.f32 %v2631, 1.0
      %v2697 = vadd.f32 %v2633, 1.0
      %v2698 = vadd.f32 %v2635, 1.0
      %v2699 = vadd.f32 %v2637, 1.0
      %v2700 = vadd.f32 %v2639, 1.0
      %v2701 = vadd.f32 %v2641, 1.0
      %v2702 = vadd.f32 %v2643, 1.0
      %v2703 = vadd.f32 %v2645, 1.0
      %v2704 = vadd.f32 %v2647, 1.0
      %v2705 = vadd.f32 %v2649, 1.0
      %v2706 = vadd.f32 %v2651, 1.0
      %v2707 = vadd.f32 %v2653, 1.0
      %v2708 = vadd.f32 %v2655, 1.0
      %v2709 = vadd.f32 %v2657, 1.0
      %v2710 = vadd.f32 %v2659, 1.0
      %v2711 = vadd.f32 %v2661, 1.0
      %v2712 = vadd.f32 %v2663, 1.0
      %v2713 = vadd.f32 %v2665, 1.0
      %v2714 = vadd.f32 %v2667, 1.0
      %v2715 = vadd.f32 %v2669, 1.0
      %v2716 = vadd.f32 %v2671, 1.0
      %v2717 = vadd.f32 %v2673, 1.0
      %v2718 = vadd.f32 %v2675, 1.0
      %v2719 = vadd.f32 %v2677, 1.0
      %v2720 = vadd.f32 %v2679, 1.0
      %v2721 = vadd.f32 %v2681, 1.0
      %v2722 = vrcp.pop %v2682
      %v2723 = vmul.f32 %v2682, %v2722
      %v2724 = vsub.f32 1.0, %v2723
      %v2725 = vmul.f32 %v2722, %v2724
      %v2726 = vadd.f32 %v2722, %v2725
      %vm2727 = vweird.f32 %v2682
      %vm2728 = vweird.f32 %v2722
      %vm2729 = vmor %vm2727, %vm2728
      %v2730 = vsel %vm2729, %v2722, %v2726
      %v2731 = vand.u32 2147483647, %v2682
      %vm2732 = vcmp.eq.f32.partialorder %v2731, 8.507059e+37
      %v2733 = vand.u32 %v2682, 2147483648
      %v2734 = vor.u32 1.1754944e-38, %v2733
      %v2735 = vsel %vm2732, %v2734, %v2730
      %v2736 = vmul.f32 1.0, %v2735
      %v2737 = vrcp.pop %v2683
      %v2738 = vmul.f32 %v2683, %v2737
      %v2739 = vsub.f32 1.0, %v2738
      %v2740 = vmul.f32 %v2737, %v2739
      %v2741 = vadd.f32 %v2737, %v2740
      %vm2742 = vweird.f32 %v2683
      %vm2743 = vweird.f32 %v2737
      %vm2744 = vmor %vm2742, %vm2743
      %v2745 = vsel %vm2744, %v2737, %v2741
      %v2746 = vand.u32 2147483647, %v2683
      %vm2747 = vcmp.eq.f32.partialorder %v2746, 8.507059e+37
      %v2748 = vand.u32 %v2683, 2147483648
      %v2749 = vor.u32 1.1754944e-38, %v2748
      %v2750 = vsel %vm2747, %v2749, %v2745
      %v2751 = vmul.f32 1.0, %v2750
      %v2752 = vrcp.pop %v2684
      %v2753 = vmul.f32 %v2684, %v2752
      %v2754 = vsub.f32 1.0, %v2753
      %v2755 = vmul.f32 %v2752, %v2754
      %v2756 = vadd.f32 %v2752, %v2755
      %vm2757 = vweird.f32 %v2684
      %vm2758 = vweird.f32 %v2752
      %vm2759 = vmor %vm2757, %vm2758
      %v2760 = vsel %vm2759, %v2752, %v2756
      %v2761 = vand.u32 2147483647, %v2684
      %vm2762 = vcmp.eq.f32.partialorder %v2761, 8.507059e+37
      %v2763 = vand.u32 %v2684, 2147483648
      %v2764 = vor.u32 1.1754944e-38, %v2763
      %v2765 = vsel %vm2762, %v2764, %v2760
      %v2766 = vmul.f32 1.0, %v2765
      %v2767 = vrcp.pop %v2685
      %v2768 = vmul.f32 %v2685, %v2767
      %v2769 = vsub.f32 1.0, %v2768
      %v2770 = vmul.f32 %v2767, %v2769
      %v2771 = vadd.f32 %v2767, %v2770
      %vm2772 = vweird.f32 %v2685
      %vm2773 = vweird.f32 %v2767
      %vm2774 = vmor %vm2772, %vm2773
      %v2775 = vsel %vm2774, %v2767, %v2771
      %v2776 = vand.u32 2147483647, %v2685
      %vm2777 = vcmp.eq.f32.partialorder %v2776, 8.507059e+37
      %v2778 = vand.u32 %v2685, 2147483648
      %v2779 = vor.u32 1.1754944e-38, %v2778
      %v2780 = vsel %vm2777, %v2779, %v2775
      %v2781 = vmul.f32 1.0, %v2780
      %v2782 = vrcp.pop %v2686
      %v2783 = vmul.f32 %v2686, %v2782
      %v2784 = vsub.f32 1.0, %v2783
      %v2785 = vmul.f32 %v2782, %v2784
      %v2786 = vadd.f32 %v2782, %v2785
      %vm2787 = vweird.f32 %v2686
      %vm2788 = vweird.f32 %v2782
      %vm2789 = vmor %vm2787, %vm2788
      %v2790 = vsel %vm2789, %v2782, %v2786
      %v2791 = vand.u32 2147483647, %v2686
      %vm2792 = vcmp.eq.f32.partialorder %v2791, 8.507059e+37
      %v2793 = vand.u32 %v2686, 2147483648
      %v2794 = vor.u32 1.1754944e-38, %v2793
      %v2795 = vsel %vm2792, %v2794, %v2790
      %v2796 = vmul.f32 1.0, %v2795
      %v2797 = vrcp.pop %v2687
      %v2798 = vmul.f32 %v2687, %v2797
      %v2799 = vsub.f32 1.0, %v2798
      %v2800 = vmul.f32 %v2797, %v2799
      %v2801 = vadd.f32 %v2797, %v2800
      %vm2802 = vweird.f32 %v2687
      %vm2803 = vweird.f32 %v2797
      %vm2804 = vmor %vm2802, %vm2803
      %v2805 = vsel %vm2804, %v2797, %v2801
      %v2806 = vand.u32 2147483647, %v2687
      %vm2807 = vcmp.eq.f32.partialorder %v2806, 8.507059e+37
      %v2808 = vand.u32 %v2687, 2147483648
      %v2809 = vor.u32 1.1754944e-38, %v2808
      %v2810 = vsel %vm2807, %v2809, %v2805
      %v2811 = vmul.f32 1.0, %v2810
      %v2812 = vrcp.pop %v2688
      %v2813 = vmul.f32 %v2688, %v2812
      %v2814 = vsub.f32 1.0, %v2813
      %v2815 = vmul.f32 %v2812, %v2814
      %v2816 = vadd.f32 %v2812, %v2815
      %vm2817 = vweird.f32 %v2688
      %vm2818 = vweird.f32 %v2812
      %vm2819 = vmor %vm2817, %vm2818
      %v2820 = vsel %vm2819, %v2812, %v2816
      %v2821 = vand.u32 2147483647, %v2688
      %vm2822 = vcmp.eq.f32.partialorder %v2821, 8.507059e+37
      %v2823 = vand.u32 %v2688, 2147483648
      %v2824 = vor.u32 1.1754944e-38, %v2823
      %v2825 = vsel %vm2822, %v2824, %v2820
      %v2826 = vmul.f32 1.0, %v2825
      %v2827 = vrcp.pop %v2689
      %v2828 = vmul.f32 %v2689, %v2827
      %v2829 = vsub.f32 1.0, %v2828
      %v2830 = vmul.f32 %v2827, %v2829
      %v2831 = vadd.f32 %v2827, %v2830
      %vm2832 = vweird.f32 %v2689
      %vm2833 = vweird.f32 %v2827
      %vm2834 = vmor %vm2832, %vm2833
      %v2835 = vsel %vm2834, %v2827, %v2831
      %v2836 = vand.u32 2147483647, %v2689
      %vm2837 = vcmp.eq.f32.partialorder %v2836, 8.507059e+37
      %v2838 = vand.u32 %v2689, 2147483648
      %v2839 = vor.u32 1.1754944e-38, %v2838
      %v2840 = vsel %vm2837, %v2839, %v2835
      %v2841 = vmul.f32 1.0, %v2840
      %v2842 = vrcp.pop %v2690
      %v2843 = vmul.f32 %v2690, %v2842
      %v2844 = vsub.f32 1.0, %v2843
      %v2845 = vmul.f32 %v2842, %v2844
      %v2846 = vadd.f32 %v2842, %v2845
      %vm2847 = vweird.f32 %v2690
      %vm2848 = vweird.f32 %v2842
      %vm2849 = vmor %vm2847, %vm2848
      %v2850 = vsel %vm2849, %v2842, %v2846
      %v2851 = vand.u32 2147483647, %v2690
      %vm2852 = vcmp.eq.f32.partialorder %v2851, 8.507059e+37
      %v2853 = vand.u32 %v2690, 2147483648
      %v2854 = vor.u32 1.1754944e-38, %v2853
      %v2855 = vsel %vm2852, %v2854, %v2850
      %v2856 = vmul.f32 1.0, %v2855
      %v2857 = vrcp.pop %v2691
      %v2858 = vmul.f32 %v2691, %v2857
      %v2859 = vsub.f32 1.0, %v2858
      %v2860 = vmul.f32 %v2857, %v2859
      %v2861 = vadd.f32 %v2857, %v2860
      %vm2862 = vweird.f32 %v2691
      %vm2863 = vweird.f32 %v2857
      %vm2864 = vmor %vm2862, %vm2863
      %v2865 = vsel %vm2864, %v2857, %v2861
      %v2866 = vand.u32 2147483647, %v2691
      %vm2867 = vcmp.eq.f32.partialorder %v2866, 8.507059e+37
      %v2868 = vand.u32 %v2691, 2147483648
      %v2869 = vor.u32 1.1754944e-38, %v2868
      %v2870 = vsel %vm2867, %v2869, %v2865
      %v2871 = vmul.f32 1.0, %v2870
      %v2872 = vrcp.pop %v2692
      %v2873 = vmul.f32 %v2692, %v2872
      %v2874 = vsub.f32 1.0, %v2873
      %v2875 = vmul.f32 %v2872, %v2874
      %v2876 = vadd.f32 %v2872, %v2875
      %vm2877 = vweird.f32 %v2692
      %vm2878 = vweird.f32 %v2872
      %vm2879 = vmor %vm2877, %vm2878
      %v2880 = vsel %vm2879, %v2872, %v2876
      %v2881 = vand.u32 2147483647, %v2692
      %vm2882 = vcmp.eq.f32.partialorder %v2881, 8.507059e+37
      %v2883 = vand.u32 %v2692, 2147483648
      %v2884 = vor.u32 1.1754944e-38, %v2883
      %v2885 = vsel %vm2882, %v2884, %v2880
      %v2886 = vmul.f32 1.0, %v2885
      %v2887 = vrcp.pop %v2693
      %v2888 = vmul.f32 %v2693, %v2887
      %v2889 = vsub.f32 1.0, %v2888
      %v2890 = vmul.f32 %v2887, %v2889
      %v2891 = vadd.f32 %v2887, %v2890
      %vm2892 = vweird.f32 %v2693
      %vm2893 = vweird.f32 %v2887
      %vm2894 = vmor %vm2892, %vm2893
      %v2895 = vsel %vm2894, %v2887, %v2891
      %v2896 = vand.u32 2147483647, %v2693
      %vm2897 = vcmp.eq.f32.partialorder %v2896, 8.507059e+37
      %v2898 = vand.u32 %v2693, 2147483648
      %v2899 = vor.u32 1.1754944e-38, %v2898
      %v2900 = vsel %vm2897, %v2899, %v2895
      %v2901 = vmul.f32 1.0, %v2900
      %v2902 = vrcp.pop %v2694
      %v2903 = vmul.f32 %v2694, %v2902
      %v2904 = vsub.f32 1.0, %v2903
      %v2905 = vmul.f32 %v2902, %v2904
      %v2906 = vadd.f32 %v2902, %v2905
      %vm2907 = vweird.f32 %v2694
      %vm2908 = vweird.f32 %v2902
      %vm2909 = vmor %vm2907, %vm2908
      %v2910 = vsel %vm2909, %v2902, %v2906
      %v2911 = vand.u32 2147483647, %v2694
      %vm2912 = vcmp.eq.f32.partialorder %v2911, 8.507059e+37
      %v2913 = vand.u32 %v2694, 2147483648
      %v2914 = vor.u32 1.1754944e-38, %v2913
      %v2915 = vsel %vm2912, %v2914, %v2910
      %v2916 = vmul.f32 1.0, %v2915
      %v2917 = vrcp.pop %v2695
      %v2918 = vmul.f32 %v2695, %v2917
      %v2919 = vsub.f32 1.0, %v2918
      %v2920 = vmul.f32 %v2917, %v2919
      %v2921 = vadd.f32 %v2917, %v2920
      %vm2922 = vweird.f32 %v2695
      %vm2923 = vweird.f32 %v2917
      %vm2924 = vmor %vm2922, %vm2923
      %v2925 = vsel %vm2924, %v2917, %v2921
      %v2926 = vand.u32 2147483647, %v2695
      %vm2927 = vcmp.eq.f32.partialorder %v2926, 8.507059e+37
      %v2928 = vand.u32 %v2695, 2147483648
      %v2929 = vor.u32 1.1754944e-38, %v2928
      %v2930 = vsel %vm2927, %v2929, %v2925
      %v2931 = vmul.f32 1.0, %v2930
      %v2932 = vrcp.pop %v2696
      %v2933 = vmul.f32 %v2696, %v2932
      %v2934 = vsub.f32 1.0, %v2933
      %v2935 = vmul.f32 %v2932, %v2934
      %v2936 = vadd.f32 %v2932, %v2935
      %vm2937 = vweird.f32 %v2696
      %vm2938 = vweird.f32 %v2932
      %vm2939 = vmor %vm2937, %vm2938
      %v2940 = vsel %vm2939, %v2932, %v2936
      %v2941 = vand.u32 2147483647, %v2696
      %vm2942 = vcmp.eq.f32.partialorder %v2941, 8.507059e+37
      %v2943 = vand.u32 %v2696, 2147483648
      %v2944 = vor.u32 1.1754944e-38, %v2943
      %v2945 = vsel %vm2942, %v2944, %v2940
      %v2946 = vmul.f32 1.0, %v2945
      %v2947 = vrcp.pop %v2697
      %v2948 = vmul.f32 %v2697, %v2947
      %v2949 = vsub.f32 1.0, %v2948
      %v2950 = vmul.f32 %v2947, %v2949
      %v2951 = vadd.f32 %v2947, %v2950
      %vm2952 = vweird.f32 %v2697
      %vm2953 = vweird.f32 %v2947
      %vm2954 = vmor %vm2952, %vm2953
      %v2955 = vsel %vm2954, %v2947, %v2951
      %v2956 = vand.u32 2147483647, %v2697
      %vm2957 = vcmp.eq.f32.partialorder %v2956, 8.507059e+37
      %v2958 = vand.u32 %v2697, 2147483648
      %v2959 = vor.u32 1.1754944e-38, %v2958
      %v2960 = vsel %vm2957, %v2959, %v2955
      %v2961 = vmul.f32 1.0, %v2960
      %v2962 = vrcp.pop %v2698
      %v2963 = vmul.f32 %v2698, %v2962
      %v2964 = vsub.f32 1.0, %v2963
      %v2965 = vmul.f32 %v2962, %v2964
      %v2966 = vadd.f32 %v2962, %v2965
      %vm2967 = vweird.f32 %v2698
      %vm2968 = vweird.f32 %v2962
      %vm2969 = vmor %vm2967, %vm2968
      %v2970 = vsel %vm2969, %v2962, %v2966
      %v2971 = vand.u32 2147483647, %v2698
      %vm2972 = vcmp.eq.f32.partialorder %v2971, 8.507059e+37
      %v2973 = vand.u32 %v2698, 2147483648
      %v2974 = vor.u32 1.1754944e-38, %v2973
      %v2975 = vsel %vm2972, %v2974, %v2970
      %v2976 = vmul.f32 1.0, %v2975
      %v2977 = vrcp.pop %v2699
      %v2978 = vmul.f32 %v2699, %v2977
      %v2979 = vsub.f32 1.0, %v2978
      %v2980 = vmul.f32 %v2977, %v2979
      %v2981 = vadd.f32 %v2977, %v2980
      %vm2982 = vweird.f32 %v2699
      %vm2983 = vweird.f32 %v2977
      %vm2984 = vmor %vm2982, %vm2983
      %v2985 = vsel %vm2984, %v2977, %v2981
      %v2986 = vand.u32 2147483647, %v2699
      %vm2987 = vcmp.eq.f32.partialorder %v2986, 8.507059e+37
      %v2988 = vand.u32 %v2699, 2147483648
      %v2989 = vor.u32 1.1754944e-38, %v2988
      %v2990 = vsel %vm2987, %v2989, %v2985
      %v2991 = vmul.f32 1.0, %v2990
      %v2992 = vrcp.pop %v2700
      %v2993 = vmul.f32 %v2700, %v2992
      %v2994 = vsub.f32 1.0, %v2993
      %v2995 = vmul.f32 %v2992, %v2994
      %v2996 = vadd.f32 %v2992, %v2995
      %vm2997 = vweird.f32 %v2700
      %vm2998 = vweird.f32 %v2992
      %vm2999 = vmor %vm2997, %vm2998
      %v3000 = vsel %vm2999, %v2992, %v2996
      %v3001 = vand.u32 2147483647, %v2700
      %vm3002 = vcmp.eq.f32.partialorder %v3001, 8.507059e+37
      %v3003 = vand.u32 %v2700, 2147483648
      %v3004 = vor.u32 1.1754944e-38, %v3003
      %v3005 = vsel %vm3002, %v3004, %v3000
      %v3006 = vmul.f32 1.0, %v3005
      %v3007 = vrcp.pop %v2701
      %v3008 = vmul.f32 %v2701, %v3007
      %v3009 = vsub.f32 1.0, %v3008
      %v3010 = vmul.f32 %v3007, %v3009
      %v3011 = vadd.f32 %v3007, %v3010
      %vm3012 = vweird.f32 %v2701
      %vm3013 = vweird.f32 %v3007
      %vm3014 = vmor %vm3012, %vm3013
      %v3015 = vsel %vm3014, %v3007, %v3011
      %v3016 = vand.u32 2147483647, %v2701
      %vm3017 = vcmp.eq.f32.partialorder %v3016, 8.507059e+37
      %v3018 = vand.u32 %v2701, 2147483648
      %v3019 = vor.u32 1.1754944e-38, %v3018
      %v3020 = vsel %vm3017, %v3019, %v3015
      %v3021 = vmul.f32 1.0, %v3020
      %v3022 = vrcp.pop %v2702
      %v3023 = vmul.f32 %v2702, %v3022
      %v3024 = vsub.f32 1.0, %v3023
      %v3025 = vmul.f32 %v3022, %v3024
      %v3026 = vadd.f32 %v3022, %v3025
      %vm3027 = vweird.f32 %v2702
      %vm3028 = vweird.f32 %v3022
      %vm3029 = vmor %vm3027, %vm3028
      %v3030 = vsel %vm3029, %v3022, %v3026
      %v3031 = vand.u32 2147483647, %v2702
      %vm3032 = vcmp.eq.f32.partialorder %v3031, 8.507059e+37
      %v3033 = vand.u32 %v2702, 2147483648
      %v3034 = vor.u32 1.1754944e-38, %v3033
      %v3035 = vsel %vm3032, %v3034, %v3030
      %v3036 = vmul.f32 1.0, %v3035
      %v3037 = vrcp.pop %v2703
      %v3038 = vmul.f32 %v2703, %v3037
      %v3039 = vsub.f32 1.0, %v3038
      %v3040 = vmul.f32 %v3037, %v3039
      %v3041 = vadd.f32 %v3037, %v3040
      %vm3042 = vweird.f32 %v2703
      %vm3043 = vweird.f32 %v3037
      %vm3044 = vmor %vm3042, %vm3043
      %v3045 = vsel %vm3044, %v3037, %v3041
      %v3046 = vand.u32 2147483647, %v2703
      %vm3047 = vcmp.eq.f32.partialorder %v3046, 8.507059e+37
      %v3048 = vand.u32 %v2703, 2147483648
      %v3049 = vor.u32 1.1754944e-38, %v3048
      %v3050 = vsel %vm3047, %v3049, %v3045
      %v3051 = vmul.f32 1.0, %v3050
      %v3052 = vrcp.pop %v2704
      %v3053 = vmul.f32 %v2704, %v3052
      %v3054 = vsub.f32 1.0, %v3053
      %v3055 = vmul.f32 %v3052, %v3054
      %v3056 = vadd.f32 %v3052, %v3055
      %vm3057 = vweird.f32 %v2704
      %vm3058 = vweird.f32 %v3052
      %vm3059 = vmor %vm3057, %vm3058
      %v3060 = vsel %vm3059, %v3052, %v3056
      %v3061 = vand.u32 2147483647, %v2704
      %vm3062 = vcmp.eq.f32.partialorder %v3061, 8.507059e+37
      %v3063 = vand.u32 %v2704, 2147483648
      %v3064 = vor.u32 1.1754944e-38, %v3063
      %v3065 = vsel %vm3062, %v3064, %v3060
      %v3066 = vmul.f32 1.0, %v3065
      %v3067 = vrcp.pop %v2705
      %v3068 = vmul.f32 %v2705, %v3067
      %v3069 = vsub.f32 1.0, %v3068
      %v3070 = vmul.f32 %v3067, %v3069
      %v3071 = vadd.f32 %v3067, %v3070
      %vm3072 = vweird.f32 %v2705
      %vm3073 = vweird.f32 %v3067
      %vm3074 = vmor %vm3072, %vm3073
      %v3075 = vsel %vm3074, %v3067, %v3071
      %v3076 = vand.u32 2147483647, %v2705
      %vm3077 = vcmp.eq.f32.partialorder %v3076, 8.507059e+37
      %v3078 = vand.u32 %v2705, 2147483648
      %v3079 = vor.u32 1.1754944e-38, %v3078
      %v3080 = vsel %vm3077, %v3079, %v3075
      %v3081 = vmul.f32 1.0, %v3080
      %v3082 = vrcp.pop %v2706
      %v3083 = vmul.f32 %v2706, %v3082
      %v3084 = vsub.f32 1.0, %v3083
      %v3085 = vmul.f32 %v3082, %v3084
      %v3086 = vadd.f32 %v3082, %v3085
      %vm3087 = vweird.f32 %v2706
      %vm3088 = vweird.f32 %v3082
      %vm3089 = vmor %vm3087, %vm3088
      %v3090 = vsel %vm3089, %v3082, %v3086
      %v3091 = vand.u32 2147483647, %v2706
      %vm3092 = vcmp.eq.f32.partialorder %v3091, 8.507059e+37
      %v3093 = vand.u32 %v2706, 2147483648
      %v3094 = vor.u32 1.1754944e-38, %v3093
      %v3095 = vsel %vm3092, %v3094, %v3090
      %v3096 = vmul.f32 1.0, %v3095
      %v3097 = vrcp.pop %v2707
      %v3098 = vmul.f32 %v2707, %v3097
      %v3099 = vsub.f32 1.0, %v3098
      %v3100 = vmul.f32 %v3097, %v3099
      %v3101 = vadd.f32 %v3097, %v3100
      %vm3102 = vweird.f32 %v2707
      %vm3103 = vweird.f32 %v3097
      %vm3104 = vmor %vm3102, %vm3103
      %v3105 = vsel %vm3104, %v3097, %v3101
      %v3106 = vand.u32 2147483647, %v2707
      %vm3107 = vcmp.eq.f32.partialorder %v3106, 8.507059e+37
      %v3108 = vand.u32 %v2707, 2147483648
      %v3109 = vor.u32 1.1754944e-38, %v3108
      %v3110 = vsel %vm3107, %v3109, %v3105
      %v3111 = vmul.f32 1.0, %v3110
      %v3112 = vrcp.pop %v2708
      %v3113 = vmul.f32 %v2708, %v3112
      %v3114 = vsub.f32 1.0, %v3113
      %v3115 = vmul.f32 %v3112, %v3114
      %v3116 = vadd.f32 %v3112, %v3115
      %vm3117 = vweird.f32 %v2708
      %vm3118 = vweird.f32 %v3112
      %vm3119 = vmor %vm3117, %vm3118
      %v3120 = vsel %vm3119, %v3112, %v3116
      %v3121 = vand.u32 2147483647, %v2708
      %vm3122 = vcmp.eq.f32.partialorder %v3121, 8.507059e+37
      %v3123 = vand.u32 %v2708, 2147483648
      %v3124 = vor.u32 1.1754944e-38, %v3123
      %v3125 = vsel %vm3122, %v3124, %v3120
      %v3126 = vmul.f32 1.0, %v3125
      %v3127 = vrcp.pop %v2709
      %v3128 = vmul.f32 %v2709, %v3127
      %v3129 = vsub.f32 1.0, %v3128
      %v3130 = vmul.f32 %v3127, %v3129
      %v3131 = vadd.f32 %v3127, %v3130
      %vm3132 = vweird.f32 %v2709
      %vm3133 = vweird.f32 %v3127
      %vm3134 = vmor %vm3132, %vm3133
      %v3135 = vsel %vm3134, %v3127, %v3131
      %v3136 = vand.u32 2147483647, %v2709
      %vm3137 = vcmp.eq.f32.partialorder %v3136, 8.507059e+37
      %v3138 = vand.u32 %v2709, 2147483648
      %v3139 = vor.u32 1.1754944e-38, %v3138
      %v3140 = vsel %vm3137, %v3139, %v3135
      %v3141 = vmul.f32 1.0, %v3140
      %v3142 = vrcp.pop %v2710
      %v3143 = vmul.f32 %v2710, %v3142
      %v3144 = vsub.f32 1.0, %v3143
      %v3145 = vmul.f32 %v3142, %v3144
      %v3146 = vadd.f32 %v3142, %v3145
      %vm3147 = vweird.f32 %v2710
      %vm3148 = vweird.f32 %v3142
      %vm3149 = vmor %vm3147, %vm3148
      %v3150 = vsel %vm3149, %v3142, %v3146
      %v3151 = vand.u32 2147483647, %v2710
      %vm3152 = vcmp.eq.f32.partialorder %v3151, 8.507059e+37
      %v3153 = vand.u32 %v2710, 2147483648
      %v3154 = vor.u32 1.1754944e-38, %v3153
      %v3155 = vsel %vm3152, %v3154, %v3150
      %v3156 = vmul.f32 1.0, %v3155
      %v3157 = vrcp.pop %v2711
      %v3158 = vmul.f32 %v2711, %v3157
      %v3159 = vsub.f32 1.0, %v3158
      %v3160 = vmul.f32 %v3157, %v3159
      %v3161 = vadd.f32 %v3157, %v3160
      %vm3162 = vweird.f32 %v2711
      %vm3163 = vweird.f32 %v3157
      %vm3164 = vmor %vm3162, %vm3163
      %v3165 = vsel %vm3164, %v3157, %v3161
      %v3166 = vand.u32 2147483647, %v2711
      %vm3167 = vcmp.eq.f32.partialorder %v3166, 8.507059e+37
      %v3168 = vand.u32 %v2711, 2147483648
      %v3169 = vor.u32 1.1754944e-38, %v3168
      %v3170 = vsel %vm3167, %v3169, %v3165
      %v3171 = vmul.f32 1.0, %v3170
      %v3172 = vrcp.pop %v2712
      %v3173 = vmul.f32 %v2712, %v3172
      %v3174 = vsub.f32 1.0, %v3173
      %v3175 = vmul.f32 %v3172, %v3174
      %v3176 = vadd.f32 %v3172, %v3175
      %vm3177 = vweird.f32 %v2712
      %vm3178 = vweird.f32 %v3172
      %vm3179 = vmor %vm3177, %vm3178
      %v3180 = vsel %vm3179, %v3172, %v3176
      %v3181 = vand.u32 2147483647, %v2712
      %vm3182 = vcmp.eq.f32.partialorder %v3181, 8.507059e+37
      %v3183 = vand.u32 %v2712, 2147483648
      %v3184 = vor.u32 1.1754944e-38, %v3183
      %v3185 = vsel %vm3182, %v3184, %v3180
      %v3186 = vmul.f32 1.0, %v3185
      %v3187 = vrcp.pop %v2713
      %v3188 = vmul.f32 %v2713, %v3187
      %v3189 = vsub.f32 1.0, %v3188
      %v3190 = vmul.f32 %v3187, %v3189
      %v3191 = vadd.f32 %v3187, %v3190
      %vm3192 = vweird.f32 %v2713
      %vm3193 = vweird.f32 %v3187
      %vm3194 = vmor %vm3192, %vm3193
      %v3195 = vsel %vm3194, %v3187, %v3191
      %v3196 = vand.u32 2147483647, %v2713
      %vm3197 = vcmp.eq.f32.partialorder %v3196, 8.507059e+37
      %v3198 = vand.u32 %v2713, 2147483648
      %v3199 = vor.u32 1.1754944e-38, %v3198
      %v3200 = vsel %vm3197, %v3199, %v3195
      %v3201 = vmul.f32 1.0, %v3200
      %v3202 = vrcp.pop %v2714
      %v3203 = vmul.f32 %v2714, %v3202
      %v3204 = vsub.f32 1.0, %v3203
      %v3205 = vmul.f32 %v3202, %v3204
      %v3206 = vadd.f32 %v3202, %v3205
      %vm3207 = vweird.f32 %v2714
      %vm3208 = vweird.f32 %v3202
      %vm3209 = vmor %vm3207, %vm3208
      %v3210 = vsel %vm3209, %v3202, %v3206
      %v3211 = vand.u32 2147483647, %v2714
      %vm3212 = vcmp.eq.f32.partialorder %v3211, 8.507059e+37
      %v3213 = vand.u32 %v2714, 2147483648
      %v3214 = vor.u32 1.1754944e-38, %v3213
      %v3215 = vsel %vm3212, %v3214, %v3210
      %v3216 = vmul.f32 1.0, %v3215
      %v3217 = vrcp.pop %v2715
      %v3218 = vmul.f32 %v2715, %v3217
      %v3219 = vsub.f32 1.0, %v3218
      %v3220 = vmul.f32 %v3217, %v3219
      %v3221 = vadd.f32 %v3217, %v3220
      %vm3222 = vweird.f32 %v2715
      %vm3223 = vweird.f32 %v3217
      %vm3224 = vmor %vm3222, %vm3223
      %v3225 = vsel %vm3224, %v3217, %v3221
      %v3226 = vand.u32 2147483647, %v2715
      %vm3227 = vcmp.eq.f32.partialorder %v3226, 8.507059e+37
      %v3228 = vand.u32 %v2715, 2147483648
      %v3229 = vor.u32 1.1754944e-38, %v3228
      %v3230 = vsel %vm3227, %v3229, %v3225
      %v3231 = vmul.f32 1.0, %v3230
      %v3232 = vrcp.pop %v2716
      %v3233 = vmul.f32 %v2716, %v3232
      %v3234 = vsub.f32 1.0, %v3233
      %v3235 = vmul.f32 %v3232, %v3234
      %v3236 = vadd.f32 %v3232, %v3235
      %vm3237 = vweird.f32 %v2716
      %vm3238 = vweird.f32 %v3232
      %vm3239 = vmor %vm3237, %vm3238
      %v3240 = vsel %vm3239, %v3232, %v3236
      %v3241 = vand.u32 2147483647, %v2716
      %vm3242 = vcmp.eq.f32.partialorder %v3241, 8.507059e+37
      %v3243 = vand.u32 %v2716, 2147483648
      %v3244 = vor.u32 1.1754944e-38, %v3243
      %v3245 = vsel %vm3242, %v3244, %v3240
      %v3246 = vmul.f32 1.0, %v3245
      %v3247 = vrcp.pop %v2717
      %v3248 = vmul.f32 %v2717, %v3247
      %v3249 = vsub.f32 1.0, %v3248
      %v3250 = vmul.f32 %v3247, %v3249
      %v3251 = vadd.f32 %v3247, %v3250
      %vm3252 = vweird.f32 %v2717
      %vm3253 = vweird.f32 %v3247
      %vm3254 = vmor %vm3252, %vm3253
      %v3255 = vsel %vm3254, %v3247, %v3251
      %v3256 = vand.u32 2147483647, %v2717
      %vm3257 = vcmp.eq.f32.partialorder %v3256, 8.507059e+37
      %v3258 = vand.u32 %v2717, 2147483648
      %v3259 = vor.u32 1.1754944e-38, %v3258
      %v3260 = vsel %vm3257, %v3259, %v3255
      %v3261 = vmul.f32 1.0, %v3260
      %v3262 = vrcp.pop %v2718
      %v3263 = vmul.f32 %v2718, %v3262
      %v3264 = vsub.f32 1.0, %v3263
      %v3265 = vmul.f32 %v3262, %v3264
      %v3266 = vadd.f32 %v3262, %v3265
      %vm3267 = vweird.f32 %v2718
      %vm3268 = vweird.f32 %v3262
      %vm3269 = vmor %vm3267, %vm3268
      %v3270 = vsel %vm3269, %v3262, %v3266
      %v3271 = vand.u32 2147483647, %v2718
      %vm3272 = vcmp.eq.f32.partialorder %v3271, 8.507059e+37
      %v3273 = vand.u32 %v2718, 2147483648
      %v3274 = vor.u32 1.1754944e-38, %v3273
      %v3275 = vsel %vm3272, %v3274, %v3270
      %v3276 = vmul.f32 1.0, %v3275
      %v3277 = vrcp.pop %v2719
      %v3278 = vmul.f32 %v2719, %v3277
      %v3279 = vsub.f32 1.0, %v3278
      %v3280 = vmul.f32 %v3277, %v3279
      %v3281 = vadd.f32 %v3277, %v3280
      %vm3282 = vweird.f32 %v2719
      %vm3283 = vweird.f32 %v3277
      %vm3284 = vmor %vm3282, %vm3283
      %v3285 = vsel %vm3284, %v3277, %v3281
      %v3286 = vand.u32 2147483647, %v2719
      %vm3287 = vcmp.eq.f32.partialorder %v3286, 8.507059e+37
      %v3288 = vand.u32 %v2719, 2147483648
      %v3289 = vor.u32 1.1754944e-38, %v3288
      %v3290 = vsel %vm3287, %v3289, %v3285
      %v3291 = vmul.f32 1.0, %v3290
      %v3292 = vrcp.pop %v2720
      %v3293 = vmul.f32 %v2720, %v3292
      %v3294 = vsub.f32 1.0, %v3293
      %v3295 = vmul.f32 %v3292, %v3294
      %v3296 = vadd.f32 %v3292, %v3295
      %vm3297 = vweird.f32 %v2720
      %vm3298 = vweird.f32 %v3292
      %vm3299 = vmor %vm3297, %vm3298
      %v3300 = vsel %vm3299, %v3292, %v3296
      %v3301 = vand.u32 2147483647, %v2720
      %vm3302 = vcmp.eq.f32.partialorder %v3301, 8.507059e+37
      %v3303 = vand.u32 %v2720, 2147483648
      %v3304 = vor.u32 1.1754944e-38, %v3303
      %v3305 = vsel %vm3302, %v3304, %v3300
      %v3306 = vmul.f32 1.0, %v3305
      %v3307 = vrcp.pop %v2721
      %v3308 = vmul.f32 %v2721, %v3307
      %v3309 = vsub.f32 1.0, %v3308
      %v3310 = vmul.f32 %v3307, %v3309
      %v3311 = vadd.f32 %v3307, %v3310
      %vm3312 = vweird.f32 %v2721
      %vm3313 = vweird.f32 %v3307
      %vm3314 = vmor %vm3312, %vm3313
      %v3315 = vsel %vm3314, %v3307, %v3311
      %v3316 = vand.u32 2147483647, %v2721
      %vm3317 = vcmp.eq.f32.partialorder %v3316, 8.507059e+37
      %v3318 = vand.u32 %v2721, 2147483648
      %v3319 = vor.u32 1.1754944e-38, %v3318
      %v3320 = vsel %vm3317, %v3319, %v3315
      %v3321 = vmul.f32 1.0, %v3320
      %v3322 = vmul.f32 %v2522, %v2736
      %v3323 = vmul.f32 %v2523, %v2751
      %v3324 = vmul.f32 %v2524, %v2766
      %v3325 = vmul.f32 %v2525, %v2781
      %v3326 = vmul.f32 %v2526, %v2796
      %v3327 = vmul.f32 %v2527, %v2811
      %v3328 = vmul.f32 %v2528, %v2826
      %v3329 = vmul.f32 %v2529, %v2841
      %v3330 = vmul.f32 %v2530, %v2856
      %v3331 = vmul.f32 %v2531, %v2871
      %v3332 = vmul.f32 %v2532, %v2886
      %v3333 = vmul.f32 %v2533, %v2901
      %v3334 = vmul.f32 %v2534, %v2916
      %v3335 = vmul.f32 %v2535, %v2931
      %v3336 = vmul.f32 %v2536, %v2946
      %v3337 = vmul.f32 %v2537, %v2961
      %v3338 = vmul.f32 %v2538, %v2976
      %v3339 = vmul.f32 %v2539, %v2991
      %v3340 = vmul.f32 %v2540, %v3006
      %v3341 = vmul.f32 %v2541, %v3021
      %v3342 = vmul.f32 %v2542, %v3036
      %v3343 = vmul.f32 %v2543, %v3051
      %v3344 = vmul.f32 %v2544, %v3066
      %v3345 = vmul.f32 %v2545, %v3081
      %v3346 = vmul.f32 %v2546, %v3096
      %v3347 = vmul.f32 %v2547, %v3111
      %v3348 = vmul.f32 %v2548, %v3126
      %v3349 = vmul.f32 %v2549, %v3141
      %v3350 = vmul.f32 %v2550, %v3156
      %v3351 = vmul.f32 %v2551, %v3171
      %v3352 = vmul.f32 %v2552, %v3186
      %v3353 = vmul.f32 %v2553, %v3201
      %v3354 = vmul.f32 %v2554, %v3216
      %v3355 = vmul.f32 %v2555, %v3231
      %v3356 = vmul.f32 %v2556, %v3246
      %v3357 = vmul.f32 %v2557, %v3261
      %v3358 = vmul.f32 %v2558, %v3276
      %v3359 = vmul.f32 %v2559, %v3291
      %v3360 = vmul.f32 %v2560, %v3306
      %v3361 = vmul.f32 %v2561, %v3321
      %3362 = vst.msk [vmem:[%s319] sm:$0xff] %vm2071, %v3322
      %3363 = vst.msk [vmem:[%s319 + $0x8] sm:$0xff] %vm2071, %v3323
      %3364 = vst.msk [vmem:[%s319 + $0x10] sm:$0xff] %vm2071, %v3324
      %3365 = vst.msk [vmem:[%s319 + $0x18] sm:$0xff] %vm2071, %v3325
      %3366 = vst.msk [vmem:[%s319 + $0x20] sm:$0xff] %vm2071, %v3326
      %3367 = vst.msk [vmem:[%s319 + $0x28] sm:$0xff] %vm2071, %v3327
      %3368 = vst.msk [vmem:[%s319 + $0x30] sm:$0xff] %vm2071, %v3328
      %3369 = vst.msk [vmem:[%s319 + $0x38] sm:$0xff] %vm2071, %v3329
      %3370 = vst.msk [vmem:[%s319 + $0x40] sm:$0xff] %vm2071, %v3330
      %3371 = vst.msk [vmem:[%s319 + $0x48] sm:$0xff] %vm2071, %v3331
      %3372 = vst.msk [vmem:[%s319 + $0x50] sm:$0xff] %vm2071, %v3332
      %3373 = vst.msk [vmem:[%s319 + $0x58] sm:$0xff] %vm2071, %v3333
      %3374 = vst.msk [vmem:[%s319 + $0x60] sm:$0xff] %vm2071, %v3334
      %3375 = vst.msk [vmem:[%s319 + $0x68] sm:$0xff] %vm2071, %v3335
      %3376 = vst.msk [vmem:[%s319 + $0x70] sm:$0xff] %vm2071, %v3336
      %3377 = vst.msk [vmem:[%s319 + $0x78] sm:$0xff] %vm2071, %v3337
      %3378 = vst.msk [vmem:[%s319 + $0x80] sm:$0xff] %vm2071, %v3338
      %3379 = vst.msk [vmem:[%s319 + $0x88] sm:$0xff] %vm2071, %v3339
      %3380 = vst.msk [vmem:[%s319 + $0x90] sm:$0xff] %vm2071, %v3340
      %3381 = vst.msk [vmem:[%s319 + $0x98] sm:$0xff] %vm2071, %v3341
      %3382 = vst.msk [vmem:[%s319 + $0xa0] sm:$0xff] %vm2071, %v3342
      %3383 = vst.msk [vmem:[%s319 + $0xa8] sm:$0xff] %vm2071, %v3343
      %3384 = vst.msk [vmem:[%s319 + $0xb0] sm:$0xff] %vm2071, %v3344
      %3385 = vst.msk [vmem:[%s319 + $0xb8] sm:$0xff] %vm2071, %v3345
      %3386 = vst.msk [vmem:[%s319 + $0xc0] sm:$0xff] %vm2071, %v3346
      %3387 = vst.msk [vmem:[%s319 + $0xc8] sm:$0xff] %vm2071, %v3347
      %3388 = vst.msk [vmem:[%s319 + $0xd0] sm:$0xff] %vm2071, %v3348
      %3389 = vst.msk [vmem:[%s319 + $0xd8] sm:$0xff] %vm2071, %v3349
      %3390 = vst.msk [vmem:[%s319 + $0xe0] sm:$0xff] %vm2071, %v3350
      %3391 = vst.msk [vmem:[%s319 + $0xe8] sm:$0xff] %vm2071, %v3351
      %3392 = vst.msk [vmem:[%s319 + $0xf0] sm:$0xff] %vm2071, %v3352
      %3393 = vst.msk [vmem:[%s319 + $0xf8] sm:$0xff] %vm2071, %v3353
      %3394 = vst.msk [vmem:[%s319 + $0x100] sm:$0xff] %vm2071, %v3354
      %3395 = vst.msk [vmem:[%s319 + $0x108] sm:$0xff] %vm2071, %v3355
      %3396 = vst.msk [vmem:[%s319 + $0x110] sm:$0xff] %vm2071, %v3356
      %3397 = vst.msk [vmem:[%s319 + $0x118] sm:$0xff] %vm2071, %v3357
      %3398 = vst.msk [vmem:[%s319 + $0x120] sm:$0xff] %vm2071, %v3358
      %3399 = vst.msk [vmem:[%s319 + $0x128] sm:$0xff] %vm2071, %v3359
      %3400 = vst.msk [vmem:[%s319 + $0x130] sm:$0xff] %vm2071, %v3360
      %3401 = vst.msk [vmem:[%s319 + $0x138] sm:$0xff] %vm2071, %v3361
      %p3402 = scmp.lt.s32.totalorder %s19, 5
      %s3403 = scalar_select %p3402, %s19, 5
      %s3404 = smul.addr %s3403, 40
      %s3405 = smul.addr %s3404, 8
      %s3406 = scalar_lea.vmem %s8, %s3405
      // Predicated region
      $region53: #{tpu_custom_call.1} parent=51 // pred_check
        %p3407 = pneg %p215
      $region54: #{tpu_custom_call.1} parent=51 // pred_check_branch
        %3409 = sbr.rel (%p3407) target = $region56
      $region55: #{tpu_custom_call.1} parent=51 // pred_region
        _
      $region56: #{tpu_custom_call.1} parent=51 // pred_fallthru
        _
    $region52: #{tpu_custom_call.1} parent=5 // pred_fallthru
      _
    %p3410 = scmp.le.s32.totalorder 2, %s14
    // Predicated region
    $region57: #{tpu_custom_call.1} parent=5 // pred_check
      %p3411 = pneg %p3410
    $region58: #{tpu_custom_call.1} parent=5 // pred_check_branch
      %3413 = sbr.rel (%p3411) target = $region60
    $region59: #{tpu_custom_call.1} parent=5 // pred_region
      %s3414 = ssub.s32 %s14, 2
      // Predicated region
      $region61: #{tpu_custom_call.1} parent=59 // pred_check
        %p3415 = pneg %p221
      $region62: #{tpu_custom_call.1} parent=59 // pred_check_branch
        %3417 = sbr.rel (%p3415) target = $region64
      $region63: #{tpu_custom_call.1} parent=59 // pred_region
        %p3418 = scmp.lt.s32.totalorder %s20, 5
        %s3419 = scalar_select %p3418, %s20, 5
        %s3420 = smul.addr %s3419, 40
        %s3421 = smul.addr %s3420, 8
        %s3422 = scalar_lea.vmem %s8, %s3421
      $region64: #{tpu_custom_call.1} parent=59 // pred_fallthru
        _
    $region60: #{tpu_custom_call.1} parent=5 // pred_fallthru
      _
  $region6: #{tpu_custom_call.1} parent=0 // loop_footer
    %s18 = sadd.s32 1, %s14
  $region7: #{tpu_custom_call.1} parent=0 // loop_footer_branch
    %13 = sbr.rel target = $region3
  $region8: #{tpu_custom_call.1} parent=0 // loop_exit
    _

</llo_original>
